<compile_context>
chip_gen: v7x
topology: tpu7x:2x2x1
jax: 0.10.0
libtpu: 0.0.40
codegen_flags: <defaults>
</compile_context>

<pallas_src>
import functools

import jax
import jax.numpy as jnp
from jax.experimental import pallas as pl
from jax.experimental.pallas import tpu as pltpu


# ---------------------------------------------------------------------------
# Shared Mish helper (f32 in / f32 out), single transcendental.
# ---------------------------------------------------------------------------
def _mish_f32(xf):
    # mish(x) = x * tanh(softplus(x)) = x * u / (u + 2),  u = t*(t+2), t = e^x
    # clamp only inside exp so large-x outputs correctly reduce to x.
    t = jnp.exp(jnp.minimum(xf, 20.0))
    u = t * (t + 2.0)
    d = u + 2.0
    r = pl.reciprocal(d, approx=True)      # EUP
    r = r * (2.0 - d * r)                  # one Newton step on the VPU
    return xf * u * r


# ---------------------------------------------------------------------------
# Path A: whole image per grid step (hot path for small/medium images).
# Natively supports any (pad_h, pad_w) >= 0: the zero padding is materialised
# in the VMEM scratch (valid because mish(0) == 0).
# ---------------------------------------------------------------------------
def _whole_image_kernel(x_ref, w_ref, b_ref, o_ref, apad_ref, *,
                        ph, pw, c_in, c_out, cg, h_in, w_in, h_out, w_out):
    # x_ref:    (1, Cin, H, W)            raw NCHW input image
    # w_ref:    (Cout*Cin*4,)  SMEM       flat conv weights
    # b_ref:    (Cout,)        SMEM       bias
    # o_ref:    (1, CG, Hout, Wout)       this channel-group's NCHW output
    # apad_ref: (Cin, H+2ph, W+2pw) VMEM  activated, zero-padded image (f32)
    if cg == c_out:
        co0 = 0                                    # single group: static idx
    else:
        co0 = pl.program_id(1) * cg                # first channel of group

    # Zero the whole scratch every step (cheap): the border stays zero and is
    # the conv padding; safe for megacore where each core owns its own scratch.
    apad_ref[...] = jnp.zeros_like(apad_ref)
    xf = x_ref[0].astype(jnp.float32)              # (Cin, H, W)
    apad_ref[:, ph:ph + h_in, pw:pw + w_in] = _mish_f32(xf)

    # 2x2 conv as scalar-broadcast FMAs with W in the lane dimension.
    # co outermost + immediate store => one live (Hout, Wout) f32 accumulator.
    for co in range(cg):
        acc = jnp.zeros((h_out, w_out), jnp.float32) + b_ref[co0 + co]
        wbase = (co0 + co) * (c_in * 4)
        for ci in range(c_in):
            for kh in range(2):
                for kw in range(2):
                    acc = acc + (w_ref[wbase + (ci * 2 + kh) * 2 + kw]
                                 * apad_ref[ci, kh:kh + h_out, kw:kw + w_out])
        o_ref[0, co] = acc.astype(o_ref.dtype)


def _conv_block_whole(x, w_flat, b_vec, ph, pw, n_cg):
    n, c_in, h, w = x.shape
    c_out = b_vec.shape[0]
    h_out = h + 2 * ph - 1
    w_out = w + 2 * pw - 1
    cg = c_out // n_cg

    kernel = functools.partial(
        _whole_image_kernel, ph=ph, pw=pw, c_in=c_in, c_out=c_out, cg=cg,
        h_in=h, w_in=w, h_out=h_out, w_out=w_out)

    return pl.pallas_call(
        kernel,
        out_shape=jax.ShapeDtypeStruct((n, c_out, h_out, w_out), x.dtype),
        grid_spec=pltpu.PrefetchScalarGridSpec(
            num_scalar_prefetch=0,
            grid=(n, n_cg),
            in_specs=[
                pl.BlockSpec((1, c_in, h, w), lambda b, g: (b, 0, 0, 0)),
                pl.BlockSpec(memory_space=pltpu.MemorySpace.SMEM),  # weights
                pl.BlockSpec(memory_space=pltpu.MemorySpace.SMEM),  # bias
            ],
            out_specs=pl.BlockSpec((1, cg, h_out, w_out),
                                   lambda b, g: (b, g, 0, 0)),
            scratch_shapes=[
                pltpu.VMEM((c_in, h + 2 * ph, w + 2 * pw), jnp.float32),
            ]),
        compiler_params=pltpu.CompilerParams(
            # Both axes are independent -> both may be sharded across v7x TCs.
            dimension_semantics=("parallel", "parallel"),
            vmem_limit_bytes=32 * 1024 * 1024),
    )(x, w_flat, b_vec)


# ---------------------------------------------------------------------------
# Path B: halo-carry H-tiled pipeline (fallback for images too large to keep
# whole in VMEM).  Native for pad_h == 1.
# CORRECTNESS GUARD: the halo carried in arows_ref requires the H grid axis
# (axis 1) to stay innermost and "arbitrary" (strictly sequential per image);
# do NOT mark it parallel / core_parallel or reorder the grid axes.
# ---------------------------------------------------------------------------
def _tiled_kernel(x_ref, w_ref, b_ref, o_ref, arows_ref, *,
                  c_in, c_out, tile_h, h_in, pad_w):
    # arows_ref: (Cin, TILE_H+1, Wp)  activated, W-padded rows; row 0 is the
    #            top halo carried from the previous H-tile of the same image.
    i = pl.program_id(1)
    w_in = x_ref.shape[3]
    w_out = o_ref.shape[3]

    @pl.when(i == 0)
    def _():
        arows_ref[...] = jnp.zeros_like(arows_ref)   # top pad + W pad columns

    x = x_ref[0]                                       # (Cin, TILE_H, W)
    # Rows past the bottom of the image (clamped edge block) are garbage ->
    # zero them; they become the bottom zero-pad row or are unused.
    row = jax.lax.broadcasted_iota(jnp.int32, (1, tile_h, 1), 1)
    xf = jnp.where(i * tile_h + row < h_in, x, 0).astype(jnp.float32)
    arows_ref[:, 1:, pad_w:pad_w + w_in] = _mish_f32(xf)

    # co outermost + immediate store => one live accumulator.
    for co in range(c_out):
        acc = jnp.zeros((tile_h, w_out), jnp.float32) + b_ref[co]
        wbase = co * (c_in * 4)
        for ci in range(c_in):
            for kh in range(2):
                for kw in range(2):
                    acc = acc + (w_ref[wbase + (ci * 2 + kh) * 2 + kw]
                                 * arows_ref[ci, kh:kh + tile_h, kw:kw + w_out])
        o_ref[0, co] = acc.astype(o_ref.dtype)

    # Carry: last activated row becomes the next tile's top halo.
    arows_ref[:, 0:1, :] = arows_ref[:, tile_h:tile_h + 1, :]


def _conv_block_tiled_pad1(x, w_flat, b_vec, pad_w, tile_h):
    n, c_in, h, w = x.shape
    c_out = b_vec.shape[0]
    wp = w + 2 * pad_w
    h_out = h + 1                       # kernel 2, stride 1, pad_h == 1
    w_out = wp - 1

    n_h = pl.cdiv(h_out, tile_h)
    n_h_in = pl.cdiv(h, tile_h)

    kernel = functools.partial(_tiled_kernel, c_in=c_in, c_out=c_out,
                               tile_h=tile_h, h_in=h, pad_w=pad_w)

    return pl.pallas_call(
        kernel,
        out_shape=jax.ShapeDtypeStruct((n, c_out, h_out, w_out), x.dtype),
        grid_spec=pltpu.PrefetchScalarGridSpec(
            num_scalar_prefetch=0,
            grid=(n, n_h),
            in_specs=[
                # Clamp the H block index so the (possible) final mostly-pad
                # output tile re-reads the last valid slab; its rows are
                # masked to zero inside the kernel.
                pl.BlockSpec(
                    (1, c_in, tile_h, w),
                    lambda b, i: (b, 0, jnp.minimum(i, n_h_in - 1), 0)),
                pl.BlockSpec(memory_space=pltpu.MemorySpace.SMEM),  # weights
                pl.BlockSpec(memory_space=pltpu.MemorySpace.SMEM),  # bias
            ],
            out_specs=pl.BlockSpec((1, c_out, tile_h, w_out),
                                   lambda b, i: (b, 0, i, 0)),
            scratch_shapes=[
                pltpu.VMEM((c_in, tile_h + 1, wp), jnp.float32),
            ]),
        compiler_params=pltpu.CompilerParams(
            dimension_semantics=("parallel", "arbitrary"),
            vmem_limit_bytes=32 * 1024 * 1024),
    )(x, w_flat, b_vec)


def _auto_tile_h(c_in, c_out, w, wp, w_out, itemsize, budget_bytes):
    """Largest multiple-of-8 tile_h whose per-step footprint fits the budget."""
    per_row = (2 * c_in * w * itemsize          # double-buffered input block
               + 2 * c_out * w_out * itemsize   # double-buffered output block
               + c_in * wp * 4)                 # f32 scratch
    t = (budget_bytes - c_in * wp * 4) // max(per_row, 1)
    return int(max(8, min(512, (t // 8) * 8)))


# ---------------------------------------------------------------------------
# Public wrapper
# ---------------------------------------------------------------------------
def conv_block_kn(x_nchw, weight, bias, padding, *, h_tile=None,
                  vmem_budget_bytes=24 * 1024 * 1024):
    """Mish -> Conv2d(kernel=(2,2), stride=1, padding, bias).  NCHW in / out.

    x_nchw: (N, Cin, H, W)   weight: (Cout, Cin, 2, 2)   bias: (Cout,)
    h_tile: None -> auto (whole image per step when it fits the VMEM budget,
            else a large H-tiled halo-carry pipeline); an int (multiple of 8)
            forces the tiled path with that tile height.
    The I/O dtype is preserved (compute is f32); pass bf16 activations to
    halve HBM traffic on v6e/v7x.
    """
    ph, pw = padding
    n, c_in, h, w = x_nchw.shape
    c_out = weight.shape[0]
    w_flat = weight.reshape(-1).astype(jnp.float32)     # (Cout*Cin*4,)
    b_vec = bias.astype(jnp.float32)                    # (Cout,)
    itemsize = x_nchw.dtype.itemsize

    h_out = h + 2 * ph - 1
    w_out = w + 2 * pw - 1
    whole_bytes = (2 * c_in * h * w * itemsize
                   + 2 * c_out * h_out * w_out * itemsize
                   + c_in * (h + 2 * ph) * (w + 2 * pw) * 4)

    if h_tile is None and whole_bytes <= vmem_budget_bytes:
        # Whole-image fast path; when N == 1 split output channels across an
        # extra parallel axis so both v7x TensorCores get work (harmless but
        # slightly redundant on 1-TC chips).
        n_cg = 2 if (n == 1 and c_out % 2 == 0) else 1
        return _conv_block_whole(x_nchw, w_flat, b_vec, ph, pw, n_cg)

    # -------- large-image fallback: halo-carry H-tiled pipeline --------
    wp = w + 2 * pw
    if h_tile is not None:
        tile_h = int(h_tile)
    else:
        tile_h = _auto_tile_h(c_in, c_out, w, wp, w + 2 * pw - 1, itemsize,
                              vmem_budget_bytes)
    assert tile_h % 8 == 0, "h_tile must be a multiple of 8"

    if ph == 1:
        return _conv_block_tiled_pad1(x_nchw, w_flat, b_vec, pw, tile_h)
    if ph == 0:
        # TODO(synk): native pad_h == 0 in the tiled path (wrapper slice costs
        # one extra HBM pass; only hit for images too large for the whole-
        # image path).
        out = _conv_block_tiled_pad1(x_nchw, w_flat, b_vec, pw, tile_h)
        return out[:, :, 1:-1, :]
    # ph > 1: pre-pad down to the native pad_h == 1 case (off the hot path).
    x_pad = jnp.pad(x_nchw, ((0, 0), (0, 0), (ph - 1, ph - 1), (0, 0)))
    return _conv_block_tiled_pad1(x_pad, w_flat, b_vec, pw, tile_h)


# ---------------------------------------------------------------------------
# Pure-JAX reference (exact Mish + conv) for the correctness check.
# ---------------------------------------------------------------------------
def _reference(x_nchw, weight, bias, padding):
    a = x_nchw * jnp.tanh(jax.nn.softplus(x_nchw))
    out = jax.lax.conv_general_dilated(
        a, weight,
        window_strides=(1, 1),
        padding=((padding[0], padding[0]), (padding[1], padding[1])),
        dimension_numbers=("NCHW", "OIHW", "NCHW"),
    )
    return out + bias.reshape(1, -1, 1, 1)


if __name__ == "__main__":
    key = jax.random.PRNGKey(0)
    k_x, k_w, k_b, k_x1, k_x2 = jax.random.split(key, 5)

    N, C_IN, C_OUT, H, W = 2, 4, 8, 16, 16

    # Deterministic "uniform kaiming-like" init for the conv parameters.
    fan_in = C_IN * 2 * 2
    bound = 1.0 / (fan_in ** 0.5)
    weight = jax.random.uniform(k_w, (C_OUT, C_IN, 2, 2), jnp.float32,
                                minval=-bound, maxval=bound)
    bias = jax.random.uniform(k_b, (C_OUT,), jnp.float32,
                              minval=-bound, maxval=bound)

    def check(x, padding, **kw):
        out = jax.block_until_ready(conv_block_kn(x, weight, bias, padding, **kw))
        ref = _reference(x, weight, bias, padding)
        assert out.shape == ref.shape, (out.shape, ref.shape)
        max_err = float(jnp.max(jnp.abs(out - ref)))
        assert jnp.allclose(out, ref, rtol=1e-3, atol=1e-3), max_err
        return out

    # 1) Hot path: whole-image-per-step, padding (1, 1).
    x = jax.random.normal(k_x, (N, C_IN, H, W), dtype=jnp.float32)
    out = check(x, (1, 1))
    assert out.shape == (N, C_OUT, H + 1, W + 1)

    # 2) Native pad_h == 0 + batch-1 channel-group split (v7x both-core path).
    x1 = jax.random.normal(k_x1, (1, C_IN, H, W), dtype=jnp.float32)
    check(x1, (0, 0))

    # 3) Large-image fallback: H-tiled halo-carry pipeline (forced tile).
    x2 = jax.random.normal(k_x2, (N, C_IN, 40, W), dtype=jnp.float32)
    check(x2, (1, 1), h_tile=16)

    print("KERNEL_OK")
</pallas_src>

<mosaic_0001>
module attributes {stable_mosaic.version = 11 : i64} {
  func.func @_whole_image_kernel(%arg0: i32, %arg1: i32, %arg2: memref<1x4x16x16xf32, #tpu.memory_space<vmem>>, %arg3: memref<128xf32, #tpu.memory_space<smem>>, %arg4: memref<8xf32, #tpu.memory_space<smem>>, %arg5: memref<1x8x17x17xf32, #tpu.memory_space<vmem>>, %arg6: memref<4x18x18xf32, #tpu.memory_space<vmem>>) attributes {dimension_semantics = [#tpu.dimension_semantics<parallel>, #tpu.dimension_semantics<parallel>], iteration_bounds = array<i64: 2, 1>, scalar_prefetch = 0 : i64, scratch_operands = 1 : i64, tpu.core_type = #tpu.core_type<tc>, window_params = [{transform_indices = @transform_0, window_bounds = array<i64: 1, 4, 16, 16>}, {transform_indices = @transform_1, window_bounds = array<i64: 128>}, {transform_indices = @transform_2, window_bounds = array<i64: 8>}, {transform_indices = @transform_3, window_bounds = array<i64: 1, 8, 17, 17>}]} {
    %cst = arith.constant 0.000000e+00 : f32
    %0 = vector.broadcast %cst : f32 to vector<4x18x18xf32>
    %c0 = arith.constant 0 : index
    %c0_0 = arith.constant 0 : index
    %c0_1 = arith.constant 0 : index
    %1 = vector.load %arg6[%c0, %c0_0, %c0_1] : memref<4x18x18xf32, #tpu.memory_space<vmem>>, vector<4x18x18xf32>
    tpu.vector_store %arg6[%c0, %c0_0, %c0_1], %0 {strides = array<i32>} : memref<4x18x18xf32, #tpu.memory_space<vmem>>, vector<4x18x18xf32>,
    %c0_2 = arith.constant 0 : index
    %c0_3 = arith.constant 0 : index
    %c0_4 = arith.constant 0 : index
    %c0_5 = arith.constant 0 : index
    %2 = vector.load %arg2[%c0_2, %c0_3, %c0_4, %c0_5] : memref<1x4x16x16xf32, #tpu.memory_space<vmem>>, vector<1x4x16x16xf32>
    %3 = vector.shape_cast %2 : vector<1x4x16x16xf32> to vector<4x16x16xf32>
    %cst_6 = arith.constant 2.000000e+01 : f32
    %4 = vector.broadcast %cst_6 : f32 to vector<4x16x16xf32>
    %5 = arith.minimumf %3, %4 : vector<4x16x16xf32>
    %6 = math.exp %5 : vector<4x16x16xf32>
    %cst_7 = arith.constant 2.000000e+00 : f32
    %7 = vector.broadcast %cst_7 : f32 to vector<4x16x16xf32>
    %8 = arith.addf %6, %7 : vector<4x16x16xf32>
    %9 = arith.mulf %6, %8 : vector<4x16x16xf32>
    %cst_8 = arith.constant 2.000000e+00 : f32
    %10 = vector.broadcast %cst_8 : f32 to vector<4x16x16xf32>
    %11 = arith.addf %9, %10 : vector<4x16x16xf32>
    %12 = tpu.reciprocal %11 {approx = true} : vector<4x16x16xf32> -> vector<4x16x16xf32>
    %13 = arith.mulf %11, %12 : vector<4x16x16xf32>
    %cst_9 = arith.constant 2.000000e+00 : f32
    %14 = vector.broadcast %cst_9 : f32 to vector<4x16x16xf32>
    %15 = arith.subf %14, %13 : vector<4x16x16xf32>
    %16 = arith.mulf %12, %15 : vector<4x16x16xf32>
    %17 = arith.mulf %3, %9 : vector<4x16x16xf32>
    %18 = arith.mulf %17, %16 : vector<4x16x16xf32>
    %c0_10 = arith.constant 0 : index
    %c1 = arith.constant 1 : index
    %c1_11 = arith.constant 1 : index
    %19 = vector.load %arg6[%c0_10, %c1, %c1_11] : memref<4x18x18xf32, #tpu.memory_space<vmem>>, vector<4x16x16xf32>
    tpu.vector_store %arg6[%c0_10, %c1, %c1_11], %18 {strides = array<i32>} : memref<4x18x18xf32, #tpu.memory_space<vmem>>, vector<4x16x16xf32>,
    %cst_12 = arith.constant 0.000000e+00 : f32
    %20 = vector.broadcast %cst_12 : f32 to vector<17x17xf32>
    %c0_13 = arith.constant 0 : index
    %21 = memref.load %arg4[%c0_13] : memref<8xf32, #tpu.memory_space<smem>>
    %22 = vector.broadcast %21 : f32 to vector<17x17xf32>
    %23 = arith.addf %20, %22 : vector<17x17xf32>
    %c0_14 = arith.constant 0 : index
    %24 = memref.load %arg3[%c0_14] : memref<128xf32, #tpu.memory_space<smem>>
    %c0_15 = arith.constant 0 : index
    %c0_16 = arith.constant 0 : index
    %c0_17 = arith.constant 0 : index
    %25 = vector.load %arg6[%c0_15, %c0_16, %c0_17] : memref<4x18x18xf32, #tpu.memory_space<vmem>>, vector<1x17x17xf32>
    %26 = vector.shape_cast %25 : vector<1x17x17xf32> to vector<17x17xf32>
    %27 = vector.broadcast %24 : f32 to vector<17x17xf32>
    %28 = arith.mulf %27, %26 : vector<17x17xf32>
    %29 = arith.addf %23, %28 : vector<17x17xf32>
    %c1_18 = arith.constant 1 : index
    %30 = memref.load %arg3[%c1_18] : memref<128xf32, #tpu.memory_space<smem>>
    %c0_19 = arith.constant 0 : index
    %c0_20 = arith.constant 0 : index
    %c1_21 = arith.constant 1 : index
    %31 = vector.load %arg6[%c0_19, %c0_20, %c1_21] : memref<4x18x18xf32, #tpu.memory_space<vmem>>, vector<1x17x17xf32>
    %32 = vector.shape_cast %31 : vector<1x17x17xf32> to vector<17x17xf32>
    %33 = vector.broadcast %30 : f32 to vector<17x17xf32>
    %34 = arith.mulf %33, %32 : vector<17x17xf32>
    %35 = arith.addf %29, %34 : vector<17x17xf32>
    %c2 = arith.constant 2 : index
    %36 = memref.load %arg3[%c2] : memref<128xf32, #tpu.memory_space<smem>>
    %c0_22 = arith.constant 0 : index
    %c1_23 = arith.constant 1 : index
    %c0_24 = arith.constant 0 : index
    %37 = vector.load %arg6[%c0_22, %c1_23, %c0_24] : memref<4x18x18xf32, #tpu.memory_space<vmem>>, vector<1x17x17xf32>
    %38 = vector.shape_cast %37 : vector<1x17x17xf32> to vector<17x17xf32>
    %39 = vector.broadcast %36 : f32 to vector<17x17xf32>
    %40 = arith.mulf %39, %38 : vector<17x17xf32>
    %41 = arith.addf %35, %40 : vector<17x17xf32>
    %c3 = arith.constant 3 : index
    %42 = memref.load %arg3[%c3] : memref<128xf32, #tpu.memory_space<smem>>
    %c0_25 = arith.constant 0 : index
    %c1_26 = arith.constant 1 : index
    %c1_27 = arith.constant 1 : index
    %43 = vector.load %arg6[%c0_25, %c1_26, %c1_27] : memref<4x18x18xf32, #tpu.memory_space<vmem>>, vector<1x17x17xf32>
    %44 = vector.shape_cast %43 : vector<1x17x17xf32> to vector<17x17xf32>
    %45 = vector.broadcast %42 : f32 to vector<17x17xf32>
    %46 = arith.mulf %45, %44 : vector<17x17xf32>
    %47 = arith.addf %41, %46 : vector<17x17xf32>
    %c4 = arith.constant 4 : index
    %48 = memref.load %arg3[%c4] : memref<128xf32, #tpu.memory_space<smem>>
    %c1_28 = arith.constant 1 : index
    %c0_29 = arith.constant 0 : index
    %c0_30 = arith.constant 0 : index
    %49 = vector.load %arg6[%c1_28, %c0_29, %c0_30] : memref<4x18x18xf32, #tpu.memory_space<vmem>>, vector<1x17x17xf32>
    %50 = vector.shape_cast %49 : vector<1x17x17xf32> to vector<17x17xf32>
    %51 = vector.broadcast %48 : f32 to vector<17x17xf32>
    %52 = arith.mulf %51, %50 : vector<17x17xf32>
    %53 = arith.addf %47, %52 : vector<17x17xf32>
    %c5 = arith.constant 5 : index
    %54 = memref.load %arg3[%c5] : memref<128xf32, #tpu.memory_space<smem>>
    %c1_31 = arith.constant 1 : index
    %c0_32 = arith.constant 0 : index
    %c1_33 = arith.constant 1 : index
    %55 = vector.load %arg6[%c1_31, %c0_32, %c1_33] : memref<4x18x18xf32, #tpu.memory_space<vmem>>, vector<1x17x17xf32>
    %56 = vector.shape_cast %55 : vector<1x17x17xf32> to vector<17x17xf32>
    %57 = vector.broadcast %54 : f32 to vector<17x17xf32>
    %58 = arith.mulf %57, %56 : vector<17x17xf32>
    %59 = arith.addf %53, %58 : vector<17x17xf32>
    %c6 = arith.constant 6 : index
    %60 = memref.load %arg3[%c6] : memref<128xf32, #tpu.memory_space<smem>>
    %c1_34 = arith.constant 1 : index
    %c1_35 = arith.constant 1 : index
    %c0_36 = arith.constant 0 : index
    %61 = vector.load %arg6[%c1_34, %c1_35, %c0_36] : memref<4x18x18xf32, #tpu.memory_space<vmem>>, vector<1x17x17xf32>
    %62 = vector.shape_cast %61 : vector<1x17x17xf32> to vector<17x17xf32>
    %63 = vector.broadcast %60 : f32 to vector<17x17xf32>
    %64 = arith.mulf %63, %62 : vector<17x17xf32>
    %65 = arith.addf %59, %64 : vector<17x17xf32>
    %c7 = arith.constant 7 : index
    %66 = memref.load %arg3[%c7] : memref<128xf32, #tpu.memory_space<smem>>
    %c1_37 = arith.constant 1 : index
    %c1_38 = arith.constant 1 : index
    %c1_39 = arith.constant 1 : index
    %67 = vector.load %arg6[%c1_37, %c1_38, %c1_39] : memref<4x18x18xf32, #tpu.memory_space<vmem>>, vector<1x17x17xf32>
    %68 = vector.shape_cast %67 : vector<1x17x17xf32> to vector<17x17xf32>
    %69 = vector.broadcast %66 : f32 to vector<17x17xf32>
    %70 = arith.mulf %69, %68 : vector<17x17xf32>
    %71 = arith.addf %65, %70 : vector<17x17xf32>
    %c8 = arith.constant 8 : index
    %72 = memref.load %arg3[%c8] : memref<128xf32, #tpu.memory_space<smem>>
    %c2_40 = arith.constant 2 : index
    %c0_41 = arith.constant 0 : index
    %c0_42 = arith.constant 0 : index
    %73 = vector.load %arg6[%c2_40, %c0_41, %c0_42] : memref<4x18x18xf32, #tpu.memory_space<vmem>>, vector<1x17x17xf32>
    %74 = vector.shape_cast %73 : vector<1x17x17xf32> to vector<17x17xf32>
    %75 = vector.broadcast %72 : f32 to vector<17x17xf32>
    %76 = arith.mulf %75, %74 : vector<17x17xf32>
    %77 = arith.addf %71, %76 : vector<17x17xf32>
    %c9 = arith.constant 9 : index
    %78 = memref.load %arg3[%c9] : memref<128xf32, #tpu.memory_space<smem>>
    %c2_43 = arith.constant 2 : index
    %c0_44 = arith.constant 0 : index
    %c1_45 = arith.constant 1 : index
    %79 = vector.load %arg6[%c2_43, %c0_44, %c1_45] : memref<4x18x18xf32, #tpu.memory_space<vmem>>, vector<1x17x17xf32>
    %80 = vector.shape_cast %79 : vector<1x17x17xf32> to vector<17x17xf32>
    %81 = vector.broadcast %78 : f32 to vector<17x17xf32>
    %82 = arith.mulf %81, %80 : vector<17x17xf32>
    %83 = arith.addf %77, %82 : vector<17x17xf32>
    %c10 = arith.constant 10 : index
    %84 = memref.load %arg3[%c10] : memref<128xf32, #tpu.memory_space<smem>>
    %c2_46 = arith.constant 2 : index
    %c1_47 = arith.constant 1 : index
    %c0_48 = arith.constant 0 : index
    %85 = vector.load %arg6[%c2_46, %c1_47, %c0_48] : memref<4x18x18xf32, #tpu.memory_space<vmem>>, vector<1x17x17xf32>
    %86 = vector.shape_cast %85 : vector<1x17x17xf32> to vector<17x17xf32>
    %87 = vector.broadcast %84 : f32 to vector<17x17xf32>
    %88 = arith.mulf %87, %86 : vector<17x17xf32>
    %89 = arith.addf %83, %88 : vector<17x17xf32>
    %c11 = arith.constant 11 : index
    %90 = memref.load %arg3[%c11] : memref<128xf32, #tpu.memory_space<smem>>
    %c2_49 = arith.constant 2 : index
    %c1_50 = arith.constant 1 : index
    %c1_51 = arith.constant 1 : index
    %91 = vector.load %arg6[%c2_49, %c1_50, %c1_51] : memref<4x18x18xf32, #tpu.memory_space<vmem>>, vector<1x17x17xf32>
    %92 = vector.shape_cast %91 : vector<1x17x17xf32> to vector<17x17xf32>
    %93 = vector.broadcast %90 : f32 to vector<17x17xf32>
    %94 = arith.mulf %93, %92 : vector<17x17xf32>
    %95 = arith.addf %89, %94 : vector<17x17xf32>
    %c12 = arith.constant 12 : index
    %96 = memref.load %arg3[%c12] : memref<128xf32, #tpu.memory_space<smem>>
    %c3_52 = arith.constant 3 : index
    %c0_53 = arith.constant 0 : index
    %c0_54 = arith.constant 0 : index
    %97 = vector.load %arg6[%c3_52, %c0_53, %c0_54] : memref<4x18x18xf32, #tpu.memory_space<vmem>>, vector<1x17x17xf32>
    %98 = vector.shape_cast %97 : vector<1x17x17xf32> to vector<17x17xf32>
    %99 = vector.broadcast %96 : f32 to vector<17x17xf32>
    %100 = arith.mulf %99, %98 : vector<17x17xf32>
    %101 = arith.addf %95, %100 : vector<17x17xf32>
    %c13 = arith.constant 13 : index
    %102 = memref.load %arg3[%c13] : memref<128xf32, #tpu.memory_space<smem>>
    %c3_55 = arith.constant 3 : index
    %c0_56 = arith.constant 0 : index
    %c1_57 = arith.constant 1 : index
    %103 = vector.load %arg6[%c3_55, %c0_56, %c1_57] : memref<4x18x18xf32, #tpu.memory_space<vmem>>, vector<1x17x17xf32>
    %104 = vector.shape_cast %103 : vector<1x17x17xf32> to vector<17x17xf32>
    %105 = vector.broadcast %102 : f32 to vector<17x17xf32>
    %106 = arith.mulf %105, %104 : vector<17x17xf32>
    %107 = arith.addf %101, %106 : vector<17x17xf32>
    %c14 = arith.constant 14 : index
    %108 = memref.load %arg3[%c14] : memref<128xf32, #tpu.memory_space<smem>>
    %c3_58 = arith.constant 3 : index
    %c1_59 = arith.constant 1 : index
    %c0_60 = arith.constant 0 : index
    %109 = vector.load %arg6[%c3_58, %c1_59, %c0_60] : memref<4x18x18xf32, #tpu.memory_space<vmem>>, vector<1x17x17xf32>
    %110 = vector.shape_cast %109 : vector<1x17x17xf32> to vector<17x17xf32>
    %111 = vector.broadcast %108 : f32 to vector<17x17xf32>
    %112 = arith.mulf %111, %110 : vector<17x17xf32>
    %113 = arith.addf %107, %112 : vector<17x17xf32>
    %c15 = arith.constant 15 : index
    %114 = memref.load %arg3[%c15] : memref<128xf32, #tpu.memory_space<smem>>
    %c3_61 = arith.constant 3 : index
    %c1_62 = arith.constant 1 : index
    %c1_63 = arith.constant 1 : index
    %115 = vector.load %arg6[%c3_61, %c1_62, %c1_63] : memref<4x18x18xf32, #tpu.memory_space<vmem>>, vector<1x17x17xf32>
    %116 = vector.shape_cast %115 : vector<1x17x17xf32> to vector<17x17xf32>
    %117 = vector.broadcast %114 : f32 to vector<17x17xf32>
    %118 = arith.mulf %117, %116 : vector<17x17xf32>
    %119 = arith.addf %113, %118 : vector<17x17xf32>
    %c0_64 = arith.constant 0 : index
    %c0_65 = arith.constant 0 : index
    %c0_66 = arith.constant 0 : index
    %c0_67 = arith.constant 0 : index
    %120 = vector.load %arg5[%c0_64, %c0_65, %c0_66, %c0_67] : memref<1x8x17x17xf32, #tpu.memory_space<vmem>>, vector<1x1x17x17xf32>
    %121 = vector.shape_cast %120 : vector<1x1x17x17xf32> to vector<17x17xf32>
    %122 = vector.shape_cast %119 : vector<17x17xf32> to vector<1x1x17x17xf32>
    tpu.vector_store %arg5[%c0_64, %c0_65, %c0_66, %c0_67], %122 {strides = array<i32>} : memref<1x8x17x17xf32, #tpu.memory_space<vmem>>, vector<1x1x17x17xf32>,
    %cst_68 = arith.constant 0.000000e+00 : f32
    %123 = vector.broadcast %cst_68 : f32 to vector<17x17xf32>
    %c1_69 = arith.constant 1 : index
    %124 = memref.load %arg4[%c1_69] : memref<8xf32, #tpu.memory_space<smem>>
    %125 = vector.broadcast %124 : f32 to vector<17x17xf32>
    %126 = arith.addf %123, %125 : vector<17x17xf32>
    %c16 = arith.constant 16 : index
    %127 = memref.load %arg3[%c16] : memref<128xf32, #tpu.memory_space<smem>>
    %c0_70 = arith.constant 0 : index
    %c0_71 = arith.constant 0 : index
    %c0_72 = arith.constant 0 : index
    %128 = vector.load %arg6[%c0_70, %c0_71, %c0_72] : memref<4x18x18xf32, #tpu.memory_space<vmem>>, vector<1x17x17xf32>
    %129 = vector.shape_cast %128 : vector<1x17x17xf32> to vector<17x17xf32>
    %130 = vector.broadcast %127 : f32 to vector<17x17xf32>
    %131 = arith.mulf %130, %129 : vector<17x17xf32>
    %132 = arith.addf %126, %131 : vector<17x17xf32>
    %c17 = arith.constant 17 : index
    %133 = memref.load %arg3[%c17] : memref<128xf32, #tpu.memory_space<smem>>
    %c0_73 = arith.constant 0 : index
    %c0_74 = arith.constant 0 : index
    %c1_75 = arith.constant 1 : index
    %134 = vector.load %arg6[%c0_73, %c0_74, %c1_75] : memref<4x18x18xf32, #tpu.memory_space<vmem>>, vector<1x17x17xf32>
    %135 = vector.shape_cast %134 : vector<1x17x17xf32> to vector<17x17xf32>
    %136 = vector.broadcast %133 : f32 to vector<17x17xf32>
    %137 = arith.mulf %136, %135 : vector<17x17xf32>
    %138 = arith.addf %132, %137 : vector<17x17xf32>
    %c18 = arith.constant 18 : index
    %139 = memref.load %arg3[%c18] : memref<128xf32, #tpu.memory_space<smem>>
    %c0_76 = arith.constant 0 : index
    %c1_77 = arith.constant 1 : index
    %c0_78 = arith.constant 0 : index
    %140 = vector.load %arg6[%c0_76, %c1_77, %c0_78] : memref<4x18x18xf32, #tpu.memory_space<vmem>>, vector<1x17x17xf32>
    %141 = vector.shape_cast %140 : vector<1x17x17xf32> to vector<17x17xf32>
    %142 = vector.broadcast %139 : f32 to vector<17x17xf32>
    %143 = arith.mulf %142, %141 : vector<17x17xf32>
    %144 = arith.addf %138, %143 : vector<17x17xf32>
    %c19 = arith.constant 19 : index
    %145 = memref.load %arg3[%c19] : memref<128xf32, #tpu.memory_space<smem>>
    %c0_79 = arith.constant 0 : index
    %c1_80 = arith.constant 1 : index
    %c1_81 = arith.constant 1 : index
    %146 = vector.load %arg6[%c0_79, %c1_80, %c1_81] : memref<4x18x18xf32, #tpu.memory_space<vmem>>, vector<1x17x17xf32>
    %147 = vector.shape_cast %146 : vector<1x17x17xf32> to vector<17x17xf32>
    %148 = vector.broadcast %145 : f32 to vector<17x17xf32>
    %149 = arith.mulf %148, %147 : vector<17x17xf32>
    %150 = arith.addf %144, %149 : vector<17x17xf32>
    %c20 = arith.constant 20 : index
    %151 = memref.load %arg3[%c20] : memref<128xf32, #tpu.memory_space<smem>>
    %c1_82 = arith.constant 1 : index
    %c0_83 = arith.constant 0 : index
    %c0_84 = arith.constant 0 : index
    %152 = vector.load %arg6[%c1_82, %c0_83, %c0_84] : memref<4x18x18xf32, #tpu.memory_space<vmem>>, vector<1x17x17xf32>
    %153 = vector.shape_cast %152 : vector<1x17x17xf32> to vector<17x17xf32>
    %154 = vector.broadcast %151 : f32 to vector<17x17xf32>
    %155 = arith.mulf %154, %153 : vector<17x17xf32>
    %156 = arith.addf %150, %155 : vector<17x17xf32>
    %c21 = arith.constant 21 : index
    %157 = memref.load %arg3[%c21] : memref<128xf32, #tpu.memory_space<smem>>
    %c1_85 = arith.constant 1 : index
    %c0_86 = arith.constant 0 : index
    %c1_87 = arith.constant 1 : index
    %158 = vector.load %arg6[%c1_85, %c0_86, %c1_87] : memref<4x18x18xf32, #tpu.memory_space<vmem>>, vector<1x17x17xf32>
    %159 = vector.shape_cast %158 : vector<1x17x17xf32> to vector<17x17xf32>
    %160 = vector.broadcast %157 : f32 to vector<17x17xf32>
    %161 = arith.mulf %160, %159 : vector<17x17xf32>
    %162 = arith.addf %156, %161 : vector<17x17xf32>
    %c22 = arith.constant 22 : index
    %163 = memref.load %arg3[%c22] : memref<128xf32, #tpu.memory_space<smem>>
    %c1_88 = arith.constant 1 : index
    %c1_89 = arith.constant 1 : index
    %c0_90 = arith.constant 0 : index
    %164 = vector.load %arg6[%c1_88, %c1_89, %c0_90] : memref<4x18x18xf32, #tpu.memory_space<vmem>>, vector<1x17x17xf32>
    %165 = vector.shape_cast %164 : vector<1x17x17xf32> to vector<17x17xf32>
    %166 = vector.broadcast %163 : f32 to vector<17x17xf32>
    %167 = arith.mulf %166, %165 : vector<17x17xf32>
    %168 = arith.addf %162, %167 : vector<17x17xf32>
    %c23 = arith.constant 23 : index
    %169 = memref.load %arg3[%c23] : memref<128xf32, #tpu.memory_space<smem>>
    %c1_91 = arith.constant 1 : index
    %c1_92 = arith.constant 1 : index
    %c1_93 = arith.constant 1 : index
    %170 = vector.load %arg6[%c1_91, %c1_92, %c1_93] : memref<4x18x18xf32, #tpu.memory_space<vmem>>, vector<1x17x17xf32>
    %171 = vector.shape_cast %170 : vector<1x17x17xf32> to vector<17x17xf32>
    %172 = vector.broadcast %169 : f32 to vector<17x17xf32>
    %173 = arith.mulf %172, %171 : vector<17x17xf32>
    %174 = arith.addf %168, %173 : vector<17x17xf32>
    %c24 = arith.constant 24 : index
    %175 = memref.load %arg3[%c24] : memref<128xf32, #tpu.memory_space<smem>>
    %c2_94 = arith.constant 2 : index
    %c0_95 = arith.constant 0 : index
    %c0_96 = arith.constant 0 : index
    %176 = vector.load %arg6[%c2_94, %c0_95, %c0_96] : memref<4x18x18xf32, #tpu.memory_space<vmem>>, vector<1x17x17xf32>
    %177 = vector.shape_cast %176 : vector<1x17x17xf32> to vector<17x17xf32>
    %178 = vector.broadcast %175 : f32 to vector<17x17xf32>
    %179 = arith.mulf %178, %177 : vector<17x17xf32>
    %180 = arith.addf %174, %179 : vector<17x17xf32>
    %c25 = arith.constant 25 : index
    %181 = memref.load %arg3[%c25] : memref<128xf32, #tpu.memory_space<smem>>
    %c2_97 = arith.constant 2 : index
    %c0_98 = arith.constant 0 : index
    %c1_99 = arith.constant 1 : index
    %182 = vector.load %arg6[%c2_97, %c0_98, %c1_99] : memref<4x18x18xf32, #tpu.memory_space<vmem>>, vector<1x17x17xf32>
    %183 = vector.shape_cast %182 : vector<1x17x17xf32> to vector<17x17xf32>
    %184 = vector.broadcast %181 : f32 to vector<17x17xf32>
    %185 = arith.mulf %184, %183 : vector<17x17xf32>
    %186 = arith.addf %180, %185 : vector<17x17xf32>
    %c26 = arith.constant 26 : index
    %187 = memref.load %arg3[%c26] : memref<128xf32, #tpu.memory_space<smem>>
    %c2_100 = arith.constant 2 : index
    %c1_101 = arith.constant 1 : index
    %c0_102 = arith.constant 0 : index
    %188 = vector.load %arg6[%c2_100, %c1_101, %c0_102] : memref<4x18x18xf32, #tpu.memory_space<vmem>>, vector<1x17x17xf32>
    %189 = vector.shape_cast %188 : vector<1x17x17xf32> to vector<17x17xf32>
    %190 = vector.broadcast %187 : f32 to vector<17x17xf32>
    %191 = arith.mulf %190, %189 : vector<17x17xf32>
    %192 = arith.addf %186, %191 : vector<17x17xf32>
    %c27 = arith.constant 27 : index
    %193 = memref.load %arg3[%c27] : memref<128xf32, #tpu.memory_space<smem>>
    %c2_103 = arith.constant 2 : index
    %c1_104 = arith.constant 1 : index
    %c1_105 = arith.constant 1 : index
    %194 = vector.load %arg6[%c2_103, %c1_104, %c1_105] : memref<4x18x18xf32, #tpu.memory_space<vmem>>, vector<1x17x17xf32>
    %195 = vector.shape_cast %194 : vector<1x17x17xf32> to vector<17x17xf32>
    %196 = vector.broadcast %193 : f32 to vector<17x17xf32>
    %197 = arith.mulf %196, %195 : vector<17x17xf32>
    %198 = arith.addf %192, %197 : vector<17x17xf32>
    %c28 = arith.constant 28 : index
    %199 = memref.load %arg3[%c28] : memref<128xf32, #tpu.memory_space<smem>>
    %c3_106 = arith.constant 3 : index
    %c0_107 = arith.constant 0 : index
    %c0_108 = arith.constant 0 : index
    %200 = vector.load %arg6[%c3_106, %c0_107, %c0_108] : memref<4x18x18xf32, #tpu.memory_space<vmem>>, vector<1x17x17xf32>
    %201 = vector.shape_cast %200 : vector<1x17x17xf32> to vector<17x17xf32>
    %202 = vector.broadcast %199 : f32 to vector<17x17xf32>
    %203 = arith.mulf %202, %201 : vector<17x17xf32>
    %204 = arith.addf %198, %203 : vector<17x17xf32>
    %c29 = arith.constant 29 : index
    %205 = memref.load %arg3[%c29] : memref<128xf32, #tpu.memory_space<smem>>
    %c3_109 = arith.constant 3 : index
    %c0_110 = arith.constant 0 : index
    %c1_111 = arith.constant 1 : index
    %206 = vector.load %arg6[%c3_109, %c0_110, %c1_111] : memref<4x18x18xf32, #tpu.memory_space<vmem>>, vector<1x17x17xf32>
    %207 = vector.shape_cast %206 : vector<1x17x17xf32> to vector<17x17xf32>
    %208 = vector.broadcast %205 : f32 to vector<17x17xf32>
    %209 = arith.mulf %208, %207 : vector<17x17xf32>
    %210 = arith.addf %204, %209 : vector<17x17xf32>
    %c30 = arith.constant 30 : index
    %211 = memref.load %arg3[%c30] : memref<128xf32, #tpu.memory_space<smem>>
    %c3_112 = arith.constant 3 : index
    %c1_113 = arith.constant 1 : index
    %c0_114 = arith.constant 0 : index
    %212 = vector.load %arg6[%c3_112, %c1_113, %c0_114] : memref<4x18x18xf32, #tpu.memory_space<vmem>>, vector<1x17x17xf32>
    %213 = vector.shape_cast %212 : vector<1x17x17xf32> to vector<17x17xf32>
    %214 = vector.broadcast %211 : f32 to vector<17x17xf32>
    %215 = arith.mulf %214, %213 : vector<17x17xf32>
    %216 = arith.addf %210, %215 : vector<17x17xf32>
    %c31 = arith.constant 31 : index
    %217 = memref.load %arg3[%c31] : memref<128xf32, #tpu.memory_space<smem>>
    %c3_115 = arith.constant 3 : index
    %c1_116 = arith.constant 1 : index
    %c1_117 = arith.constant 1 : index
    %218 = vector.load %arg6[%c3_115, %c1_116, %c1_117] : memref<4x18x18xf32, #tpu.memory_space<vmem>>, vector<1x17x17xf32>
    %219 = vector.shape_cast %218 : vector<1x17x17xf32> to vector<17x17xf32>
    %220 = vector.broadcast %217 : f32 to vector<17x17xf32>
    %221 = arith.mulf %220, %219 : vector<17x17xf32>
    %222 = arith.addf %216, %221 : vector<17x17xf32>
    %c0_118 = arith.constant 0 : index
    %c1_119 = arith.constant 1 : index
    %c0_120 = arith.constant 0 : index
    %c0_121 = arith.constant 0 : index
    %223 = vector.load %arg5[%c0_118, %c1_119, %c0_120, %c0_121] : memref<1x8x17x17xf32, #tpu.memory_space<vmem>>, vector<1x1x17x17xf32>
    %224 = vector.shape_cast %223 : vector<1x1x17x17xf32> to vector<17x17xf32>
    %225 = vector.shape_cast %222 : vector<17x17xf32> to vector<1x1x17x17xf32>
    tpu.vector_store %arg5[%c0_118, %c1_119, %c0_120, %c0_121], %225 {strides = array<i32>} : memref<1x8x17x17xf32, #tpu.memory_space<vmem>>, vector<1x1x17x17xf32>,
    %cst_122 = arith.constant 0.000000e+00 : f32
    %226 = vector.broadcast %cst_122 : f32 to vector<17x17xf32>
    %c2_123 = arith.constant 2 : index
    %227 = memref.load %arg4[%c2_123] : memref<8xf32, #tpu.memory_space<smem>>
    %228 = vector.broadcast %227 : f32 to vector<17x17xf32>
    %229 = arith.addf %226, %228 : vector<17x17xf32>
    %c32 = arith.constant 32 : index
    %230 = memref.load %arg3[%c32] : memref<128xf32, #tpu.memory_space<smem>>
    %c0_124 = arith.constant 0 : index
    %c0_125 = arith.constant 0 : index
    %c0_126 = arith.constant 0 : index
    %231 = vector.load %arg6[%c0_124, %c0_125, %c0_126] : memref<4x18x18xf32, #tpu.memory_space<vmem>>, vector<1x17x17xf32>
    %232 = vector.shape_cast %231 : vector<1x17x17xf32> to vector<17x17xf32>
    %233 = vector.broadcast %230 : f32 to vector<17x17xf32>
    %234 = arith.mulf %233, %232 : vector<17x17xf32>
    %235 = arith.addf %229, %234 : vector<17x17xf32>
    %c33 = arith.constant 33 : index
    %236 = memref.load %arg3[%c33] : memref<128xf32, #tpu.memory_space<smem>>
    %c0_127 = arith.constant 0 : index
    %c0_128 = arith.constant 0 : index
    %c1_129 = arith.constant 1 : index
    %237 = vector.load %arg6[%c0_127, %c0_128, %c1_129] : memref<4x18x18xf32, #tpu.memory_space<vmem>>, vector<1x17x17xf32>
    %238 = vector.shape_cast %237 : vector<1x17x17xf32> to vector<17x17xf32>
    %239 = vector.broadcast %236 : f32 to vector<17x17xf32>
    %240 = arith.mulf %239, %238 : vector<17x17xf32>
    %241 = arith.addf %235, %240 : vector<17x17xf32>
    %c34 = arith.constant 34 : index
    %242 = memref.load %arg3[%c34] : memref<128xf32, #tpu.memory_space<smem>>
    %c0_130 = arith.constant 0 : index
    %c1_131 = arith.constant 1 : index
    %c0_132 = arith.constant 0 : index
    %243 = vector.load %arg6[%c0_130, %c1_131, %c0_132] : memref<4x18x18xf32, #tpu.memory_space<vmem>>, vector<1x17x17xf32>
    %244 = vector.shape_cast %243 : vector<1x17x17xf32> to vector<17x17xf32>
    %245 = vector.broadcast %242 : f32 to vector<17x17xf32>
    %246 = arith.mulf %245, %244 : vector<17x17xf32>
    %247 = arith.addf %241, %246 : vector<17x17xf32>
    %c35 = arith.constant 35 : index
    %248 = memref.load %arg3[%c35] : memref<128xf32, #tpu.memory_space<smem>>
    %c0_133 = arith.constant 0 : index
    %c1_134 = arith.constant 1 : index
    %c1_135 = arith.constant 1 : index
    %249 = vector.load %arg6[%c0_133, %c1_134, %c1_135] : memref<4x18x18xf32, #tpu.memory_space<vmem>>, vector<1x17x17xf32>
    %250 = vector.shape_cast %249 : vector<1x17x17xf32> to vector<17x17xf32>
    %251 = vector.broadcast %248 : f32 to vector<17x17xf32>
    %252 = arith.mulf %251, %250 : vector<17x17xf32>
    %253 = arith.addf %247, %252 : vector<17x17xf32>
    %c36 = arith.constant 36 : index
    %254 = memref.load %arg3[%c36] : memref<128xf32, #tpu.memory_space<smem>>
    %c1_136 = arith.constant 1 : index
    %c0_137 = arith.constant 0 : index
    %c0_138 = arith.constant 0 : index
    %255 = vector.load %arg6[%c1_136, %c0_137, %c0_138] : memref<4x18x18xf32, #tpu.memory_space<vmem>>, vector<1x17x17xf32>
    %256 = vector.shape_cast %255 : vector<1x17x17xf32> to vector<17x17xf32>
    %257 = vector.broadcast %254 : f32 to vector<17x17xf32>
    %258 = arith.mulf %257, %256 : vector<17x17xf32>
    %259 = arith.addf %253, %258 : vector<17x17xf32>
    %c37 = arith.constant 37 : index
    %260 = memref.load %arg3[%c37] : memref<128xf32, #tpu.memory_space<smem>>
    %c1_139 = arith.constant 1 : index
    %c0_140 = arith.constant 0 : index
    %c1_141 = arith.constant 1 : index
    %261 = vector.load %arg6[%c1_139, %c0_140, %c1_141] : memref<4x18x18xf32, #tpu.memory_space<vmem>>, vector<1x17x17xf32>
    %262 = vector.shape_cast %261 : vector<1x17x17xf32> to vector<17x17xf32>
    %263 = vector.broadcast %260 : f32 to vector<17x17xf32>
    %264 = arith.mulf %263, %262 : vector<17x17xf32>
    %265 = arith.addf %259, %264 : vector<17x17xf32>
    %c38 = arith.constant 38 : index
    %266 = memref.load %arg3[%c38] : memref<128xf32, #tpu.memory_space<smem>>
    %c1_142 = arith.constant 1 : index
    %c1_143 = arith.constant 1 : index
    %c0_144 = arith.constant 0 : index
    %267 = vector.load %arg6[%c1_142, %c1_143, %c0_144] : memref<4x18x18xf32, #tpu.memory_space<vmem>>, vector<1x17x17xf32>
    %268 = vector.shape_cast %267 : vector<1x17x17xf32> to vector<17x17xf32>
    %269 = vector.broadcast %266 : f32 to vector<17x17xf32>
    %270 = arith.mulf %269, %268 : vector<17x17xf32>
    %271 = arith.addf %265, %270 : vector<17x17xf32>
    %c39 = arith.constant 39 : index
    %272 = memref.load %arg3[%c39] : memref<128xf32, #tpu.memory_space<smem>>
    %c1_145 = arith.constant 1 : index
    %c1_146 = arith.constant 1 : index
    %c1_147 = arith.constant 1 : index
    %273 = vector.load %arg6[%c1_145, %c1_146, %c1_147] : memref<4x18x18xf32, #tpu.memory_space<vmem>>, vector<1x17x17xf32>
    %274 = vector.shape_cast %273 : vector<1x17x17xf32> to vector<17x17xf32>
    %275 = vector.broadcast %272 : f32 to vector<17x17xf32>
    %276 = arith.mulf %275, %274 : vector<17x17xf32>
    %277 = arith.addf %271, %276 : vector<17x17xf32>
    %c40 = arith.constant 40 : index
    %278 = memref.load %arg3[%c40] : memref<128xf32, #tpu.memory_space<smem>>
    %c2_148 = arith.constant 2 : index
    %c0_149 = arith.constant 0 : index
    %c0_150 = arith.constant 0 : index
    %279 = vector.load %arg6[%c2_148, %c0_149, %c0_150] : memref<4x18x18xf32, #tpu.memory_space<vmem>>, vector<1x17x17xf32>
    %280 = vector.shape_cast %279 : vector<1x17x17xf32> to vector<17x17xf32>
    %281 = vector.broadcast %278 : f32 to vector<17x17xf32>
    %282 = arith.mulf %281, %280 : vector<17x17xf32>
    %283 = arith.addf %277, %282 : vector<17x17xf32>
    %c41 = arith.constant 41 : index
    %284 = memref.load %arg3[%c41] : memref<128xf32, #tpu.memory_space<smem>>
    %c2_151 = arith.constant 2 : index
    %c0_152 = arith.constant 0 : index
    %c1_153 = arith.constant 1 : index
    %285 = vector.load %arg6[%c2_151, %c0_152, %c1_153] : memref<4x18x18xf32, #tpu.memory_space<vmem>>, vector<1x17x17xf32>
    %286 = vector.shape_cast %285 : vector<1x17x17xf32> to vector<17x17xf32>
    %287 = vector.broadcast %284 : f32 to vector<17x17xf32>
    %288 = arith.mulf %287, %286 : vector<17x17xf32>
    %289 = arith.addf %283, %288 : vector<17x17xf32>
    %c42 = arith.constant 42 : index
    %290 = memref.load %arg3[%c42] : memref<128xf32, #tpu.memory_space<smem>>
    %c2_154 = arith.constant 2 : index
    %c1_155 = arith.constant 1 : index
    %c0_156 = arith.constant 0 : index
    %291 = vector.load %arg6[%c2_154, %c1_155, %c0_156] : memref<4x18x18xf32, #tpu.memory_space<vmem>>, vector<1x17x17xf32>
    %292 = vector.shape_cast %291 : vector<1x17x17xf32> to vector<17x17xf32>
    %293 = vector.broadcast %290 : f32 to vector<17x17xf32>
    %294 = arith.mulf %293, %292 : vector<17x17xf32>
    %295 = arith.addf %289, %294 : vector<17x17xf32>
    %c43 = arith.constant 43 : index
    %296 = memref.load %arg3[%c43] : memref<128xf32, #tpu.memory_space<smem>>
    %c2_157 = arith.constant 2 : index
    %c1_158 = arith.constant 1 : index
    %c1_159 = arith.constant 1 : index
    %297 = vector.load %arg6[%c2_157, %c1_158, %c1_159] : memref<4x18x18xf32, #tpu.memory_space<vmem>>, vector<1x17x17xf32>
    %298 = vector.shape_cast %297 : vector<1x17x17xf32> to vector<17x17xf32>
    %299 = vector.broadcast %296 : f32 to vector<17x17xf32>
    %300 = arith.mulf %299, %298 : vector<17x17xf32>
    %301 = arith.addf %295, %300 : vector<17x17xf32>
    %c44 = arith.constant 44 : index
    %302 = memref.load %arg3[%c44] : memref<128xf32, #tpu.memory_space<smem>>
    %c3_160 = arith.constant 3 : index
    %c0_161 = arith.constant 0 : index
    %c0_162 = arith.constant 0 : index
    %303 = vector.load %arg6[%c3_160, %c0_161, %c0_162] : memref<4x18x18xf32, #tpu.memory_space<vmem>>, vector<1x17x17xf32>
    %304 = vector.shape_cast %303 : vector<1x17x17xf32> to vector<17x17xf32>
    %305 = vector.broadcast %302 : f32 to vector<17x17xf32>
    %306 = arith.mulf %305, %304 : vector<17x17xf32>
    %307 = arith.addf %301, %306 : vector<17x17xf32>
    %c45 = arith.constant 45 : index
    %308 = memref.load %arg3[%c45] : memref<128xf32, #tpu.memory_space<smem>>
    %c3_163 = arith.constant 3 : index
    %c0_164 = arith.constant 0 : index
    %c1_165 = arith.constant 1 : index
    %309 = vector.load %arg6[%c3_163, %c0_164, %c1_165] : memref<4x18x18xf32, #tpu.memory_space<vmem>>, vector<1x17x17xf32>
    %310 = vector.shape_cast %309 : vector<1x17x17xf32> to vector<17x17xf32>
    %311 = vector.broadcast %308 : f32 to vector<17x17xf32>
    %312 = arith.mulf %311, %310 : vector<17x17xf32>
    %313 = arith.addf %307, %312 : vector<17x17xf32>
    %c46 = arith.constant 46 : index
    %314 = memref.load %arg3[%c46] : memref<128xf32, #tpu.memory_space<smem>>
    %c3_166 = arith.constant 3 : index
    %c1_167 = arith.constant 1 : index
    %c0_168 = arith.constant 0 : index
    %315 = vector.load %arg6[%c3_166, %c1_167, %c0_168] : memref<4x18x18xf32, #tpu.memory_space<vmem>>, vector<1x17x17xf32>
    %316 = vector.shape_cast %315 : vector<1x17x17xf32> to vector<17x17xf32>
    %317 = vector.broadcast %314 : f32 to vector<17x17xf32>
    %318 = arith.mulf %317, %316 : vector<17x17xf32>
    %319 = arith.addf %313, %318 : vector<17x17xf32>
    %c47 = arith.constant 47 : index
    %320 = memref.load %arg3[%c47] : memref<128xf32, #tpu.memory_space<smem>>
    %c3_169 = arith.constant 3 : index
    %c1_170 = arith.constant 1 : index
    %c1_171 = arith.constant 1 : index
    %321 = vector.load %arg6[%c3_169, %c1_170, %c1_171] : memref<4x18x18xf32, #tpu.memory_space<vmem>>, vector<1x17x17xf32>
    %322 = vector.shape_cast %321 : vector<1x17x17xf32> to vector<17x17xf32>
    %323 = vector.broadcast %320 : f32 to vector<17x17xf32>
    %324 = arith.mulf %323, %322 : vector<17x17xf32>
    %325 = arith.addf %319, %324 : vector<17x17xf32>
    %c0_172 = arith.constant 0 : index
    %c2_173 = arith.constant 2 : index
    %c0_174 = arith.constant 0 : index
    %c0_175 = arith.constant 0 : index
    %326 = vector.load %arg5[%c0_172, %c2_173, %c0_174, %c0_175] : memref<1x8x17x17xf32, #tpu.memory_space<vmem>>, vector<1x1x17x17xf32>
    %327 = vector.shape_cast %326 : vector<1x1x17x17xf32> to vector<17x17xf32>
    %328 = vector.shape_cast %325 : vector<17x17xf32> to vector<1x1x17x17xf32>
    tpu.vector_store %arg5[%c0_172, %c2_173, %c0_174, %c0_175], %328 {strides = array<i32>} : memref<1x8x17x17xf32, #tpu.memory_space<vmem>>, vector<1x1x17x17xf32>,
    %cst_176 = arith.constant 0.000000e+00 : f32
    %329 = vector.broadcast %cst_176 : f32 to vector<17x17xf32>
    %c3_177 = arith.constant 3 : index
    %330 = memref.load %arg4[%c3_177] : memref<8xf32, #tpu.memory_space<smem>>
    %331 = vector.broadcast %330 : f32 to vector<17x17xf32>
    %332 = arith.addf %329, %331 : vector<17x17xf32>
    %c48 = arith.constant 48 : index
    %333 = memref.load %arg3[%c48] : memref<128xf32, #tpu.memory_space<smem>>
    %c0_178 = arith.constant 0 : index
    %c0_179 = arith.constant 0 : index
    %c0_180 = arith.constant 0 : index
    %334 = vector.load %arg6[%c0_178, %c0_179, %c0_180] : memref<4x18x18xf32, #tpu.memory_space<vmem>>, vector<1x17x17xf32>
    %335 = vector.shape_cast %334 : vector<1x17x17xf32> to vector<17x17xf32>
    %336 = vector.broadcast %333 : f32 to vector<17x17xf32>
    %337 = arith.mulf %336, %335 : vector<17x17xf32>
    %338 = arith.addf %332, %337 : vector<17x17xf32>
    %c49 = arith.constant 49 : index
    %339 = memref.load %arg3[%c49] : memref<128xf32, #tpu.memory_space<smem>>
    %c0_181 = arith.constant 0 : index
    %c0_182 = arith.constant 0 : index
    %c1_183 = arith.constant 1 : index
    %340 = vector.load %arg6[%c0_181, %c0_182, %c1_183] : memref<4x18x18xf32, #tpu.memory_space<vmem>>, vector<1x17x17xf32>
    %341 = vector.shape_cast %340 : vector<1x17x17xf32> to vector<17x17xf32>
    %342 = vector.broadcast %339 : f32 to vector<17x17xf32>
    %343 = arith.mulf %342, %341 : vector<17x17xf32>
    %344 = arith.addf %338, %343 : vector<17x17xf32>
    %c50 = arith.constant 50 : index
    %345 = memref.load %arg3[%c50] : memref<128xf32, #tpu.memory_space<smem>>
    %c0_184 = arith.constant 0 : index
    %c1_185 = arith.constant 1 : index
    %c0_186 = arith.constant 0 : index
    %346 = vector.load %arg6[%c0_184, %c1_185, %c0_186] : memref<4x18x18xf32, #tpu.memory_space<vmem>>, vector<1x17x17xf32>
    %347 = vector.shape_cast %346 : vector<1x17x17xf32> to vector<17x17xf32>
    %348 = vector.broadcast %345 : f32 to vector<17x17xf32>
    %349 = arith.mulf %348, %347 : vector<17x17xf32>
    %350 = arith.addf %344, %349 : vector<17x17xf32>
    %c51 = arith.constant 51 : index
    %351 = memref.load %arg3[%c51] : memref<128xf32, #tpu.memory_space<smem>>
    %c0_187 = arith.constant 0 : index
    %c1_188 = arith.constant 1 : index
    %c1_189 = arith.constant 1 : index
    %352 = vector.load %arg6[%c0_187, %c1_188, %c1_189] : memref<4x18x18xf32, #tpu.memory_space<vmem>>, vector<1x17x17xf32>
    %353 = vector.shape_cast %352 : vector<1x17x17xf32> to vector<17x17xf32>
    %354 = vector.broadcast %351 : f32 to vector<17x17xf32>
    %355 = arith.mulf %354, %353 : vector<17x17xf32>
    %356 = arith.addf %350, %355 : vector<17x17xf32>
    %c52 = arith.constant 52 : index
    %357 = memref.load %arg3[%c52] : memref<128xf32, #tpu.memory_space<smem>>
    %c1_190 = arith.constant 1 : index
    %c0_191 = arith.constant 0 : index
    %c0_192 = arith.constant 0 : index
    %358 = vector.load %arg6[%c1_190, %c0_191, %c0_192] : memref<4x18x18xf32, #tpu.memory_space<vmem>>, vector<1x17x17xf32>
    %359 = vector.shape_cast %358 : vector<1x17x17xf32> to vector<17x17xf32>
    %360 = vector.broadcast %357 : f32 to vector<17x17xf32>
    %361 = arith.mulf %360, %359 : vector<17x17xf32>
    %362 = arith.addf %356, %361 : vector<17x17xf32>
    %c53 = arith.constant 53 : index
    %363 = memref.load %arg3[%c53] : memref<128xf32, #tpu.memory_space<smem>>
    %c1_193 = arith.constant 1 : index
    %c0_194 = arith.constant 0 : index
    %c1_195 = arith.constant 1 : index
    %364 = vector.load %arg6[%c1_193, %c0_194, %c1_195] : memref<4x18x18xf32, #tpu.memory_space<vmem>>, vector<1x17x17xf32>
    %365 = vector.shape_cast %364 : vector<1x17x17xf32> to vector<17x17xf32>
    %366 = vector.broadcast %363 : f32 to vector<17x17xf32>
    %367 = arith.mulf %366, %365 : vector<17x17xf32>
    %368 = arith.addf %362, %367 : vector<17x17xf32>
    %c54 = arith.constant 54 : index
    %369 = memref.load %arg3[%c54] : memref<128xf32, #tpu.memory_space<smem>>
    %c1_196 = arith.constant 1 : index
    %c1_197 = arith.constant 1 : index
    %c0_198 = arith.constant 0 : index
    %370 = vector.load %arg6[%c1_196, %c1_197, %c0_198] : memref<4x18x18xf32, #tpu.memory_space<vmem>>, vector<1x17x17xf32>
    %371 = vector.shape_cast %370 : vector<1x17x17xf32> to vector<17x17xf32>
    %372 = vector.broadcast %369 : f32 to vector<17x17xf32>
    %373 = arith.mulf %372, %371 : vector<17x17xf32>
    %374 = arith.addf %368, %373 : vector<17x17xf32>
    %c55 = arith.constant 55 : index
    %375 = memref.load %arg3[%c55] : memref<128xf32, #tpu.memory_space<smem>>
    %c1_199 = arith.constant 1 : index
    %c1_200 = arith.constant 1 : index
    %c1_201 = arith.constant 1 : index
    %376 = vector.load %arg6[%c1_199, %c1_200, %c1_201] : memref<4x18x18xf32, #tpu.memory_space<vmem>>, vector<1x17x17xf32>
    %377 = vector.shape_cast %376 : vector<1x17x17xf32> to vector<17x17xf32>
    %378 = vector.broadcast %375 : f32 to vector<17x17xf32>
    %379 = arith.mulf %378, %377 : vector<17x17xf32>
    %380 = arith.addf %374, %379 : vector<17x17xf32>
    %c56 = arith.constant 56 : index
    %381 = memref.load %arg3[%c56] : memref<128xf32, #tpu.memory_space<smem>>
    %c2_202 = arith.constant 2 : index
    %c0_203 = arith.constant 0 : index
    %c0_204 = arith.constant 0 : index
    %382 = vector.load %arg6[%c2_202, %c0_203, %c0_204] : memref<4x18x18xf32, #tpu.memory_space<vmem>>, vector<1x17x17xf32>
    %383 = vector.shape_cast %382 : vector<1x17x17xf32> to vector<17x17xf32>
    %384 = vector.broadcast %381 : f32 to vector<17x17xf32>
    %385 = arith.mulf %384, %383 : vector<17x17xf32>
    %386 = arith.addf %380, %385 : vector<17x17xf32>
    %c57 = arith.constant 57 : index
    %387 = memref.load %arg3[%c57] : memref<128xf32, #tpu.memory_space<smem>>
    %c2_205 = arith.constant 2 : index
    %c0_206 = arith.constant 0 : index
    %c1_207 = arith.constant 1 : index
    %388 = vector.load %arg6[%c2_205, %c0_206, %c1_207] : memref<4x18x18xf32, #tpu.memory_space<vmem>>, vector<1x17x17xf32>
    %389 = vector.shape_cast %388 : vector<1x17x17xf32> to vector<17x17xf32>
    %390 = vector.broadcast %387 : f32 to vector<17x17xf32>
    %391 = arith.mulf %390, %389 : vector<17x17xf32>
    %392 = arith.addf %386, %391 : vector<17x17xf32>
    %c58 = arith.constant 58 : index
    %393 = memref.load %arg3[%c58] : memref<128xf32, #tpu.memory_space<smem>>
    %c2_208 = arith.constant 2 : index
    %c1_209 = arith.constant 1 : index
    %c0_210 = arith.constant 0 : index
    %394 = vector.load %arg6[%c2_208, %c1_209, %c0_210] : memref<4x18x18xf32, #tpu.memory_space<vmem>>, vector<1x17x17xf32>
    %395 = vector.shape_cast %394 : vector<1x17x17xf32> to vector<17x17xf32>
    %396 = vector.broadcast %393 : f32 to vector<17x17xf32>
    %397 = arith.mulf %396, %395 : vector<17x17xf32>
    %398 = arith.addf %392, %397 : vector<17x17xf32>
    %c59 = arith.constant 59 : index
    %399 = memref.load %arg3[%c59] : memref<128xf32, #tpu.memory_space<smem>>
    %c2_211 = arith.constant 2 : index
    %c1_212 = arith.constant 1 : index
    %c1_213 = arith.constant 1 : index
    %400 = vector.load %arg6[%c2_211, %c1_212, %c1_213] : memref<4x18x18xf32, #tpu.memory_space<vmem>>, vector<1x17x17xf32>
    %401 = vector.shape_cast %400 : vector<1x17x17xf32> to vector<17x17xf32>
    %402 = vector.broadcast %399 : f32 to vector<17x17xf32>
    %403 = arith.mulf %402, %401 : vector<17x17xf32>
    %404 = arith.addf %398, %403 : vector<17x17xf32>
    %c60 = arith.constant 60 : index
    %405 = memref.load %arg3[%c60] : memref<128xf32, #tpu.memory_space<smem>>
    %c3_214 = arith.constant 3 : index
    %c0_215 = arith.constant 0 : index
    %c0_216 = arith.constant 0 : index
    %406 = vector.load %arg6[%c3_214, %c0_215, %c0_216] : memref<4x18x18xf32, #tpu.memory_space<vmem>>, vector<1x17x17xf32>
    %407 = vector.shape_cast %406 : vector<1x17x17xf32> to vector<17x17xf32>
    %408 = vector.broadcast %405 : f32 to vector<17x17xf32>
    %409 = arith.mulf %408, %407 : vector<17x17xf32>
    %410 = arith.addf %404, %409 : vector<17x17xf32>
    %c61 = arith.constant 61 : index
    %411 = memref.load %arg3[%c61] : memref<128xf32, #tpu.memory_space<smem>>
    %c3_217 = arith.constant 3 : index
    %c0_218 = arith.constant 0 : index
    %c1_219 = arith.constant 1 : index
    %412 = vector.load %arg6[%c3_217, %c0_218, %c1_219] : memref<4x18x18xf32, #tpu.memory_space<vmem>>, vector<1x17x17xf32>
    %413 = vector.shape_cast %412 : vector<1x17x17xf32> to vector<17x17xf32>
    %414 = vector.broadcast %411 : f32 to vector<17x17xf32>
    %415 = arith.mulf %414, %413 : vector<17x17xf32>
    %416 = arith.addf %410, %415 : vector<17x17xf32>
    %c62 = arith.constant 62 : index
    %417 = memref.load %arg3[%c62] : memref<128xf32, #tpu.memory_space<smem>>
    %c3_220 = arith.constant 3 : index
    %c1_221 = arith.constant 1 : index
    %c0_222 = arith.constant 0 : index
    %418 = vector.load %arg6[%c3_220, %c1_221, %c0_222] : memref<4x18x18xf32, #tpu.memory_space<vmem>>, vector<1x17x17xf32>
    %419 = vector.shape_cast %418 : vector<1x17x17xf32> to vector<17x17xf32>
    %420 = vector.broadcast %417 : f32 to vector<17x17xf32>
    %421 = arith.mulf %420, %419 : vector<17x17xf32>
    %422 = arith.addf %416, %421 : vector<17x17xf32>
    %c63 = arith.constant 63 : index
    %423 = memref.load %arg3[%c63] : memref<128xf32, #tpu.memory_space<smem>>
    %c3_223 = arith.constant 3 : index
    %c1_224 = arith.constant 1 : index
    %c1_225 = arith.constant 1 : index
    %424 = vector.load %arg6[%c3_223, %c1_224, %c1_225] : memref<4x18x18xf32, #tpu.memory_space<vmem>>, vector<1x17x17xf32>
    %425 = vector.shape_cast %424 : vector<1x17x17xf32> to vector<17x17xf32>
    %426 = vector.broadcast %423 : f32 to vector<17x17xf32>
    %427 = arith.mulf %426, %425 : vector<17x17xf32>
    %428 = arith.addf %422, %427 : vector<17x17xf32>
    %c0_226 = arith.constant 0 : index
    %c3_227 = arith.constant 3 : index
    %c0_228 = arith.constant 0 : index
    %c0_229 = arith.constant 0 : index
    %429 = vector.load %arg5[%c0_226, %c3_227, %c0_228, %c0_229] : memref<1x8x17x17xf32, #tpu.memory_space<vmem>>, vector<1x1x17x17xf32>
    %430 = vector.shape_cast %429 : vector<1x1x17x17xf32> to vector<17x17xf32>
    %431 = vector.shape_cast %428 : vector<17x17xf32> to vector<1x1x17x17xf32>
    tpu.vector_store %arg5[%c0_226, %c3_227, %c0_228, %c0_229], %431 {strides = array<i32>} : memref<1x8x17x17xf32, #tpu.memory_space<vmem>>, vector<1x1x17x17xf32>,
    %cst_230 = arith.constant 0.000000e+00 : f32
    %432 = vector.broadcast %cst_230 : f32 to vector<17x17xf32>
    %c4_231 = arith.constant 4 : index
    %433 = memref.load %arg4[%c4_231] : memref<8xf32, #tpu.memory_space<smem>>
    %434 = vector.broadcast %433 : f32 to vector<17x17xf32>
    %435 = arith.addf %432, %434 : vector<17x17xf32>
    %c64 = arith.constant 64 : index
    %436 = memref.load %arg3[%c64] : memref<128xf32, #tpu.memory_space<smem>>
    %c0_232 = arith.constant 0 : index
    %c0_233 = arith.constant 0 : index
    %c0_234 = arith.constant 0 : index
    %437 = vector.load %arg6[%c0_232, %c0_233, %c0_234] : memref<4x18x18xf32, #tpu.memory_space<vmem>>, vector<1x17x17xf32>
    %438 = vector.shape_cast %437 : vector<1x17x17xf32> to vector<17x17xf32>
    %439 = vector.broadcast %436 : f32 to vector<17x17xf32>
    %440 = arith.mulf %439, %438 : vector<17x17xf32>
    %441 = arith.addf %435, %440 : vector<17x17xf32>
    %c65 = arith.constant 65 : index
    %442 = memref.load %arg3[%c65] : memref<128xf32, #tpu.memory_space<smem>>
    %c0_235 = arith.constant 0 : index
    %c0_236 = arith.constant 0 : index
    %c1_237 = arith.constant 1 : index
    %443 = vector.load %arg6[%c0_235, %c0_236, %c1_237] : memref<4x18x18xf32, #tpu.memory_space<vmem>>, vector<1x17x17xf32>
    %444 = vector.shape_cast %443 : vector<1x17x17xf32> to vector<17x17xf32>
    %445 = vector.broadcast %442 : f32 to vector<17x17xf32>
    %446 = arith.mulf %445, %444 : vector<17x17xf32>
    %447 = arith.addf %441, %446 : vector<17x17xf32>
    %c66 = arith.constant 66 : index
    %448 = memref.load %arg3[%c66] : memref<128xf32, #tpu.memory_space<smem>>
    %c0_238 = arith.constant 0 : index
    %c1_239 = arith.constant 1 : index
    %c0_240 = arith.constant 0 : index
    %449 = vector.load %arg6[%c0_238, %c1_239, %c0_240] : memref<4x18x18xf32, #tpu.memory_space<vmem>>, vector<1x17x17xf32>
    %450 = vector.shape_cast %449 : vector<1x17x17xf32> to vector<17x17xf32>
    %451 = vector.broadcast %448 : f32 to vector<17x17xf32>
    %452 = arith.mulf %451, %450 : vector<17x17xf32>
    %453 = arith.addf %447, %452 : vector<17x17xf32>
    %c67 = arith.constant 67 : index
    %454 = memref.load %arg3[%c67] : memref<128xf32, #tpu.memory_space<smem>>
    %c0_241 = arith.constant 0 : index
    %c1_242 = arith.constant 1 : index
    %c1_243 = arith.constant 1 : index
    %455 = vector.load %arg6[%c0_241, %c1_242, %c1_243] : memref<4x18x18xf32, #tpu.memory_space<vmem>>, vector<1x17x17xf32>
    %456 = vector.shape_cast %455 : vector<1x17x17xf32> to vector<17x17xf32>
    %457 = vector.broadcast %454 : f32 to vector<17x17xf32>
    %458 = arith.mulf %457, %456 : vector<17x17xf32>
    %459 = arith.addf %453, %458 : vector<17x17xf32>
    %c68 = arith.constant 68 : index
    %460 = memref.load %arg3[%c68] : memref<128xf32, #tpu.memory_space<smem>>
    %c1_244 = arith.constant 1 : index
    %c0_245 = arith.constant 0 : index
    %c0_246 = arith.constant 0 : index
    %461 = vector.load %arg6[%c1_244, %c0_245, %c0_246] : memref<4x18x18xf32, #tpu.memory_space<vmem>>, vector<1x17x17xf32>
    %462 = vector.shape_cast %461 : vector<1x17x17xf32> to vector<17x17xf32>
    %463 = vector.broadcast %460 : f32 to vector<17x17xf32>
    %464 = arith.mulf %463, %462 : vector<17x17xf32>
    %465 = arith.addf %459, %464 : vector<17x17xf32>
    %c69 = arith.constant 69 : index
    %466 = memref.load %arg3[%c69] : memref<128xf32, #tpu.memory_space<smem>>
    %c1_247 = arith.constant 1 : index
    %c0_248 = arith.constant 0 : index
    %c1_249 = arith.constant 1 : index
    %467 = vector.load %arg6[%c1_247, %c0_248, %c1_249] : memref<4x18x18xf32, #tpu.memory_space<vmem>>, vector<1x17x17xf32>
    %468 = vector.shape_cast %467 : vector<1x17x17xf32> to vector<17x17xf32>
    %469 = vector.broadcast %466 : f32 to vector<17x17xf32>
    %470 = arith.mulf %469, %468 : vector<17x17xf32>
    %471 = arith.addf %465, %470 : vector<17x17xf32>
    %c70 = arith.constant 70 : index
    %472 = memref.load %arg3[%c70] : memref<128xf32, #tpu.memory_space<smem>>
    %c1_250 = arith.constant 1 : index
    %c1_251 = arith.constant 1 : index
    %c0_252 = arith.constant 0 : index
    %473 = vector.load %arg6[%c1_250, %c1_251, %c0_252] : memref<4x18x18xf32, #tpu.memory_space<vmem>>, vector<1x17x17xf32>
    %474 = vector.shape_cast %473 : vector<1x17x17xf32> to vector<17x17xf32>
    %475 = vector.broadcast %472 : f32 to vector<17x17xf32>
    %476 = arith.mulf %475, %474 : vector<17x17xf32>
    %477 = arith.addf %471, %476 : vector<17x17xf32>
    %c71 = arith.constant 71 : index
    %478 = memref.load %arg3[%c71] : memref<128xf32, #tpu.memory_space<smem>>
    %c1_253 = arith.constant 1 : index
    %c1_254 = arith.constant 1 : index
    %c1_255 = arith.constant 1 : index
    %479 = vector.load %arg6[%c1_253, %c1_254, %c1_255] : memref<4x18x18xf32, #tpu.memory_space<vmem>>, vector<1x17x17xf32>
    %480 = vector.shape_cast %479 : vector<1x17x17xf32> to vector<17x17xf32>
    %481 = vector.broadcast %478 : f32 to vector<17x17xf32>
    %482 = arith.mulf %481, %480 : vector<17x17xf32>
    %483 = arith.addf %477, %482 : vector<17x17xf32>
    %c72 = arith.constant 72 : index
    %484 = memref.load %arg3[%c72] : memref<128xf32, #tpu.memory_space<smem>>
    %c2_256 = arith.constant 2 : index
    %c0_257 = arith.constant 0 : index
    %c0_258 = arith.constant 0 : index
    %485 = vector.load %arg6[%c2_256, %c0_257, %c0_258] : memref<4x18x18xf32, #tpu.memory_space<vmem>>, vector<1x17x17xf32>
    %486 = vector.shape_cast %485 : vector<1x17x17xf32> to vector<17x17xf32>
    %487 = vector.broadcast %484 : f32 to vector<17x17xf32>
    %488 = arith.mulf %487, %486 : vector<17x17xf32>
    %489 = arith.addf %483, %488 : vector<17x17xf32>
    %c73 = arith.constant 73 : index
    %490 = memref.load %arg3[%c73] : memref<128xf32, #tpu.memory_space<smem>>
    %c2_259 = arith.constant 2 : index
    %c0_260 = arith.constant 0 : index
    %c1_261 = arith.constant 1 : index
    %491 = vector.load %arg6[%c2_259, %c0_260, %c1_261] : memref<4x18x18xf32, #tpu.memory_space<vmem>>, vector<1x17x17xf32>
    %492 = vector.shape_cast %491 : vector<1x17x17xf32> to vector<17x17xf32>
    %493 = vector.broadcast %490 : f32 to vector<17x17xf32>
    %494 = arith.mulf %493, %492 : vector<17x17xf32>
    %495 = arith.addf %489, %494 : vector<17x17xf32>
    %c74 = arith.constant 74 : index
    %496 = memref.load %arg3[%c74] : memref<128xf32, #tpu.memory_space<smem>>
    %c2_262 = arith.constant 2 : index
    %c1_263 = arith.constant 1 : index
    %c0_264 = arith.constant 0 : index
    %497 = vector.load %arg6[%c2_262, %c1_263, %c0_264] : memref<4x18x18xf32, #tpu.memory_space<vmem>>, vector<1x17x17xf32>
    %498 = vector.shape_cast %497 : vector<1x17x17xf32> to vector<17x17xf32>
    %499 = vector.broadcast %496 : f32 to vector<17x17xf32>
    %500 = arith.mulf %499, %498 : vector<17x17xf32>
    %501 = arith.addf %495, %500 : vector<17x17xf32>
    %c75 = arith.constant 75 : index
    %502 = memref.load %arg3[%c75] : memref<128xf32, #tpu.memory_space<smem>>
    %c2_265 = arith.constant 2 : index
    %c1_266 = arith.constant 1 : index
    %c1_267 = arith.constant 1 : index
    %503 = vector.load %arg6[%c2_265, %c1_266, %c1_267] : memref<4x18x18xf32, #tpu.memory_space<vmem>>, vector<1x17x17xf32>
    %504 = vector.shape_cast %503 : vector<1x17x17xf32> to vector<17x17xf32>
    %505 = vector.broadcast %502 : f32 to vector<17x17xf32>
    %506 = arith.mulf %505, %504 : vector<17x17xf32>
    %507 = arith.addf %501, %506 : vector<17x17xf32>
    %c76 = arith.constant 76 : index
    %508 = memref.load %arg3[%c76] : memref<128xf32, #tpu.memory_space<smem>>
    %c3_268 = arith.constant 3 : index
    %c0_269 = arith.constant 0 : index
    %c0_270 = arith.constant 0 : index
    %509 = vector.load %arg6[%c3_268, %c0_269, %c0_270] : memref<4x18x18xf32, #tpu.memory_space<vmem>>, vector<1x17x17xf32>
    %510 = vector.shape_cast %509 : vector<1x17x17xf32> to vector<17x17xf32>
    %511 = vector.broadcast %508 : f32 to vector<17x17xf32>
    %512 = arith.mulf %511, %510 : vector<17x17xf32>
    %513 = arith.addf %507, %512 : vector<17x17xf32>
    %c77 = arith.constant 77 : index
    %514 = memref.load %arg3[%c77] : memref<128xf32, #tpu.memory_space<smem>>
    %c3_271 = arith.constant 3 : index
    %c0_272 = arith.constant 0 : index
    %c1_273 = arith.constant 1 : index
    %515 = vector.load %arg6[%c3_271, %c0_272, %c1_273] : memref<4x18x18xf32, #tpu.memory_space<vmem>>, vector<1x17x17xf32>
    %516 = vector.shape_cast %515 : vector<1x17x17xf32> to vector<17x17xf32>
    %517 = vector.broadcast %514 : f32 to vector<17x17xf32>
    %518 = arith.mulf %517, %516 : vector<17x17xf32>
    %519 = arith.addf %513, %518 : vector<17x17xf32>
    %c78 = arith.constant 78 : index
    %520 = memref.load %arg3[%c78] : memref<128xf32, #tpu.memory_space<smem>>
    %c3_274 = arith.constant 3 : index
    %c1_275 = arith.constant 1 : index
    %c0_276 = arith.constant 0 : index
    %521 = vector.load %arg6[%c3_274, %c1_275, %c0_276] : memref<4x18x18xf32, #tpu.memory_space<vmem>>, vector<1x17x17xf32>
    %522 = vector.shape_cast %521 : vector<1x17x17xf32> to vector<17x17xf32>
    %523 = vector.broadcast %520 : f32 to vector<17x17xf32>
    %524 = arith.mulf %523, %522 : vector<17x17xf32>
    %525 = arith.addf %519, %524 : vector<17x17xf32>
    %c79 = arith.constant 79 : index
    %526 = memref.load %arg3[%c79] : memref<128xf32, #tpu.memory_space<smem>>
    %c3_277 = arith.constant 3 : index
    %c1_278 = arith.constant 1 : index
    %c1_279 = arith.constant 1 : index
    %527 = vector.load %arg6[%c3_277, %c1_278, %c1_279] : memref<4x18x18xf32, #tpu.memory_space<vmem>>, vector<1x17x17xf32>
    %528 = vector.shape_cast %527 : vector<1x17x17xf32> to vector<17x17xf32>
    %529 = vector.broadcast %526 : f32 to vector<17x17xf32>
    %530 = arith.mulf %529, %528 : vector<17x17xf32>
    %531 = arith.addf %525, %530 : vector<17x17xf32>
    %c0_280 = arith.constant 0 : index
    %c4_281 = arith.constant 4 : index
    %c0_282 = arith.constant 0 : index
    %c0_283 = arith.constant 0 : index
    %532 = vector.load %arg5[%c0_280, %c4_281, %c0_282, %c0_283] : memref<1x8x17x17xf32, #tpu.memory_space<vmem>>, vector<1x1x17x17xf32>
    %533 = vector.shape_cast %532 : vector<1x1x17x17xf32> to vector<17x17xf32>
    %534 = vector.shape_cast %531 : vector<17x17xf32> to vector<1x1x17x17xf32>
    tpu.vector_store %arg5[%c0_280, %c4_281, %c0_282, %c0_283], %534 {strides = array<i32>} : memref<1x8x17x17xf32, #tpu.memory_space<vmem>>, vector<1x1x17x17xf32>,
    %cst_284 = arith.constant 0.000000e+00 : f32
    %535 = vector.broadcast %cst_284 : f32 to vector<17x17xf32>
    %c5_285 = arith.constant 5 : index
    %536 = memref.load %arg4[%c5_285] : memref<8xf32, #tpu.memory_space<smem>>
    %537 = vector.broadcast %536 : f32 to vector<17x17xf32>
    %538 = arith.addf %535, %537 : vector<17x17xf32>
    %c80 = arith.constant 80 : index
    %539 = memref.load %arg3[%c80] : memref<128xf32, #tpu.memory_space<smem>>
    %c0_286 = arith.constant 0 : index
    %c0_287 = arith.constant 0 : index
    %c0_288 = arith.constant 0 : index
    %540 = vector.load %arg6[%c0_286, %c0_287, %c0_288] : memref<4x18x18xf32, #tpu.memory_space<vmem>>, vector<1x17x17xf32>
    %541 = vector.shape_cast %540 : vector<1x17x17xf32> to vector<17x17xf32>
    %542 = vector.broadcast %539 : f32 to vector<17x17xf32>
    %543 = arith.mulf %542, %541 : vector<17x17xf32>
    %544 = arith.addf %538, %543 : vector<17x17xf32>
    %c81 = arith.constant 81 : index
    %545 = memref.load %arg3[%c81] : memref<128xf32, #tpu.memory_space<smem>>
    %c0_289 = arith.constant 0 : index
    %c0_290 = arith.constant 0 : index
    %c1_291 = arith.constant 1 : index
    %546 = vector.load %arg6[%c0_289, %c0_290, %c1_291] : memref<4x18x18xf32, #tpu.memory_space<vmem>>, vector<1x17x17xf32>
    %547 = vector.shape_cast %546 : vector<1x17x17xf32> to vector<17x17xf32>
    %548 = vector.broadcast %545 : f32 to vector<17x17xf32>
    %549 = arith.mulf %548, %547 : vector<17x17xf32>
    %550 = arith.addf %544, %549 : vector<17x17xf32>
    %c82 = arith.constant 82 : index
    %551 = memref.load %arg3[%c82] : memref<128xf32, #tpu.memory_space<smem>>
    %c0_292 = arith.constant 0 : index
    %c1_293 = arith.constant 1 : index
    %c0_294 = arith.constant 0 : index
    %552 = vector.load %arg6[%c0_292, %c1_293, %c0_294] : memref<4x18x18xf32, #tpu.memory_space<vmem>>, vector<1x17x17xf32>
    %553 = vector.shape_cast %552 : vector<1x17x17xf32> to vector<17x17xf32>
    %554 = vector.broadcast %551 : f32 to vector<17x17xf32>
    %555 = arith.mulf %554, %553 : vector<17x17xf32>
    %556 = arith.addf %550, %555 : vector<17x17xf32>
    %c83 = arith.constant 83 : index
    %557 = memref.load %arg3[%c83] : memref<128xf32, #tpu.memory_space<smem>>
    %c0_295 = arith.constant 0 : index
    %c1_296 = arith.constant 1 : index
    %c1_297 = arith.constant 1 : index
    %558 = vector.load %arg6[%c0_295, %c1_296, %c1_297] : memref<4x18x18xf32, #tpu.memory_space<vmem>>, vector<1x17x17xf32>
    %559 = vector.shape_cast %558 : vector<1x17x17xf32> to vector<17x17xf32>
    %560 = vector.broadcast %557 : f32 to vector<17x17xf32>
    %561 = arith.mulf %560, %559 : vector<17x17xf32>
    %562 = arith.addf %556, %561 : vector<17x17xf32>
    %c84 = arith.constant 84 : index
    %563 = memref.load %arg3[%c84] : memref<128xf32, #tpu.memory_space<smem>>
    %c1_298 = arith.constant 1 : index
    %c0_299 = arith.constant 0 : index
    %c0_300 = arith.constant 0 : index
    %564 = vector.load %arg6[%c1_298, %c0_299, %c0_300] : memref<4x18x18xf32, #tpu.memory_space<vmem>>, vector<1x17x17xf32>
    %565 = vector.shape_cast %564 : vector<1x17x17xf32> to vector<17x17xf32>
    %566 = vector.broadcast %563 : f32 to vector<17x17xf32>
    %567 = arith.mulf %566, %565 : vector<17x17xf32>
    %568 = arith.addf %562, %567 : vector<17x17xf32>
    %c85 = arith.constant 85 : index
    %569 = memref.load %arg3[%c85] : memref<128xf32, #tpu.memory_space<smem>>
    %c1_301 = arith.constant 1 : index
    %c0_302 = arith.constant 0 : index
    %c1_303 = arith.constant 1 : index
    %570 = vector.load %arg6[%c1_301, %c0_302, %c1_303] : memref<4x18x18xf32, #tpu.memory_space<vmem>>, vector<1x17x17xf32>
    %571 = vector.shape_cast %570 : vector<1x17x17xf32> to vector<17x17xf32>
    %572 = vector.broadcast %569 : f32 to vector<17x17xf32>
    %573 = arith.mulf %572, %571 : vector<17x17xf32>
    %574 = arith.addf %568, %573 : vector<17x17xf32>
    %c86 = arith.constant 86 : index
    %575 = memref.load %arg3[%c86] : memref<128xf32, #tpu.memory_space<smem>>
    %c1_304 = arith.constant 1 : index
    %c1_305 = arith.constant 1 : index
    %c0_306 = arith.constant 0 : index
    %576 = vector.load %arg6[%c1_304, %c1_305, %c0_306] : memref<4x18x18xf32, #tpu.memory_space<vmem>>, vector<1x17x17xf32>
    %577 = vector.shape_cast %576 : vector<1x17x17xf32> to vector<17x17xf32>
    %578 = vector.broadcast %575 : f32 to vector<17x17xf32>
    %579 = arith.mulf %578, %577 : vector<17x17xf32>
    %580 = arith.addf %574, %579 : vector<17x17xf32>
    %c87 = arith.constant 87 : index
    %581 = memref.load %arg3[%c87] : memref<128xf32, #tpu.memory_space<smem>>
    %c1_307 = arith.constant 1 : index
    %c1_308 = arith.constant 1 : index
    %c1_309 = arith.constant 1 : index
    %582 = vector.load %arg6[%c1_307, %c1_308, %c1_309] : memref<4x18x18xf32, #tpu.memory_space<vmem>>, vector<1x17x17xf32>
    %583 = vector.shape_cast %582 : vector<1x17x17xf32> to vector<17x17xf32>
    %584 = vector.broadcast %581 : f32 to vector<17x17xf32>
    %585 = arith.mulf %584, %583 : vector<17x17xf32>
    %586 = arith.addf %580, %585 : vector<17x17xf32>
    %c88 = arith.constant 88 : index
    %587 = memref.load %arg3[%c88] : memref<128xf32, #tpu.memory_space<smem>>
    %c2_310 = arith.constant 2 : index
    %c0_311 = arith.constant 0 : index
    %c0_312 = arith.constant 0 : index
    %588 = vector.load %arg6[%c2_310, %c0_311, %c0_312] : memref<4x18x18xf32, #tpu.memory_space<vmem>>, vector<1x17x17xf32>
    %589 = vector.shape_cast %588 : vector<1x17x17xf32> to vector<17x17xf32>
    %590 = vector.broadcast %587 : f32 to vector<17x17xf32>
    %591 = arith.mulf %590, %589 : vector<17x17xf32>
    %592 = arith.addf %586, %591 : vector<17x17xf32>
    %c89 = arith.constant 89 : index
    %593 = memref.load %arg3[%c89] : memref<128xf32, #tpu.memory_space<smem>>
    %c2_313 = arith.constant 2 : index
    %c0_314 = arith.constant 0 : index
    %c1_315 = arith.constant 1 : index
    %594 = vector.load %arg6[%c2_313, %c0_314, %c1_315] : memref<4x18x18xf32, #tpu.memory_space<vmem>>, vector<1x17x17xf32>
    %595 = vector.shape_cast %594 : vector<1x17x17xf32> to vector<17x17xf32>
    %596 = vector.broadcast %593 : f32 to vector<17x17xf32>
    %597 = arith.mulf %596, %595 : vector<17x17xf32>
    %598 = arith.addf %592, %597 : vector<17x17xf32>
    %c90 = arith.constant 90 : index
    %599 = memref.load %arg3[%c90] : memref<128xf32, #tpu.memory_space<smem>>
    %c2_316 = arith.constant 2 : index
    %c1_317 = arith.constant 1 : index
    %c0_318 = arith.constant 0 : index
    %600 = vector.load %arg6[%c2_316, %c1_317, %c0_318] : memref<4x18x18xf32, #tpu.memory_space<vmem>>, vector<1x17x17xf32>
    %601 = vector.shape_cast %600 : vector<1x17x17xf32> to vector<17x17xf32>
    %602 = vector.broadcast %599 : f32 to vector<17x17xf32>
    %603 = arith.mulf %602, %601 : vector<17x17xf32>
    %604 = arith.addf %598, %603 : vector<17x17xf32>
    %c91 = arith.constant 91 : index
    %605 = memref.load %arg3[%c91] : memref<128xf32, #tpu.memory_space<smem>>
    %c2_319 = arith.constant 2 : index
    %c1_320 = arith.constant 1 : index
    %c1_321 = arith.constant 1 : index
    %606 = vector.load %arg6[%c2_319, %c1_320, %c1_321] : memref<4x18x18xf32, #tpu.memory_space<vmem>>, vector<1x17x17xf32>
    %607 = vector.shape_cast %606 : vector<1x17x17xf32> to vector<17x17xf32>
    %608 = vector.broadcast %605 : f32 to vector<17x17xf32>
    %609 = arith.mulf %608, %607 : vector<17x17xf32>
    %610 = arith.addf %604, %609 : vector<17x17xf32>
    %c92 = arith.constant 92 : index
    %611 = memref.load %arg3[%c92] : memref<128xf32, #tpu.memory_space<smem>>
    %c3_322 = arith.constant 3 : index
    %c0_323 = arith.constant 0 : index
    %c0_324 = arith.constant 0 : index
    %612 = vector.load %arg6[%c3_322, %c0_323, %c0_324] : memref<4x18x18xf32, #tpu.memory_space<vmem>>, vector<1x17x17xf32>
    %613 = vector.shape_cast %612 : vector<1x17x17xf32> to vector<17x17xf32>
    %614 = vector.broadcast %611 : f32 to vector<17x17xf32>
    %615 = arith.mulf %614, %613 : vector<17x17xf32>
    %616 = arith.addf %610, %615 : vector<17x17xf32>
    %c93 = arith.constant 93 : index
    %617 = memref.load %arg3[%c93] : memref<128xf32, #tpu.memory_space<smem>>
    %c3_325 = arith.constant 3 : index
    %c0_326 = arith.constant 0 : index
    %c1_327 = arith.constant 1 : index
    %618 = vector.load %arg6[%c3_325, %c0_326, %c1_327] : memref<4x18x18xf32, #tpu.memory_space<vmem>>, vector<1x17x17xf32>
    %619 = vector.shape_cast %618 : vector<1x17x17xf32> to vector<17x17xf32>
    %620 = vector.broadcast %617 : f32 to vector<17x17xf32>
    %621 = arith.mulf %620, %619 : vector<17x17xf32>
    %622 = arith.addf %616, %621 : vector<17x17xf32>
    %c94 = arith.constant 94 : index
    %623 = memref.load %arg3[%c94] : memref<128xf32, #tpu.memory_space<smem>>
    %c3_328 = arith.constant 3 : index
    %c1_329 = arith.constant 1 : index
    %c0_330 = arith.constant 0 : index
    %624 = vector.load %arg6[%c3_328, %c1_329, %c0_330] : memref<4x18x18xf32, #tpu.memory_space<vmem>>, vector<1x17x17xf32>
    %625 = vector.shape_cast %624 : vector<1x17x17xf32> to vector<17x17xf32>
    %626 = vector.broadcast %623 : f32 to vector<17x17xf32>
    %627 = arith.mulf %626, %625 : vector<17x17xf32>
    %628 = arith.addf %622, %627 : vector<17x17xf32>
    %c95 = arith.constant 95 : index
    %629 = memref.load %arg3[%c95] : memref<128xf32, #tpu.memory_space<smem>>
    %c3_331 = arith.constant 3 : index
    %c1_332 = arith.constant 1 : index
    %c1_333 = arith.constant 1 : index
    %630 = vector.load %arg6[%c3_331, %c1_332, %c1_333] : memref<4x18x18xf32, #tpu.memory_space<vmem>>, vector<1x17x17xf32>
    %631 = vector.shape_cast %630 : vector<1x17x17xf32> to vector<17x17xf32>
    %632 = vector.broadcast %629 : f32 to vector<17x17xf32>
    %633 = arith.mulf %632, %631 : vector<17x17xf32>
    %634 = arith.addf %628, %633 : vector<17x17xf32>
    %c0_334 = arith.constant 0 : index
    %c5_335 = arith.constant 5 : index
    %c0_336 = arith.constant 0 : index
    %c0_337 = arith.constant 0 : index
    %635 = vector.load %arg5[%c0_334, %c5_335, %c0_336, %c0_337] : memref<1x8x17x17xf32, #tpu.memory_space<vmem>>, vector<1x1x17x17xf32>
    %636 = vector.shape_cast %635 : vector<1x1x17x17xf32> to vector<17x17xf32>
    %637 = vector.shape_cast %634 : vector<17x17xf32> to vector<1x1x17x17xf32>
    tpu.vector_store %arg5[%c0_334, %c5_335, %c0_336, %c0_337], %637 {strides = array<i32>} : memref<1x8x17x17xf32, #tpu.memory_space<vmem>>, vector<1x1x17x17xf32>,
    %cst_338 = arith.constant 0.000000e+00 : f32
    %638 = vector.broadcast %cst_338 : f32 to vector<17x17xf32>
    %c6_339 = arith.constant 6 : index
    %639 = memref.load %arg4[%c6_339] : memref<8xf32, #tpu.memory_space<smem>>
    %640 = vector.broadcast %639 : f32 to vector<17x17xf32>
    %641 = arith.addf %638, %640 : vector<17x17xf32>
    %c96 = arith.constant 96 : index
    %642 = memref.load %arg3[%c96] : memref<128xf32, #tpu.memory_space<smem>>
    %c0_340 = arith.constant 0 : index
    %c0_341 = arith.constant 0 : index
    %c0_342 = arith.constant 0 : index
    %643 = vector.load %arg6[%c0_340, %c0_341, %c0_342] : memref<4x18x18xf32, #tpu.memory_space<vmem>>, vector<1x17x17xf32>
    %644 = vector.shape_cast %643 : vector<1x17x17xf32> to vector<17x17xf32>
    %645 = vector.broadcast %642 : f32 to vector<17x17xf32>
    %646 = arith.mulf %645, %644 : vector<17x17xf32>
    %647 = arith.addf %641, %646 : vector<17x17xf32>
    %c97 = arith.constant 97 : index
    %648 = memref.load %arg3[%c97] : memref<128xf32, #tpu.memory_space<smem>>
    %c0_343 = arith.constant 0 : index
    %c0_344 = arith.constant 0 : index
    %c1_345 = arith.constant 1 : index
    %649 = vector.load %arg6[%c0_343, %c0_344, %c1_345] : memref<4x18x18xf32, #tpu.memory_space<vmem>>, vector<1x17x17xf32>
    %650 = vector.shape_cast %649 : vector<1x17x17xf32> to vector<17x17xf32>
    %651 = vector.broadcast %648 : f32 to vector<17x17xf32>
    %652 = arith.mulf %651, %650 : vector<17x17xf32>
    %653 = arith.addf %647, %652 : vector<17x17xf32>
    %c98 = arith.constant 98 : index
    %654 = memref.load %arg3[%c98] : memref<128xf32, #tpu.memory_space<smem>>
    %c0_346 = arith.constant 0 : index
    %c1_347 = arith.constant 1 : index
    %c0_348 = arith.constant 0 : index
    %655 = vector.load %arg6[%c0_346, %c1_347, %c0_348] : memref<4x18x18xf32, #tpu.memory_space<vmem>>, vector<1x17x17xf32>
    %656 = vector.shape_cast %655 : vector<1x17x17xf32> to vector<17x17xf32>
    %657 = vector.broadcast %654 : f32 to vector<17x17xf32>
    %658 = arith.mulf %657, %656 : vector<17x17xf32>
    %659 = arith.addf %653, %658 : vector<17x17xf32>
    %c99 = arith.constant 99 : index
    %660 = memref.load %arg3[%c99] : memref<128xf32, #tpu.memory_space<smem>>
    %c0_349 = arith.constant 0 : index
    %c1_350 = arith.constant 1 : index
    %c1_351 = arith.constant 1 : index
    %661 = vector.load %arg6[%c0_349, %c1_350, %c1_351] : memref<4x18x18xf32, #tpu.memory_space<vmem>>, vector<1x17x17xf32>
    %662 = vector.shape_cast %661 : vector<1x17x17xf32> to vector<17x17xf32>
    %663 = vector.broadcast %660 : f32 to vector<17x17xf32>
    %664 = arith.mulf %663, %662 : vector<17x17xf32>
    %665 = arith.addf %659, %664 : vector<17x17xf32>
    %c100 = arith.constant 100 : index
    %666 = memref.load %arg3[%c100] : memref<128xf32, #tpu.memory_space<smem>>
    %c1_352 = arith.constant 1 : index
    %c0_353 = arith.constant 0 : index
    %c0_354 = arith.constant 0 : index
    %667 = vector.load %arg6[%c1_352, %c0_353, %c0_354] : memref<4x18x18xf32, #tpu.memory_space<vmem>>, vector<1x17x17xf32>
    %668 = vector.shape_cast %667 : vector<1x17x17xf32> to vector<17x17xf32>
    %669 = vector.broadcast %666 : f32 to vector<17x17xf32>
    %670 = arith.mulf %669, %668 : vector<17x17xf32>
    %671 = arith.addf %665, %670 : vector<17x17xf32>
    %c101 = arith.constant 101 : index
    %672 = memref.load %arg3[%c101] : memref<128xf32, #tpu.memory_space<smem>>
    %c1_355 = arith.constant 1 : index
    %c0_356 = arith.constant 0 : index
    %c1_357 = arith.constant 1 : index
    %673 = vector.load %arg6[%c1_355, %c0_356, %c1_357] : memref<4x18x18xf32, #tpu.memory_space<vmem>>, vector<1x17x17xf32>
    %674 = vector.shape_cast %673 : vector<1x17x17xf32> to vector<17x17xf32>
    %675 = vector.broadcast %672 : f32 to vector<17x17xf32>
    %676 = arith.mulf %675, %674 : vector<17x17xf32>
    %677 = arith.addf %671, %676 : vector<17x17xf32>
    %c102 = arith.constant 102 : index
    %678 = memref.load %arg3[%c102] : memref<128xf32, #tpu.memory_space<smem>>
    %c1_358 = arith.constant 1 : index
    %c1_359 = arith.constant 1 : index
    %c0_360 = arith.constant 0 : index
    %679 = vector.load %arg6[%c1_358, %c1_359, %c0_360] : memref<4x18x18xf32, #tpu.memory_space<vmem>>, vector<1x17x17xf32>
    %680 = vector.shape_cast %679 : vector<1x17x17xf32> to vector<17x17xf32>
    %681 = vector.broadcast %678 : f32 to vector<17x17xf32>
    %682 = arith.mulf %681, %680 : vector<17x17xf32>
    %683 = arith.addf %677, %682 : vector<17x17xf32>
    %c103 = arith.constant 103 : index
    %684 = memref.load %arg3[%c103] : memref<128xf32, #tpu.memory_space<smem>>
    %c1_361 = arith.constant 1 : index
    %c1_362 = arith.constant 1 : index
    %c1_363 = arith.constant 1 : index
    %685 = vector.load %arg6[%c1_361, %c1_362, %c1_363] : memref<4x18x18xf32, #tpu.memory_space<vmem>>, vector<1x17x17xf32>
    %686 = vector.shape_cast %685 : vector<1x17x17xf32> to vector<17x17xf32>
    %687 = vector.broadcast %684 : f32 to vector<17x17xf32>
    %688 = arith.mulf %687, %686 : vector<17x17xf32>
    %689 = arith.addf %683, %688 : vector<17x17xf32>
    %c104 = arith.constant 104 : index
    %690 = memref.load %arg3[%c104] : memref<128xf32, #tpu.memory_space<smem>>
    %c2_364 = arith.constant 2 : index
    %c0_365 = arith.constant 0 : index
    %c0_366 = arith.constant 0 : index
    %691 = vector.load %arg6[%c2_364, %c0_365, %c0_366] : memref<4x18x18xf32, #tpu.memory_space<vmem>>, vector<1x17x17xf32>
    %692 = vector.shape_cast %691 : vector<1x17x17xf32> to vector<17x17xf32>
    %693 = vector.broadcast %690 : f32 to vector<17x17xf32>
    %694 = arith.mulf %693, %692 : vector<17x17xf32>
    %695 = arith.addf %689, %694 : vector<17x17xf32>
    %c105 = arith.constant 105 : index
    %696 = memref.load %arg3[%c105] : memref<128xf32, #tpu.memory_space<smem>>
    %c2_367 = arith.constant 2 : index
    %c0_368 = arith.constant 0 : index
    %c1_369 = arith.constant 1 : index
    %697 = vector.load %arg6[%c2_367, %c0_368, %c1_369] : memref<4x18x18xf32, #tpu.memory_space<vmem>>, vector<1x17x17xf32>
    %698 = vector.shape_cast %697 : vector<1x17x17xf32> to vector<17x17xf32>
    %699 = vector.broadcast %696 : f32 to vector<17x17xf32>
    %700 = arith.mulf %699, %698 : vector<17x17xf32>
    %701 = arith.addf %695, %700 : vector<17x17xf32>
    %c106 = arith.constant 106 : index
    %702 = memref.load %arg3[%c106] : memref<128xf32, #tpu.memory_space<smem>>
    %c2_370 = arith.constant 2 : index
    %c1_371 = arith.constant 1 : index
    %c0_372 = arith.constant 0 : index
    %703 = vector.load %arg6[%c2_370, %c1_371, %c0_372] : memref<4x18x18xf32, #tpu.memory_space<vmem>>, vector<1x17x17xf32>
    %704 = vector.shape_cast %703 : vector<1x17x17xf32> to vector<17x17xf32>
    %705 = vector.broadcast %702 : f32 to vector<17x17xf32>
    %706 = arith.mulf %705, %704 : vector<17x17xf32>
    %707 = arith.addf %701, %706 : vector<17x17xf32>
    %c107 = arith.constant 107 : index
    %708 = memref.load %arg3[%c107] : memref<128xf32, #tpu.memory_space<smem>>
    %c2_373 = arith.constant 2 : index
    %c1_374 = arith.constant 1 : index
    %c1_375 = arith.constant 1 : index
    %709 = vector.load %arg6[%c2_373, %c1_374, %c1_375] : memref<4x18x18xf32, #tpu.memory_space<vmem>>, vector<1x17x17xf32>
    %710 = vector.shape_cast %709 : vector<1x17x17xf32> to vector<17x17xf32>
    %711 = vector.broadcast %708 : f32 to vector<17x17xf32>
    %712 = arith.mulf %711, %710 : vector<17x17xf32>
    %713 = arith.addf %707, %712 : vector<17x17xf32>
    %c108 = arith.constant 108 : index
    %714 = memref.load %arg3[%c108] : memref<128xf32, #tpu.memory_space<smem>>
    %c3_376 = arith.constant 3 : index
    %c0_377 = arith.constant 0 : index
    %c0_378 = arith.constant 0 : index
    %715 = vector.load %arg6[%c3_376, %c0_377, %c0_378] : memref<4x18x18xf32, #tpu.memory_space<vmem>>, vector<1x17x17xf32>
    %716 = vector.shape_cast %715 : vector<1x17x17xf32> to vector<17x17xf32>
    %717 = vector.broadcast %714 : f32 to vector<17x17xf32>
    %718 = arith.mulf %717, %716 : vector<17x17xf32>
    %719 = arith.addf %713, %718 : vector<17x17xf32>
    %c109 = arith.constant 109 : index
    %720 = memref.load %arg3[%c109] : memref<128xf32, #tpu.memory_space<smem>>
    %c3_379 = arith.constant 3 : index
    %c0_380 = arith.constant 0 : index
    %c1_381 = arith.constant 1 : index
    %721 = vector.load %arg6[%c3_379, %c0_380, %c1_381] : memref<4x18x18xf32, #tpu.memory_space<vmem>>, vector<1x17x17xf32>
    %722 = vector.shape_cast %721 : vector<1x17x17xf32> to vector<17x17xf32>
    %723 = vector.broadcast %720 : f32 to vector<17x17xf32>
    %724 = arith.mulf %723, %722 : vector<17x17xf32>
    %725 = arith.addf %719, %724 : vector<17x17xf32>
    %c110 = arith.constant 110 : index
    %726 = memref.load %arg3[%c110] : memref<128xf32, #tpu.memory_space<smem>>
    %c3_382 = arith.constant 3 : index
    %c1_383 = arith.constant 1 : index
    %c0_384 = arith.constant 0 : index
    %727 = vector.load %arg6[%c3_382, %c1_383, %c0_384] : memref<4x18x18xf32, #tpu.memory_space<vmem>>, vector<1x17x17xf32>
    %728 = vector.shape_cast %727 : vector<1x17x17xf32> to vector<17x17xf32>
    %729 = vector.broadcast %726 : f32 to vector<17x17xf32>
    %730 = arith.mulf %729, %728 : vector<17x17xf32>
    %731 = arith.addf %725, %730 : vector<17x17xf32>
    %c111 = arith.constant 111 : index
    %732 = memref.load %arg3[%c111] : memref<128xf32, #tpu.memory_space<smem>>
    %c3_385 = arith.constant 3 : index
    %c1_386 = arith.constant 1 : index
    %c1_387 = arith.constant 1 : index
    %733 = vector.load %arg6[%c3_385, %c1_386, %c1_387] : memref<4x18x18xf32, #tpu.memory_space<vmem>>, vector<1x17x17xf32>
    %734 = vector.shape_cast %733 : vector<1x17x17xf32> to vector<17x17xf32>
    %735 = vector.broadcast %732 : f32 to vector<17x17xf32>
    %736 = arith.mulf %735, %734 : vector<17x17xf32>
    %737 = arith.addf %731, %736 : vector<17x17xf32>
    %c0_388 = arith.constant 0 : index
    %c6_389 = arith.constant 6 : index
    %c0_390 = arith.constant 0 : index
    %c0_391 = arith.constant 0 : index
    %738 = vector.load %arg5[%c0_388, %c6_389, %c0_390, %c0_391] : memref<1x8x17x17xf32, #tpu.memory_space<vmem>>, vector<1x1x17x17xf32>
    %739 = vector.shape_cast %738 : vector<1x1x17x17xf32> to vector<17x17xf32>
    %740 = vector.shape_cast %737 : vector<17x17xf32> to vector<1x1x17x17xf32>
    tpu.vector_store %arg5[%c0_388, %c6_389, %c0_390, %c0_391], %740 {strides = array<i32>} : memref<1x8x17x17xf32, #tpu.memory_space<vmem>>, vector<1x1x17x17xf32>,
    %cst_392 = arith.constant 0.000000e+00 : f32
    %741 = vector.broadcast %cst_392 : f32 to vector<17x17xf32>
    %c7_393 = arith.constant 7 : index
    %742 = memref.load %arg4[%c7_393] : memref<8xf32, #tpu.memory_space<smem>>
    %743 = vector.broadcast %742 : f32 to vector<17x17xf32>
    %744 = arith.addf %741, %743 : vector<17x17xf32>
    %c112 = arith.constant 112 : index
    %745 = memref.load %arg3[%c112] : memref<128xf32, #tpu.memory_space<smem>>
    %c0_394 = arith.constant 0 : index
    %c0_395 = arith.constant 0 : index
    %c0_396 = arith.constant 0 : index
    %746 = vector.load %arg6[%c0_394, %c0_395, %c0_396] : memref<4x18x18xf32, #tpu.memory_space<vmem>>, vector<1x17x17xf32>
    %747 = vector.shape_cast %746 : vector<1x17x17xf32> to vector<17x17xf32>
    %748 = vector.broadcast %745 : f32 to vector<17x17xf32>
    %749 = arith.mulf %748, %747 : vector<17x17xf32>
    %750 = arith.addf %744, %749 : vector<17x17xf32>
    %c113 = arith.constant 113 : index
    %751 = memref.load %arg3[%c113] : memref<128xf32, #tpu.memory_space<smem>>
    %c0_397 = arith.constant 0 : index
    %c0_398 = arith.constant 0 : index
    %c1_399 = arith.constant 1 : index
    %752 = vector.load %arg6[%c0_397, %c0_398, %c1_399] : memref<4x18x18xf32, #tpu.memory_space<vmem>>, vector<1x17x17xf32>
    %753 = vector.shape_cast %752 : vector<1x17x17xf32> to vector<17x17xf32>
    %754 = vector.broadcast %751 : f32 to vector<17x17xf32>
    %755 = arith.mulf %754, %753 : vector<17x17xf32>
    %756 = arith.addf %750, %755 : vector<17x17xf32>
    %c114 = arith.constant 114 : index
    %757 = memref.load %arg3[%c114] : memref<128xf32, #tpu.memory_space<smem>>
    %c0_400 = arith.constant 0 : index
    %c1_401 = arith.constant 1 : index
    %c0_402 = arith.constant 0 : index
    %758 = vector.load %arg6[%c0_400, %c1_401, %c0_402] : memref<4x18x18xf32, #tpu.memory_space<vmem>>, vector<1x17x17xf32>
    %759 = vector.shape_cast %758 : vector<1x17x17xf32> to vector<17x17xf32>
    %760 = vector.broadcast %757 : f32 to vector<17x17xf32>
    %761 = arith.mulf %760, %759 : vector<17x17xf32>
    %762 = arith.addf %756, %761 : vector<17x17xf32>
    %c115 = arith.constant 115 : index
    %763 = memref.load %arg3[%c115] : memref<128xf32, #tpu.memory_space<smem>>
    %c0_403 = arith.constant 0 : index
    %c1_404 = arith.constant 1 : index
    %c1_405 = arith.constant 1 : index
    %764 = vector.load %arg6[%c0_403, %c1_404, %c1_405] : memref<4x18x18xf32, #tpu.memory_space<vmem>>, vector<1x17x17xf32>
    %765 = vector.shape_cast %764 : vector<1x17x17xf32> to vector<17x17xf32>
    %766 = vector.broadcast %763 : f32 to vector<17x17xf32>
    %767 = arith.mulf %766, %765 : vector<17x17xf32>
    %768 = arith.addf %762, %767 : vector<17x17xf32>
    %c116 = arith.constant 116 : index
    %769 = memref.load %arg3[%c116] : memref<128xf32, #tpu.memory_space<smem>>
    %c1_406 = arith.constant 1 : index
    %c0_407 = arith.constant 0 : index
    %c0_408 = arith.constant 0 : index
    %770 = vector.load %arg6[%c1_406, %c0_407, %c0_408] : memref<4x18x18xf32, #tpu.memory_space<vmem>>, vector<1x17x17xf32>
    %771 = vector.shape_cast %770 : vector<1x17x17xf32> to vector<17x17xf32>
    %772 = vector.broadcast %769 : f32 to vector<17x17xf32>
    %773 = arith.mulf %772, %771 : vector<17x17xf32>
    %774 = arith.addf %768, %773 : vector<17x17xf32>
    %c117 = arith.constant 117 : index
    %775 = memref.load %arg3[%c117] : memref<128xf32, #tpu.memory_space<smem>>
    %c1_409 = arith.constant 1 : index
    %c0_410 = arith.constant 0 : index
    %c1_411 = arith.constant 1 : index
    %776 = vector.load %arg6[%c1_409, %c0_410, %c1_411] : memref<4x18x18xf32, #tpu.memory_space<vmem>>, vector<1x17x17xf32>
    %777 = vector.shape_cast %776 : vector<1x17x17xf32> to vector<17x17xf32>
    %778 = vector.broadcast %775 : f32 to vector<17x17xf32>
    %779 = arith.mulf %778, %777 : vector<17x17xf32>
    %780 = arith.addf %774, %779 : vector<17x17xf32>
    %c118 = arith.constant 118 : index
    %781 = memref.load %arg3[%c118] : memref<128xf32, #tpu.memory_space<smem>>
    %c1_412 = arith.constant 1 : index
    %c1_413 = arith.constant 1 : index
    %c0_414 = arith.constant 0 : index
    %782 = vector.load %arg6[%c1_412, %c1_413, %c0_414] : memref<4x18x18xf32, #tpu.memory_space<vmem>>, vector<1x17x17xf32>
    %783 = vector.shape_cast %782 : vector<1x17x17xf32> to vector<17x17xf32>
    %784 = vector.broadcast %781 : f32 to vector<17x17xf32>
    %785 = arith.mulf %784, %783 : vector<17x17xf32>
    %786 = arith.addf %780, %785 : vector<17x17xf32>
    %c119 = arith.constant 119 : index
    %787 = memref.load %arg3[%c119] : memref<128xf32, #tpu.memory_space<smem>>
    %c1_415 = arith.constant 1 : index
    %c1_416 = arith.constant 1 : index
    %c1_417 = arith.constant 1 : index
    %788 = vector.load %arg6[%c1_415, %c1_416, %c1_417] : memref<4x18x18xf32, #tpu.memory_space<vmem>>, vector<1x17x17xf32>
    %789 = vector.shape_cast %788 : vector<1x17x17xf32> to vector<17x17xf32>
    %790 = vector.broadcast %787 : f32 to vector<17x17xf32>
    %791 = arith.mulf %790, %789 : vector<17x17xf32>
    %792 = arith.addf %786, %791 : vector<17x17xf32>
    %c120 = arith.constant 120 : index
    %793 = memref.load %arg3[%c120] : memref<128xf32, #tpu.memory_space<smem>>
    %c2_418 = arith.constant 2 : index
    %c0_419 = arith.constant 0 : index
    %c0_420 = arith.constant 0 : index
    %794 = vector.load %arg6[%c2_418, %c0_419, %c0_420] : memref<4x18x18xf32, #tpu.memory_space<vmem>>, vector<1x17x17xf32>
    %795 = vector.shape_cast %794 : vector<1x17x17xf32> to vector<17x17xf32>
    %796 = vector.broadcast %793 : f32 to vector<17x17xf32>
    %797 = arith.mulf %796, %795 : vector<17x17xf32>
    %798 = arith.addf %792, %797 : vector<17x17xf32>
    %c121 = arith.constant 121 : index
    %799 = memref.load %arg3[%c121] : memref<128xf32, #tpu.memory_space<smem>>
    %c2_421 = arith.constant 2 : index
    %c0_422 = arith.constant 0 : index
    %c1_423 = arith.constant 1 : index
    %800 = vector.load %arg6[%c2_421, %c0_422, %c1_423] : memref<4x18x18xf32, #tpu.memory_space<vmem>>, vector<1x17x17xf32>
    %801 = vector.shape_cast %800 : vector<1x17x17xf32> to vector<17x17xf32>
    %802 = vector.broadcast %799 : f32 to vector<17x17xf32>
    %803 = arith.mulf %802, %801 : vector<17x17xf32>
    %804 = arith.addf %798, %803 : vector<17x17xf32>
    %c122 = arith.constant 122 : index
    %805 = memref.load %arg3[%c122] : memref<128xf32, #tpu.memory_space<smem>>
    %c2_424 = arith.constant 2 : index
    %c1_425 = arith.constant 1 : index
    %c0_426 = arith.constant 0 : index
    %806 = vector.load %arg6[%c2_424, %c1_425, %c0_426] : memref<4x18x18xf32, #tpu.memory_space<vmem>>, vector<1x17x17xf32>
    %807 = vector.shape_cast %806 : vector<1x17x17xf32> to vector<17x17xf32>
    %808 = vector.broadcast %805 : f32 to vector<17x17xf32>
    %809 = arith.mulf %808, %807 : vector<17x17xf32>
    %810 = arith.addf %804, %809 : vector<17x17xf32>
    %c123 = arith.constant 123 : index
    %811 = memref.load %arg3[%c123] : memref<128xf32, #tpu.memory_space<smem>>
    %c2_427 = arith.constant 2 : index
    %c1_428 = arith.constant 1 : index
    %c1_429 = arith.constant 1 : index
    %812 = vector.load %arg6[%c2_427, %c1_428, %c1_429] : memref<4x18x18xf32, #tpu.memory_space<vmem>>, vector<1x17x17xf32>
    %813 = vector.shape_cast %812 : vector<1x17x17xf32> to vector<17x17xf32>
    %814 = vector.broadcast %811 : f32 to vector<17x17xf32>
    %815 = arith.mulf %814, %813 : vector<17x17xf32>
    %816 = arith.addf %810, %815 : vector<17x17xf32>
    %c124 = arith.constant 124 : index
    %817 = memref.load %arg3[%c124] : memref<128xf32, #tpu.memory_space<smem>>
    %c3_430 = arith.constant 3 : index
    %c0_431 = arith.constant 0 : index
    %c0_432 = arith.constant 0 : index
    %818 = vector.load %arg6[%c3_430, %c0_431, %c0_432] : memref<4x18x18xf32, #tpu.memory_space<vmem>>, vector<1x17x17xf32>
    %819 = vector.shape_cast %818 : vector<1x17x17xf32> to vector<17x17xf32>
    %820 = vector.broadcast %817 : f32 to vector<17x17xf32>
    %821 = arith.mulf %820, %819 : vector<17x17xf32>
    %822 = arith.addf %816, %821 : vector<17x17xf32>
    %c125 = arith.constant 125 : index
    %823 = memref.load %arg3[%c125] : memref<128xf32, #tpu.memory_space<smem>>
    %c3_433 = arith.constant 3 : index
    %c0_434 = arith.constant 0 : index
    %c1_435 = arith.constant 1 : index
    %824 = vector.load %arg6[%c3_433, %c0_434, %c1_435] : memref<4x18x18xf32, #tpu.memory_space<vmem>>, vector<1x17x17xf32>
    %825 = vector.shape_cast %824 : vector<1x17x17xf32> to vector<17x17xf32>
    %826 = vector.broadcast %823 : f32 to vector<17x17xf32>
    %827 = arith.mulf %826, %825 : vector<17x17xf32>
    %828 = arith.addf %822, %827 : vector<17x17xf32>
    %c126 = arith.constant 126 : index
    %829 = memref.load %arg3[%c126] : memref<128xf32, #tpu.memory_space<smem>>
    %c3_436 = arith.constant 3 : index
    %c1_437 = arith.constant 1 : index
    %c0_438 = arith.constant 0 : index
    %830 = vector.load %arg6[%c3_436, %c1_437, %c0_438] : memref<4x18x18xf32, #tpu.memory_space<vmem>>, vector<1x17x17xf32>
    %831 = vector.shape_cast %830 : vector<1x17x17xf32> to vector<17x17xf32>
    %832 = vector.broadcast %829 : f32 to vector<17x17xf32>
    %833 = arith.mulf %832, %831 : vector<17x17xf32>
    %834 = arith.addf %828, %833 : vector<17x17xf32>
    %c127 = arith.constant 127 : index
    %835 = memref.load %arg3[%c127] : memref<128xf32, #tpu.memory_space<smem>>
    %c3_439 = arith.constant 3 : index
    %c1_440 = arith.constant 1 : index
    %c1_441 = arith.constant 1 : index
    %836 = vector.load %arg6[%c3_439, %c1_440, %c1_441] : memref<4x18x18xf32, #tpu.memory_space<vmem>>, vector<1x17x17xf32>
    %837 = vector.shape_cast %836 : vector<1x17x17xf32> to vector<17x17xf32>
    %838 = vector.broadcast %835 : f32 to vector<17x17xf32>
    %839 = arith.mulf %838, %837 : vector<17x17xf32>
    %840 = arith.addf %834, %839 : vector<17x17xf32>
    %c0_442 = arith.constant 0 : index
    %c7_443 = arith.constant 7 : index
    %c0_444 = arith.constant 0 : index
    %c0_445 = arith.constant 0 : index
    %841 = vector.load %arg5[%c0_442, %c7_443, %c0_444, %c0_445] : memref<1x8x17x17xf32, #tpu.memory_space<vmem>>, vector<1x1x17x17xf32>
    %842 = vector.shape_cast %841 : vector<1x1x17x17xf32> to vector<17x17xf32>
    %843 = vector.shape_cast %840 : vector<17x17xf32> to vector<1x1x17x17xf32>
    tpu.vector_store %arg5[%c0_442, %c7_443, %c0_444, %c0_445], %843 {strides = array<i32>} : memref<1x8x17x17xf32, #tpu.memory_space<vmem>>, vector<1x1x17x17xf32>,
    return
  }
  func.func @transform_0(%arg0: i32, %arg1: i32) -> (i32, i32, i32, i32) {
    %c0_i32 = arith.constant 0 : i32
    %c0_i32_0 = arith.constant 0 : i32
    %c0_i32_1 = arith.constant 0 : i32
    %c0_i32_2 = arith.constant 0 : i32
    return %arg0, %c0_i32, %c0_i32_0, %c0_i32_1 : i32, i32, i32, i32
  }
  func.func @transform_1(%arg0: i32, %arg1: i32) -> i32 {
    %c0_i32 = arith.constant 0 : i32
    %c0_i32_0 = arith.constant 0 : i32
    return %c0_i32 : i32
  }
  func.func @transform_2(%arg0: i32, %arg1: i32) -> i32 {
    %c0_i32 = arith.constant 0 : i32
    %c0_i32_0 = arith.constant 0 : i32
    return %c0_i32 : i32
  }
  func.func @transform_3(%arg0: i32, %arg1: i32) -> (i32, i32, i32, i32) {
    %c0_i32 = arith.constant 0 : i32
    %c0_i32_0 = arith.constant 0 : i32
    %c0_i32_1 = arith.constant 0 : i32
    return %arg0, %arg1, %c0_i32, %c0_i32_0 : i32, i32, i32, i32
  }
}

</mosaic_0001>

<llo_original>
// kernel: tpu_custom_call.1
$region0: #{tpu_custom_call.1}
  #allocation0 [shape = 'u32[]', space=smem, size = 0x4, offset = 0x4, fixed_abs, tag = 'smem constant byte address 0x4 - core index']
  #allocation1 [shape = 'u32[144,128]{1,0:T(1,128)}', space=vmem, size = 0x12000, scoped, tag = 'internal scratch']
  #allocation2 [shape = 'f32[4,18,18]{2,1,0:T(8,128)}', space=vmem, size = 0xc000, scoped, tag = 'scratch operand']
  %s0 = inlined_call_operand.hbm [shape: f32[2,4,16,16], index: 0, kind: input, shape index: {}]
  %s1 = inlined_call_operand.vmem [shape: f32[128], index: 1, kind: input, shape index: {}]
  %s2 = inlined_call_operand.vmem [shape: f32[8], index: 2, kind: input, shape index: {}]
  %s3 = inlined_call_operand.vmem [shape: f32[2,8,17,17], index: 3, kind: output, shape index: {}]
  %s4 = sld [smem:[#allocation0]]
  $region57: #{tpu_custom_call.1} parent=0
    _
  %s6 = ssub.s32 1, %s4
  %s7 = scalar_select 0, %s6, %s4
  $region1: #{tpu_custom_call.1} parent=0
    #allocation3 [shape = 'u8[65536]{0}', space=vmem, size = 0x10000, scoped, tag = 'input window, operand 0']
    #allocation4 [shape = 's32[2]{0}', space=sflag, size = 0x8, scoped, tag = 'scoped memory for tpu_custom_call.1']
    #allocation5 [shape = 's32[2]{0}', space=sflag, size = 0x8, scoped, tag = 'scoped memory for tpu_custom_call.1']
    #allocation6 [shape = 'u8[512]{0}', space=smem, size = 0x200, scoped, tag = 'input window, operand 1, single buffered']
    #allocation7 [shape = 'u8[512]{0}', space=smem, size = 0x200, scoped, tag = 'input window, operand 2, single buffered']
    #allocation8 [shape = 's32[1]{0}', space=sflag, size = 0x4, scoped, tag = 'scoped memory for tpu_custom_call.1']
    %8 = vsyncpa [#allocation4], 0
    %s9 = scalar_lea.sflag [#allocation4], 1
    %10 = vsyncpa %s9, 0
    %11 = vsyncpa [#allocation5], 0
    %12 = vsyncpa [#allocation8], 0
    loop: start=0, step=1, limit=4
    $region2: #{tpu_custom_call.1} parent=1 // loop_pre_header
      _
    $region3: #{tpu_custom_call.1} parent=1 // loop_header
      %s14 = sphi 0, %s18
      %p15 = scmp.ge.s32.totalorder %s14, 4
      %s21 = sphi 0, %s33
      %s22 = sphi 0, %s29
      %s23 = sphi 0, %s21
      %s24 = sphi 0, %s22
      %s25 = sphi 0, %s23
      %s26 = sphi 0, %s24
      %s36 = sphi 0, %s38
      %s39 = sphi 0, %s36
      %s40 = sphi 0, %s39
      %s56 = sphi 0, %s40
      %s60 = sphi 0, %s60
      %s62 = sphi 0, %s60
      %s63 = sphi 0, %s62
      %s77 = sphi 0, %s63
      %s81 = sphi 0, %s81
      %s83 = sphi 0, %s81
      %s84 = sphi 0, %s83
      %s98 = sphi 0, %s84
      %s106 = sphi 0, %s108
      %s109 = sphi 0, %s106
      %s110 = sphi 0, %s109
      %s126 = sphi 0, %s110
    $region4: #{tpu_custom_call.1} parent=1 // loop_header_branch
      %17 = sbr.rel (%p15) target = $region8
    $region5: #{tpu_custom_call.1} parent=1 // loop_body
      %s19 = ssub.s32 %s14, 1
      %s20 = ssub.s32 %s14, 2
      %s27 = sadd.s32 1, %s22
      %p28 = scmp.ge.s32.totalorder %s27, 1
      %s29 = scalar_select %p28, 0, %s27
      %s30 = sadd.s32 1, %s21
      %s31 = scalar_select %p28, %s30, %s21
      %p32 = scmp.ge.s32.totalorder %s31, 2
      %s33 = scalar_select %p32, 0, %s31
      %s34 = ssub.s32 %s21, %s33
      %p35 = scmp.eq.s32.totalorder %s34, 0
      %s37 = sadd.s32 %s36, 1
      %s38 = scalar_select %p35, %s36, %s37
      %p41 = pneg %p35
      %p42 = scmp.eq.s32.totalorder %s14, 1
      %p43 = por %p41, %p42
      %p44 = scmp.ne.s32.totalorder %s36, %s39
      %p45 = scmp.eq.s32.totalorder %s14, 0
      %p46 = por %p44, %p45
      %p47 = scmp.ne.s32.totalorder %s36, %s39
      %p48 = scmp.eq.s32.totalorder %s19, 1
      %p49 = por %p47, %p48
      %p50 = scmp.ne.s32.totalorder %s39, %s40
      %p51 = scmp.eq.s32.totalorder %s19, 0
      %p52 = por %p50, %p51
      %p53 = scmp.ne.s32.totalorder %s39, %s40
      %p54 = scmp.eq.s32.totalorder %s20, 1
      %p55 = por %p53, %p54
      %p57 = scmp.ne.s32.totalorder %s40, %s56
      %p58 = scmp.eq.s32.totalorder %s20, 0
      %p59 = por %p57, %p58
      %s61 = sadd.s32 %s60, 1
      %p64 = scmp.eq.s32.totalorder %s14, 1
      %p65 = scmp.ne.s32.totalorder %s60, %s62
      %p66 = scmp.eq.s32.totalorder %s14, 0
      %p67 = por %p65, %p66
      %p68 = scmp.ne.s32.totalorder %s60, %s62
      %p69 = scmp.eq.s32.totalorder %s19, 1
      %p70 = por %p68, %p69
      %p71 = scmp.ne.s32.totalorder %s62, %s63
      %p72 = scmp.eq.s32.totalorder %s19, 0
      %p73 = por %p71, %p72
      %p74 = scmp.ne.s32.totalorder %s62, %s63
      %p75 = scmp.eq.s32.totalorder %s20, 1
      %p76 = por %p74, %p75
      %p78 = scmp.ne.s32.totalorder %s63, %s77
      %p79 = scmp.eq.s32.totalorder %s20, 0
      %p80 = por %p78, %p79
      %s82 = sadd.s32 %s81, 1
      %p85 = scmp.eq.s32.totalorder %s14, 1
      %p86 = scmp.ne.s32.totalorder %s81, %s83
      %p87 = scmp.eq.s32.totalorder %s14, 0
      %p88 = por %p86, %p87
      %p89 = scmp.ne.s32.totalorder %s81, %s83
      %p90 = scmp.eq.s32.totalorder %s19, 1
      %p91 = por %p89, %p90
      %p92 = scmp.ne.s32.totalorder %s83, %s84
      %p93 = scmp.eq.s32.totalorder %s19, 0
      %p94 = por %p92, %p93
      %p95 = scmp.ne.s32.totalorder %s83, %s84
      %p96 = scmp.eq.s32.totalorder %s20, 1
      %p97 = por %p95, %p96
      %p99 = scmp.ne.s32.totalorder %s84, %s98
      %p100 = scmp.eq.s32.totalorder %s20, 0
      %p101 = por %p99, %p100
      %s102 = ssub.s32 %s21, %s33
      %s103 = ssub.s32 %s22, %s29
      %s104 = sor.u32 %s102, %s103
      %p105 = scmp.eq.s32.totalorder %s104, 0
      %s107 = sadd.s32 %s106, 1
      %s108 = scalar_select %p105, %s106, %s107
      %p111 = pneg %p105
      %p112 = scmp.eq.s32.totalorder %s14, 1
      %p113 = por %p111, %p112
      %p114 = scmp.ne.s32.totalorder %s106, %s109
      %p115 = scmp.eq.s32.totalorder %s14, 0
      %p116 = por %p114, %p115
      %p117 = scmp.ne.s32.totalorder %s106, %s109
      %p118 = scmp.eq.s32.totalorder %s19, 1
      %p119 = por %p117, %p118
      %p120 = scmp.ne.s32.totalorder %s109, %s110
      %p121 = scmp.eq.s32.totalorder %s19, 0
      %p122 = por %p120, %p121
      %p123 = scmp.ne.s32.totalorder %s109, %s110
      %p124 = scmp.eq.s32.totalorder %s20, 1
      %p125 = por %p123, %p124
      %p127 = scmp.ne.s32.totalorder %s110, %s126
      %p128 = scmp.eq.s32.totalorder %s20, 0
      %p129 = por %p127, %p128
      %p130 = scmp.le.s32.totalorder 1, %s14
      %p131 = scmp.lt.s32.totalorder %s14, 3
      %p132 = pnand %p130, %p131
      %p133 = pneg %p132
      // Predicated region
      $region9: #{tpu_custom_call.1} parent=5 // pred_check
        _
      $region10: #{tpu_custom_call.1} parent=5 // pred_check_branch
        %135 = sbr.rel (%p132) target = $region12
      $region11: #{tpu_custom_call.1} parent=5 // pred_region
        %s136 = ssub.s32 %s14, 1
        // Predicated region
        $region13: #{tpu_custom_call.1} parent=11 // pred_check
          %p137 = pneg %p73
        $region14: #{tpu_custom_call.1} parent=11 // pred_check_branch
          %139 = sbr.rel (%p137) target = $region16
        $region15: #{tpu_custom_call.1} parent=11 // pred_region
          %s141 = ssub.s32 16, 16
          %142 = vsyncadd [#allocation5], %s141
          %s144 = sshll.u32 %s1, 4
          %s145 = int_to_ptr.vmem [resolvable:$true] %s144
          %147 = dma.vmem_to_smem %s145, 16, [#allocation6], [#allocation5]
        $region16: #{tpu_custom_call.1} parent=11 // pred_fallthru
          _
        // Predicated region
        $region17: #{tpu_custom_call.1} parent=11 // pred_check
          %p148 = pneg %p94
        $region18: #{tpu_custom_call.1} parent=11 // pred_check_branch
          %150 = sbr.rel (%p148) target = $region20
        $region19: #{tpu_custom_call.1} parent=11 // pred_region
          %s152 = ssub.s32 16, 16
          %153 = vsyncadd [#allocation8], %s152
          %s155 = sshll.u32 %s2, 4
          %s156 = int_to_ptr.vmem [resolvable:$true] %s155
          %158 = dma.vmem_to_smem %s156, 16, [#allocation7], [#allocation8]
        $region20: #{tpu_custom_call.1} parent=11 // pred_fallthru
          _
      $region12: #{tpu_custom_call.1} parent=5 // pred_fallthru
        _
      %p159 = scmp.lt.s32.totalorder %s14, 2
      // Predicated region
      $region21: #{tpu_custom_call.1} parent=5 // pred_check
        %p160 = pneg %p159
      $region22: #{tpu_custom_call.1} parent=5 // pred_check_branch
        %162 = sbr.rel (%p160) target = $region24
      $region23: #{tpu_custom_call.1} parent=5 // pred_region
        // Predicated region
        $region25: #{tpu_custom_call.1} parent=23 // pred_check
          %p163 = pneg %p46
        $region26: #{tpu_custom_call.1} parent=23 // pred_check_branch
          %165 = sbr.rel (%p163) target = $region28
        $region27: #{tpu_custom_call.1} parent=23 // pred_region
          %s166 = sand.u32 %s36, 1
          %s167 = scalar_lea.sflag [#allocation4], %s166
          %s168 = sand.u32 %s36, 1
          %s169 = smul.addr %s168, 64
          %s170 = scalar_lea.vmem [#allocation3], %s169
          %s172 = ssub.s32 1024, 1024
          %173 = vsyncadd %s167, %s172
          %s174 = smul.addr %s21, 8
          %s175 = smul.addr %s174, 128
          %s176 = scalar_lea.hbm %s0, %s175
          %s177 = sshll.u32 %s170, 4
          %s178 = int_to_ptr.vmem [resolvable:$true] %s177
          %183 = dma.hbm_to_vmem [thread:$0]  %s176, 1024, %s178, %s167, 128, 128, 8
        $region28: #{tpu_custom_call.1} parent=23 // pred_fallthru
          _
      $region24: #{tpu_custom_call.1} parent=5 // pred_fallthru
        _
      %p184 = scmp.le.s32.totalorder 1, %s14
      %p185 = scmp.lt.s32.totalorder %s14, 3
      %p186 = pnand %p184, %p185
      %p187 = pneg %p186
      // Predicated region
      $region29: #{tpu_custom_call.1} parent=5 // pred_check
        _
      $region30: #{tpu_custom_call.1} parent=5 // pred_check_branch
        %189 = sbr.rel (%p186) target = $region32
      $region31: #{tpu_custom_call.1} parent=5 // pred_region
        %s190 = ssub.s32 %s14, 1
        %s191 = sand.u32 %s39, 1
        %s192 = scalar_lea.sflag [#allocation4], %s191
        %s193 = sand.u32 %s39, 1
        %s194 = smul.addr %s193, 64
        %s195 = scalar_lea.vmem [#allocation3], %s194
        // Predicated region
        $region33: #{tpu_custom_call.1} parent=31 // pred_check
          %p196 = pneg %p52
        $region34: #{tpu_custom_call.1} parent=31 // pred_check_branch
          %198 = sbr.rel (%p196) target = $region36
        $region35: #{tpu_custom_call.1} parent=31 // pred_region
          %199 = dma.done %s192, 1024
        $region36: #{tpu_custom_call.1} parent=31 // pred_fallthru
          _
        // Predicated region
        $region37: #{tpu_custom_call.1} parent=31 // pred_check
          %p200 = pneg %p73
        $region38: #{tpu_custom_call.1} parent=31 // pred_check_branch
          %202 = sbr.rel (%p200) target = $region40
        $region39: #{tpu_custom_call.1} parent=31 // pred_region
          %203 = dma.done [#allocation5], 16
        $region40: #{tpu_custom_call.1} parent=31 // pred_fallthru
          _
        // Predicated region
        $region41: #{tpu_custom_call.1} parent=31 // pred_check
          %p204 = pneg %p94
        $region42: #{tpu_custom_call.1} parent=31 // pred_check_branch
          %206 = sbr.rel (%p204) target = $region44
        $region43: #{tpu_custom_call.1} parent=31 // pred_region
          %207 = dma.done [#allocation8], 16
        $region44: #{tpu_custom_call.1} parent=31 // pred_fallthru
          _
        %208 = sfence
        %s209 = sand.u32 %s39, 1
        %s210 = scalar_lea.sflag [#allocation4], %s209
        %s211 = sand.u32 %s39, 1
        %s212 = smul.addr %s211, 64
        %s213 = scalar_lea.vmem [#allocation3], %s212
        %p214 = pneg %p52
        %p215 = pneg %p49
        %p216 = pneg %p73
        %p217 = pneg %p70
        %p218 = pneg %p94
        %p219 = pneg %p91
        %p220 = pneg %p122
        %p221 = pneg %p119
        %s222 = smul.u32 8, %s24
        %p223 = scmp.lt.s32.totalorder %s23, 1
        %s224 = scalar_select %p223, %s23, 1
        %p225 = scmp.lt.s32.totalorder %s222, 7
        %s226 = scalar_select %p225, %s222, 7
        %s227 = smul.addr %s226, 3
        %s228 = smul.addr %s224, 24
        %s229 = sadd.s32 %s227, %s228
        %s230 = smul.addr %s229, 8
        %s231 = scalar_lea.vmem %s3, %s230
        %s232 = smul.u32 8, %s24
        %p233 = scmp.lt.s32.totalorder %s23, 1
        %s234 = scalar_select %p233, %s23, 1
        %p235 = scmp.lt.s32.totalorder %s232, 7
        %s236 = scalar_select %p235, %s232, 7
        %s237 = smul.addr %s236, 3
        %s238 = smul.addr %s234, 24
        %s239 = sadd.s32 %s237, %s238
        %s240 = smul.addr %s239, 8
        %s241 = scalar_lea.vmem %s3, %s240
        %s242 = smul.u32 8, %s24
        %vm243 = vcmask 146432
        %244 = vst.msk [vmem:[#allocation2] sm:$0xff] %vm243, 0.0
        %245 = vst.msk [vmem:[#allocation2 + $0x8] sm:$0xff] %vm243, 0.0
        %vm246 = vcmask 140288
        %247 = vst.msk [vmem:[#allocation2 + $0x10] sm:$0x3] %vm246, 0.0
        %248 = vst.msk [vmem:[#allocation2 + $0x18] sm:$0xff] %vm243, 0.0
        %249 = vst.msk [vmem:[#allocation2 + $0x20] sm:$0xff] %vm243, 0.0
        %250 = vst.msk [vmem:[#allocation2 + $0x28] sm:$0x3] %vm246, 0.0
        %251 = vst.msk [vmem:[#allocation2 + $0x30] sm:$0xff] %vm243, 0.0
        %252 = vst.msk [vmem:[#allocation2 + $0x38] sm:$0xff] %vm243, 0.0
        %253 = vst.msk [vmem:[#allocation2 + $0x40] sm:$0x3] %vm246, 0.0
        %254 = vst.msk [vmem:[#allocation2 + $0x48] sm:$0xff] %vm243, 0.0
        %255 = vst.msk [vmem:[#allocation2 + $0x50] sm:$0xff] %vm243, 0.0
        %256 = vst.msk [vmem:[#allocation2 + $0x58] sm:$0x3] %vm246, 0.0
        %v257 = vld [vmem:[%s195] sm:$0xff]
        %v258 = vld [vmem:[%s195 + $0x8] sm:$0xff]
        %v259 = vld [vmem:[%s195 + $0x10] sm:$0xff]
        %v260 = vld [vmem:[%s195 + $0x18] sm:$0xff]
        %v261 = vld [vmem:[%s195 + $0x20] sm:$0xff]
        %v262 = vld [vmem:[%s195 + $0x28] sm:$0xff]
        %v263 = vld [vmem:[%s195 + $0x30] sm:$0xff]
        %v264 = vld [vmem:[%s195 + $0x38] sm:$0xff]
        %v265 = vmin.f32 %v257, 20.0
        %v266 = vmin.f32 %v258, 20.0
        %v267 = vmin.f32 %v259, 20.0
        %v268 = vmin.f32 %v260, 20.0
        %v269 = vmin.f32 %v261, 20.0
        %v270 = vmin.f32 %v262, 20.0
        %v271 = vmin.f32 %v263, 20.0
        %v272 = vmin.f32 %v264, 20.0
        %v273 = vmul.f32 %v265, 1.442695
        %v274 = vpow.pop %v273
        %v275 = vmul.f32 %v266, 1.442695
        %v276 = vpow.pop %v275
        %v277 = vmul.f32 %v267, 1.442695
        %v278 = vpow.pop %v277
        %v279 = vmul.f32 %v268, 1.442695
        %v280 = vpow.pop %v279
        %v281 = vmul.f32 %v269, 1.442695
        %v282 = vpow.pop %v281
        %v283 = vmul.f32 %v270, 1.442695
        %v284 = vpow.pop %v283
        %v285 = vmul.f32 %v271, 1.442695
        %v286 = vpow.pop %v285
        %v287 = vmul.f32 %v272, 1.442695
        %v288 = vpow.pop %v287
        %v289 = vadd.f32 %v274, 2.0
        %v290 = vadd.f32 %v276, 2.0
        %v291 = vadd.f32 %v278, 2.0
        %v292 = vadd.f32 %v280, 2.0
        %v293 = vadd.f32 %v282, 2.0
        %v294 = vadd.f32 %v284, 2.0
        %v295 = vadd.f32 %v286, 2.0
        %v296 = vadd.f32 %v288, 2.0
        %v297 = vmul.f32 %v274, %v289
        %v298 = vmul.f32 %v276, %v290
        %v299 = vmul.f32 %v278, %v291
        %v300 = vmul.f32 %v280, %v292
        %v301 = vmul.f32 %v282, %v293
        %v302 = vmul.f32 %v284, %v294
        %v303 = vmul.f32 %v286, %v295
        %v304 = vmul.f32 %v288, %v296
        %v305 = vadd.f32 %v297, 2.0
        %v306 = vadd.f32 %v298, 2.0
        %v307 = vadd.f32 %v299, 2.0
        %v308 = vadd.f32 %v300, 2.0
        %v309 = vadd.f32 %v301, 2.0
        %v310 = vadd.f32 %v302, 2.0
        %v311 = vadd.f32 %v303, 2.0
        %v312 = vadd.f32 %v304, 2.0
        %v313 = vrcp.pop %v305
        %v314 = vrcp.pop %v306
        %v315 = vrcp.pop %v307
        %v316 = vrcp.pop %v308
        %v317 = vrcp.pop %v309
        %v318 = vrcp.pop %v310
        %v319 = vrcp.pop %v311
        %v320 = vrcp.pop %v312
        %v321 = vmul.f32 %v305, %v313
        %v322 = vmul.f32 %v306, %v314
        %v323 = vmul.f32 %v307, %v315
        %v324 = vmul.f32 %v308, %v316
        %v325 = vmul.f32 %v309, %v317
        %v326 = vmul.f32 %v310, %v318
        %v327 = vmul.f32 %v311, %v319
        %v328 = vmul.f32 %v312, %v320
        %v329 = vsub.f32 2.0, %v321
        %v330 = vsub.f32 2.0, %v322
        %v331 = vsub.f32 2.0, %v323
        %v332 = vsub.f32 2.0, %v324
        %v333 = vsub.f32 2.0, %v325
        %v334 = vsub.f32 2.0, %v326
        %v335 = vsub.f32 2.0, %v327
        %v336 = vsub.f32 2.0, %v328
        %v337 = vmul.f32 %v313, %v329
        %v338 = vmul.f32 %v314, %v330
        %v339 = vmul.f32 %v315, %v331
        %v340 = vmul.f32 %v316, %v332
        %v341 = vmul.f32 %v317, %v333
        %v342 = vmul.f32 %v318, %v334
        %v343 = vmul.f32 %v319, %v335
        %v344 = vmul.f32 %v320, %v336
        %v345 = vmul.f32 %v257, %v297
        %v346 = vmul.f32 %v258, %v298
        %v347 = vmul.f32 %v259, %v299
        %v348 = vmul.f32 %v260, %v300
        %v349 = vmul.f32 %v261, %v301
        %v350 = vmul.f32 %v262, %v302
        %v351 = vmul.f32 %v263, %v303
        %v352 = vmul.f32 %v264, %v304
        %v353 = vmul.f32 %v345, %v337
        %v354 = vmul.f32 %v346, %v338
        %v355 = vmul.f32 %v347, %v339
        %v356 = vmul.f32 %v348, %v340
        %v357 = vmul.f32 %v349, %v341
        %v358 = vmul.f32 %v350, %v342
        %v359 = vmul.f32 %v351, %v343
        %v360 = vmul.f32 %v352, %v344
        %369 = vrot.lane.b32.xlu0 %v353, 1
        %v370 = vpop.permute.xlu0 %369
        %371 = vrot.lane.b32.xlu0 %v354, 1
        %v372 = vpop.permute.xlu0 %371
        %373 = vrot.lane.b32.xlu0 %v355, 1
        %v374 = vpop.permute.xlu0 %373
        %375 = vrot.lane.b32.xlu0 %v356, 1
        %v376 = vpop.permute.xlu0 %375
        %377 = vrot.lane.b32.xlu0 %v357, 1
        %v378 = vpop.permute.xlu0 %377
        %379 = vrot.lane.b32.xlu0 %v358, 1
        %v380 = vpop.permute.xlu0 %379
        %381 = vrot.lane.b32.xlu0 %v359, 1
        %v382 = vpop.permute.xlu0 %381
        %383 = vrot.lane.b32.xlu0 %v360, 1
        %v384 = vpop.permute.xlu0 %383
        %vm393 = vcmask 138248
        %394 = vst.msk [vmem:[#allocation2 + $0x1] sm:$0xff] %vm393, %v370
        %395 = vst.msk [vmem:[#allocation2 + $0x9] sm:$0xff] %vm393, %v372
        %396 = vst.msk [vmem:[#allocation2 + $0x19] sm:$0xff] %vm393, %v374
        %397 = vst.msk [vmem:[#allocation2 + $0x21] sm:$0xff] %vm393, %v376
        %398 = vst.msk [vmem:[#allocation2 + $0x31] sm:$0xff] %vm393, %v378
        %399 = vst.msk [vmem:[#allocation2 + $0x39] sm:$0xff] %vm393, %v380
        %400 = vst.msk [vmem:[#allocation2 + $0x49] sm:$0xff] %vm393, %v382
        %401 = vst.msk [vmem:[#allocation2 + $0x51] sm:$0xff] %vm393, %v384
        %s402 = sld [smem:[#allocation7]]
        %v403 = vstv %s402
        %v404 = vadd.f32 %v403, 0.0
        %s405 = sld [smem:[#allocation6]]
        %v406 = vld [vmem:[#allocation2] sm:$0xff]
        %v407 = vld [vmem:[#allocation2 + $0x8] sm:$0xff]
        %v408 = vld [vmem:[#allocation2 + $0x10] sm:$0x1]
        %v409 = vstv %s405
        %v410 = vmul.f32 %v409, %v406
        %v411 = vmul.f32 %v409, %v407
        %v412 = vmul.f32 %v409, %v408
        %v413 = vadd.f32 %v404, %v410
        %v414 = vadd.f32 %v404, %v411
        %v415 = vadd.f32 %v404, %v412
        %s416 = sld [smem:[#allocation6 + $0x1]]
        %v417 = vstv %s416
        %v418 = vmul.f32 %v417, %v406
        %v419 = vmul.f32 %v417, %v407
        %v420 = vmul.f32 %v417, %v408
        %424 = vrot.lane.b32.xlu0 %v418, 127
        %v425 = vpop.permute.xlu0 %424
        %426 = vrot.lane.b32.xlu0 %v419, 127
        %v427 = vpop.permute.xlu0 %426
        %428 = vrot.lane.b32.xlu0 %v420, 127
        %v429 = vpop.permute.xlu0 %428
        %v433 = vadd.f32 %v413, %v425
        %v434 = vadd.f32 %v414, %v427
        %v435 = vadd.f32 %v415, %v429
        %s436 = sld [smem:[#allocation6 + $0x2]]
        %v437 = vld [vmem:[#allocation2 + $0x1] sm:$0xff]
        %v438 = vld [vmem:[#allocation2 + $0x9] sm:$0xff]
        %v439 = vld [vmem:[#allocation2 + $0x11] sm:$0x1]
        %v440 = vstv %s436
        %v441 = vmul.f32 %v440, %v437
        %v442 = vmul.f32 %v440, %v438
        %v443 = vmul.f32 %v440, %v439
        %v444 = vadd.f32 %v433, %v441
        %v445 = vadd.f32 %v434, %v442
        %v446 = vadd.f32 %v435, %v443
        %s447 = sld [smem:[#allocation6 + $0x3]]
        %v448 = vstv %s447
        %v449 = vmul.f32 %v448, %v437
        %v450 = vmul.f32 %v448, %v438
        %v451 = vmul.f32 %v448, %v439
        %455 = vrot.lane.b32.xlu0 %v449, 127
        %v456 = vpop.permute.xlu0 %455
        %457 = vrot.lane.b32.xlu0 %v450, 127
        %v458 = vpop.permute.xlu0 %457
        %459 = vrot.lane.b32.xlu0 %v451, 127
        %v460 = vpop.permute.xlu0 %459
        %v464 = vadd.f32 %v444, %v456
        %v465 = vadd.f32 %v445, %v458
        %v466 = vadd.f32 %v446, %v460
        %s467 = sld [smem:[#allocation6 + $0x4]]
        %s468 = scalar_lea.vmem [#allocation2], 24
        %v469 = vld [vmem:[%s468] sm:$0xff]
        %v470 = vld [vmem:[%s468 + $0x8] sm:$0xff]
        %v471 = vld [vmem:[%s468 + $0x10] sm:$0x1]
        %v472 = vstv %s467
        %v473 = vmul.f32 %v472, %v469
        %v474 = vmul.f32 %v472, %v470
        %v475 = vmul.f32 %v472, %v471
        %v476 = vadd.f32 %v464, %v473
        %v477 = vadd.f32 %v465, %v474
        %v478 = vadd.f32 %v466, %v475
        %s479 = sld [smem:[#allocation6 + $0x5]]
        %v480 = vstv %s479
        %v481 = vmul.f32 %v480, %v469
        %v482 = vmul.f32 %v480, %v470
        %v483 = vmul.f32 %v480, %v471
        %487 = vrot.lane.b32.xlu0 %v481, 127
        %v488 = vpop.permute.xlu0 %487
        %489 = vrot.lane.b32.xlu0 %v482, 127
        %v490 = vpop.permute.xlu0 %489
        %491 = vrot.lane.b32.xlu0 %v483, 127
        %v492 = vpop.permute.xlu0 %491
        %v496 = vadd.f32 %v476, %v488
        %v497 = vadd.f32 %v477, %v490
        %v498 = vadd.f32 %v478, %v492
        %s499 = sld [smem:[#allocation6 + $0x6]]
        %v500 = vld [vmem:[%s468 + $0x1] sm:$0xff]
        %v501 = vld [vmem:[%s468 + $0x9] sm:$0xff]
        %v502 = vld [vmem:[%s468 + $0x11] sm:$0x1]
        %v503 = vstv %s499
        %v504 = vmul.f32 %v503, %v500
        %v505 = vmul.f32 %v503, %v501
        %v506 = vmul.f32 %v503, %v502
        %v507 = vadd.f32 %v496, %v504
        %v508 = vadd.f32 %v497, %v505
        %v509 = vadd.f32 %v498, %v506
        %s510 = sld [smem:[#allocation6 + $0x7]]
        %v511 = vstv %s510
        %v512 = vmul.f32 %v511, %v500
        %v513 = vmul.f32 %v511, %v501
        %v514 = vmul.f32 %v511, %v502
        %518 = vrot.lane.b32.xlu0 %v512, 127
        %v519 = vpop.permute.xlu0 %518
        %520 = vrot.lane.b32.xlu0 %v513, 127
        %v521 = vpop.permute.xlu0 %520
        %522 = vrot.lane.b32.xlu0 %v514, 127
        %v523 = vpop.permute.xlu0 %522
        %v527 = vadd.f32 %v507, %v519
        %v528 = vadd.f32 %v508, %v521
        %v529 = vadd.f32 %v509, %v523
        %s530 = sld [smem:[#allocation6 + $0x8]]
        %s531 = scalar_lea.vmem [#allocation2], 48
        %v532 = vld [vmem:[%s531] sm:$0xff]
        %v533 = vld [vmem:[%s531 + $0x8] sm:$0xff]
        %v534 = vld [vmem:[%s531 + $0x10] sm:$0x1]
        %v535 = vstv %s530
        %v536 = vmul.f32 %v535, %v532
        %v537 = vmul.f32 %v535, %v533
        %v538 = vmul.f32 %v535, %v534
        %v539 = vadd.f32 %v527, %v536
        %v540 = vadd.f32 %v528, %v537
        %v541 = vadd.f32 %v529, %v538
        %s542 = sld [smem:[#allocation6 + $0x9]]
        %v543 = vstv %s542
        %v544 = vmul.f32 %v543, %v532
        %v545 = vmul.f32 %v543, %v533
        %v546 = vmul.f32 %v543, %v534
        %550 = vrot.lane.b32.xlu0 %v544, 127
        %v551 = vpop.permute.xlu0 %550
        %552 = vrot.lane.b32.xlu0 %v545, 127
        %v553 = vpop.permute.xlu0 %552
        %554 = vrot.lane.b32.xlu0 %v546, 127
        %v555 = vpop.permute.xlu0 %554
        %v559 = vadd.f32 %v539, %v551
        %v560 = vadd.f32 %v540, %v553
        %v561 = vadd.f32 %v541, %v555
        %s562 = sld [smem:[#allocation6 + $0xa]]
        %v563 = vld [vmem:[%s531 + $0x1] sm:$0xff]
        %v564 = vld [vmem:[%s531 + $0x9] sm:$0xff]
        %v565 = vld [vmem:[%s531 + $0x11] sm:$0x1]
        %v566 = vstv %s562
        %v567 = vmul.f32 %v566, %v563
        %v568 = vmul.f32 %v566, %v564
        %v569 = vmul.f32 %v566, %v565
        %v570 = vadd.f32 %v559, %v567
        %v571 = vadd.f32 %v560, %v568
        %v572 = vadd.f32 %v561, %v569
        %s573 = sld [smem:[#allocation6 + $0xb]]
        %v574 = vstv %s573
        %v575 = vmul.f32 %v574, %v563
        %v576 = vmul.f32 %v574, %v564
        %v577 = vmul.f32 %v574, %v565
        %581 = vrot.lane.b32.xlu0 %v575, 127
        %v582 = vpop.permute.xlu0 %581
        %583 = vrot.lane.b32.xlu0 %v576, 127
        %v584 = vpop.permute.xlu0 %583
        %585 = vrot.lane.b32.xlu0 %v577, 127
        %v586 = vpop.permute.xlu0 %585
        %v590 = vadd.f32 %v570, %v582
        %v591 = vadd.f32 %v571, %v584
        %v592 = vadd.f32 %v572, %v586
        %s593 = sld [smem:[#allocation6 + $0xc]]
        %s594 = scalar_lea.vmem [#allocation2], 72
        %v595 = vld [vmem:[%s594] sm:$0xff]
        %v596 = vld [vmem:[%s594 + $0x8] sm:$0xff]
        %v597 = vld [vmem:[%s594 + $0x10] sm:$0x1]
        %v598 = vstv %s593
        %v599 = vmul.f32 %v598, %v595
        %v600 = vmul.f32 %v598, %v596
        %v601 = vmul.f32 %v598, %v597
        %v602 = vadd.f32 %v590, %v599
        %v603 = vadd.f32 %v591, %v600
        %v604 = vadd.f32 %v592, %v601
        %s605 = sld [smem:[#allocation6 + $0xd]]
        %v606 = vstv %s605
        %v607 = vmul.f32 %v606, %v595
        %v608 = vmul.f32 %v606, %v596
        %v609 = vmul.f32 %v606, %v597
        %613 = vrot.lane.b32.xlu0 %v607, 127
        %v614 = vpop.permute.xlu0 %613
        %615 = vrot.lane.b32.xlu0 %v608, 127
        %v616 = vpop.permute.xlu0 %615
        %617 = vrot.lane.b32.xlu0 %v609, 127
        %v618 = vpop.permute.xlu0 %617
        %v622 = vadd.f32 %v602, %v614
        %v623 = vadd.f32 %v603, %v616
        %v624 = vadd.f32 %v604, %v618
        %s625 = sld [smem:[#allocation6 + $0xe]]
        %v626 = vld [vmem:[%s594 + $0x1] sm:$0xff]
        %v627 = vld [vmem:[%s594 + $0x9] sm:$0xff]
        %v628 = vld [vmem:[%s594 + $0x11] sm:$0x1]
        %v629 = vstv %s625
        %v630 = vmul.f32 %v629, %v626
        %v631 = vmul.f32 %v629, %v627
        %v632 = vmul.f32 %v629, %v628
        %v633 = vadd.f32 %v622, %v630
        %v634 = vadd.f32 %v623, %v631
        %v635 = vadd.f32 %v624, %v632
        %s636 = sld [smem:[#allocation6 + $0xf]]
        %v637 = vstv %s636
        %v638 = vmul.f32 %v637, %v626
        %v639 = vmul.f32 %v637, %v627
        %v640 = vmul.f32 %v637, %v628
        %644 = vrot.lane.b32.xlu0 %v638, 127
        %v645 = vpop.permute.xlu0 %644
        %646 = vrot.lane.b32.xlu0 %v639, 127
        %v647 = vpop.permute.xlu0 %646
        %648 = vrot.lane.b32.xlu0 %v640, 127
        %v649 = vpop.permute.xlu0 %648
        %v653 = vadd.f32 %v633, %v645
        %v654 = vadd.f32 %v634, %v647
        %v655 = vadd.f32 %v635, %v649
        %vm656 = vcmask 138240
        %657 = vst.msk [vmem:[%s241] sm:$0xff] %vm656, %v653
        %658 = vst.msk [vmem:[%s241 + $0x8] sm:$0xff] %vm656, %v654
        %vm659 = vcmask 131072
        %660 = vst.msk [vmem:[%s241 + $0x10] sm:$0x1] %vm659, %v655
        %s661 = sld [smem:[#allocation7 + $0x1]]
        %v662 = vstv %s661
        %v663 = vadd.f32 %v662, 0.0
        %s664 = sld [smem:[#allocation6 + $0x10]]
        %v665 = vld [vmem:[#allocation2] sm:$0xff]
        %v666 = vld [vmem:[#allocation2 + $0x8] sm:$0xff]
        %v667 = vld [vmem:[#allocation2 + $0x10] sm:$0x1]
        %v668 = vstv %s664
        %v669 = vmul.f32 %v668, %v665
        %v670 = vmul.f32 %v668, %v666
        %v671 = vmul.f32 %v668, %v667
        %v672 = vadd.f32 %v663, %v669
        %v673 = vadd.f32 %v663, %v670
        %v674 = vadd.f32 %v663, %v671
        %s675 = sld [smem:[#allocation6 + $0x11]]
        %v676 = vstv %s675
        %v677 = vmul.f32 %v676, %v665
        %v678 = vmul.f32 %v676, %v666
        %v679 = vmul.f32 %v676, %v667
        %683 = vrot.lane.b32.xlu0 %v677, 127
        %v684 = vpop.permute.xlu0 %683
        %685 = vrot.lane.b32.xlu0 %v678, 127
        %v686 = vpop.permute.xlu0 %685
        %687 = vrot.lane.b32.xlu0 %v679, 127
        %v688 = vpop.permute.xlu0 %687
        %v692 = vadd.f32 %v672, %v684
        %v693 = vadd.f32 %v673, %v686
        %v694 = vadd.f32 %v674, %v688
        %s695 = sld [smem:[#allocation6 + $0x12]]
        %v696 = vld [vmem:[#allocation2 + $0x1] sm:$0xff]
        %v697 = vld [vmem:[#allocation2 + $0x9] sm:$0xff]
        %v698 = vld [vmem:[#allocation2 + $0x11] sm:$0x1]
        %v699 = vstv %s695
        %v700 = vmul.f32 %v699, %v696
        %v701 = vmul.f32 %v699, %v697
        %v702 = vmul.f32 %v699, %v698
        %v703 = vadd.f32 %v692, %v700
        %v704 = vadd.f32 %v693, %v701
        %v705 = vadd.f32 %v694, %v702
        %s706 = sld [smem:[#allocation6 + $0x13]]
        %v707 = vstv %s706
        %v708 = vmul.f32 %v707, %v696
        %v709 = vmul.f32 %v707, %v697
        %v710 = vmul.f32 %v707, %v698
        %714 = vrot.lane.b32.xlu0 %v708, 127
        %v715 = vpop.permute.xlu0 %714
        %716 = vrot.lane.b32.xlu0 %v709, 127
        %v717 = vpop.permute.xlu0 %716
        %718 = vrot.lane.b32.xlu0 %v710, 127
        %v719 = vpop.permute.xlu0 %718
        %v723 = vadd.f32 %v703, %v715
        %v724 = vadd.f32 %v704, %v717
        %v725 = vadd.f32 %v705, %v719
        %s726 = sld [smem:[#allocation6 + $0x14]]
        %v727 = vld [vmem:[%s468] sm:$0xff]
        %v728 = vld [vmem:[%s468 + $0x8] sm:$0xff]
        %v729 = vld [vmem:[%s468 + $0x10] sm:$0x1]
        %v730 = vstv %s726
        %v731 = vmul.f32 %v730, %v727
        %v732 = vmul.f32 %v730, %v728
        %v733 = vmul.f32 %v730, %v729
        %v734 = vadd.f32 %v723, %v731
        %v735 = vadd.f32 %v724, %v732
        %v736 = vadd.f32 %v725, %v733
        %s737 = sld [smem:[#allocation6 + $0x15]]
        %v738 = vstv %s737
        %v739 = vmul.f32 %v738, %v727
        %v740 = vmul.f32 %v738, %v728
        %v741 = vmul.f32 %v738, %v729
        %745 = vrot.lane.b32.xlu0 %v739, 127
        %v746 = vpop.permute.xlu0 %745
        %747 = vrot.lane.b32.xlu0 %v740, 127
        %v748 = vpop.permute.xlu0 %747
        %749 = vrot.lane.b32.xlu0 %v741, 127
        %v750 = vpop.permute.xlu0 %749
        %v754 = vadd.f32 %v734, %v746
        %v755 = vadd.f32 %v735, %v748
        %v756 = vadd.f32 %v736, %v750
        %s757 = sld [smem:[#allocation6 + $0x16]]
        %v758 = vld [vmem:[%s468 + $0x1] sm:$0xff]
        %v759 = vld [vmem:[%s468 + $0x9] sm:$0xff]
        %v760 = vld [vmem:[%s468 + $0x11] sm:$0x1]
        %v761 = vstv %s757
        %v762 = vmul.f32 %v761, %v758
        %v763 = vmul.f32 %v761, %v759
        %v764 = vmul.f32 %v761, %v760
        %v765 = vadd.f32 %v754, %v762
        %v766 = vadd.f32 %v755, %v763
        %v767 = vadd.f32 %v756, %v764
        %s768 = sld [smem:[#allocation6 + $0x17]]
        %v769 = vstv %s768
        %v770 = vmul.f32 %v769, %v758
        %v771 = vmul.f32 %v769, %v759
        %v772 = vmul.f32 %v769, %v760
        %776 = vrot.lane.b32.xlu0 %v770, 127
        %v777 = vpop.permute.xlu0 %776
        %778 = vrot.lane.b32.xlu0 %v771, 127
        %v779 = vpop.permute.xlu0 %778
        %780 = vrot.lane.b32.xlu0 %v772, 127
        %v781 = vpop.permute.xlu0 %780
        %v785 = vadd.f32 %v765, %v777
        %v786 = vadd.f32 %v766, %v779
        %v787 = vadd.f32 %v767, %v781
        %s788 = sld [smem:[#allocation6 + $0x18]]
        %v789 = vld [vmem:[%s531] sm:$0xff]
        %v790 = vld [vmem:[%s531 + $0x8] sm:$0xff]
        %v791 = vld [vmem:[%s531 + $0x10] sm:$0x1]
        %v792 = vstv %s788
        %v793 = vmul.f32 %v792, %v789
        %v794 = vmul.f32 %v792, %v790
        %v795 = vmul.f32 %v792, %v791
        %v796 = vadd.f32 %v785, %v793
        %v797 = vadd.f32 %v786, %v794
        %v798 = vadd.f32 %v787, %v795
        %s799 = sld [smem:[#allocation6 + $0x19]]
        %v800 = vstv %s799
        %v801 = vmul.f32 %v800, %v789
        %v802 = vmul.f32 %v800, %v790
        %v803 = vmul.f32 %v800, %v791
        %807 = vrot.lane.b32.xlu0 %v801, 127
        %v808 = vpop.permute.xlu0 %807
        %809 = vrot.lane.b32.xlu0 %v802, 127
        %v810 = vpop.permute.xlu0 %809
        %811 = vrot.lane.b32.xlu0 %v803, 127
        %v812 = vpop.permute.xlu0 %811
        %v816 = vadd.f32 %v796, %v808
        %v817 = vadd.f32 %v797, %v810
        %v818 = vadd.f32 %v798, %v812
        %s819 = sld [smem:[#allocation6 + $0x1a]]
        %v820 = vld [vmem:[%s531 + $0x1] sm:$0xff]
        %v821 = vld [vmem:[%s531 + $0x9] sm:$0xff]
        %v822 = vld [vmem:[%s531 + $0x11] sm:$0x1]
        %v823 = vstv %s819
        %v824 = vmul.f32 %v823, %v820
        %v825 = vmul.f32 %v823, %v821
        %v826 = vmul.f32 %v823, %v822
        %v827 = vadd.f32 %v816, %v824
        %v828 = vadd.f32 %v817, %v825
        %v829 = vadd.f32 %v818, %v826
        %s830 = sld [smem:[#allocation6 + $0x1b]]
        %v831 = vstv %s830
        %v832 = vmul.f32 %v831, %v820
        %v833 = vmul.f32 %v831, %v821
        %v834 = vmul.f32 %v831, %v822
        %838 = vrot.lane.b32.xlu0 %v832, 127
        %v839 = vpop.permute.xlu0 %838
        %840 = vrot.lane.b32.xlu0 %v833, 127
        %v841 = vpop.permute.xlu0 %840
        %842 = vrot.lane.b32.xlu0 %v834, 127
        %v843 = vpop.permute.xlu0 %842
        %v847 = vadd.f32 %v827, %v839
        %v848 = vadd.f32 %v828, %v841
        %v849 = vadd.f32 %v829, %v843
        %s850 = sld [smem:[#allocation6 + $0x1c]]
        %v851 = vld [vmem:[%s594] sm:$0xff]
        %v852 = vld [vmem:[%s594 + $0x8] sm:$0xff]
        %v853 = vld [vmem:[%s594 + $0x10] sm:$0x1]
        %v854 = vstv %s850
        %v855 = vmul.f32 %v854, %v851
        %v856 = vmul.f32 %v854, %v852
        %v857 = vmul.f32 %v854, %v853
        %v858 = vadd.f32 %v847, %v855
        %v859 = vadd.f32 %v848, %v856
        %v860 = vadd.f32 %v849, %v857
        %s861 = sld [smem:[#allocation6 + $0x1d]]
        %v862 = vstv %s861
        %v863 = vmul.f32 %v862, %v851
        %v864 = vmul.f32 %v862, %v852
        %v865 = vmul.f32 %v862, %v853
        %869 = vrot.lane.b32.xlu0 %v863, 127
        %v870 = vpop.permute.xlu0 %869
        %871 = vrot.lane.b32.xlu0 %v864, 127
        %v872 = vpop.permute.xlu0 %871
        %873 = vrot.lane.b32.xlu0 %v865, 127
        %v874 = vpop.permute.xlu0 %873
        %v878 = vadd.f32 %v858, %v870
        %v879 = vadd.f32 %v859, %v872
        %v880 = vadd.f32 %v860, %v874
        %s881 = sld [smem:[#allocation6 + $0x1e]]
        %v882 = vld [vmem:[%s594 + $0x1] sm:$0xff]
        %v883 = vld [vmem:[%s594 + $0x9] sm:$0xff]
        %v884 = vld [vmem:[%s594 + $0x11] sm:$0x1]
        %v885 = vstv %s881
        %v886 = vmul.f32 %v885, %v882
        %v887 = vmul.f32 %v885, %v883
        %v888 = vmul.f32 %v885, %v884
        %v889 = vadd.f32 %v878, %v886
        %v890 = vadd.f32 %v879, %v887
        %v891 = vadd.f32 %v880, %v888
        %s892 = sld [smem:[#allocation6 + $0x1f]]
        %v893 = vstv %s892
        %v894 = vmul.f32 %v893, %v882
        %v895 = vmul.f32 %v893, %v883
        %v896 = vmul.f32 %v893, %v884
        %900 = vrot.lane.b32.xlu0 %v894, 127
        %v901 = vpop.permute.xlu0 %900
        %902 = vrot.lane.b32.xlu0 %v895, 127
        %v903 = vpop.permute.xlu0 %902
        %904 = vrot.lane.b32.xlu0 %v896, 127
        %v905 = vpop.permute.xlu0 %904
        %v909 = vadd.f32 %v889, %v901
        %v910 = vadd.f32 %v890, %v903
        %v911 = vadd.f32 %v891, %v905
        %s912 = scalar_lea.vmem %s241, 24
        %913 = vst.msk [vmem:[%s912] sm:$0xff] %vm656, %v909
        %914 = vst.msk [vmem:[%s912 + $0x8] sm:$0xff] %vm656, %v910
        %915 = vst.msk [vmem:[%s912 + $0x10] sm:$0x1] %vm659, %v911
        %s916 = sld [smem:[#allocation7 + $0x2]]
        %v917 = vstv %s916
        %v918 = vadd.f32 %v917, 0.0
        %s919 = sld [smem:[#allocation6 + $0x20]]
        %v920 = vld [vmem:[#allocation2] sm:$0xff]
        %v921 = vld [vmem:[#allocation2 + $0x8] sm:$0xff]
        %v922 = vld [vmem:[#allocation2 + $0x10] sm:$0x1]
        %v923 = vstv %s919
        %v924 = vmul.f32 %v923, %v920
        %v925 = vmul.f32 %v923, %v921
        %v926 = vmul.f32 %v923, %v922
        %v927 = vadd.f32 %v918, %v924
        %v928 = vadd.f32 %v918, %v925
        %v929 = vadd.f32 %v918, %v926
        %s930 = sld [smem:[#allocation6 + $0x21]]
        %v931 = vstv %s930
        %v932 = vmul.f32 %v931, %v920
        %v933 = vmul.f32 %v931, %v921
        %v934 = vmul.f32 %v931, %v922
        %938 = vrot.lane.b32.xlu0 %v932, 127
        %v939 = vpop.permute.xlu0 %938
        %940 = vrot.lane.b32.xlu0 %v933, 127
        %v941 = vpop.permute.xlu0 %940
        %942 = vrot.lane.b32.xlu0 %v934, 127
        %v943 = vpop.permute.xlu0 %942
        %v947 = vadd.f32 %v927, %v939
        %v948 = vadd.f32 %v928, %v941
        %v949 = vadd.f32 %v929, %v943
        %s950 = sld [smem:[#allocation6 + $0x22]]
        %v951 = vld [vmem:[#allocation2 + $0x1] sm:$0xff]
        %v952 = vld [vmem:[#allocation2 + $0x9] sm:$0xff]
        %v953 = vld [vmem:[#allocation2 + $0x11] sm:$0x1]
        %v954 = vstv %s950
        %v955 = vmul.f32 %v954, %v951
        %v956 = vmul.f32 %v954, %v952
        %v957 = vmul.f32 %v954, %v953
        %v958 = vadd.f32 %v947, %v955
        %v959 = vadd.f32 %v948, %v956
        %v960 = vadd.f32 %v949, %v957
        %s961 = sld [smem:[#allocation6 + $0x23]]
        %v962 = vstv %s961
        %v963 = vmul.f32 %v962, %v951
        %v964 = vmul.f32 %v962, %v952
        %v965 = vmul.f32 %v962, %v953
        %969 = vrot.lane.b32.xlu0 %v963, 127
        %v970 = vpop.permute.xlu0 %969
        %971 = vrot.lane.b32.xlu0 %v964, 127
        %v972 = vpop.permute.xlu0 %971
        %973 = vrot.lane.b32.xlu0 %v965, 127
        %v974 = vpop.permute.xlu0 %973
        %v978 = vadd.f32 %v958, %v970
        %v979 = vadd.f32 %v959, %v972
        %v980 = vadd.f32 %v960, %v974
        %s981 = sld [smem:[#allocation6 + $0x24]]
        %v982 = vld [vmem:[%s468] sm:$0xff]
        %v983 = vld [vmem:[%s468 + $0x8] sm:$0xff]
        %v984 = vld [vmem:[%s468 + $0x10] sm:$0x1]
        %v985 = vstv %s981
        %v986 = vmul.f32 %v985, %v982
        %v987 = vmul.f32 %v985, %v983
        %v988 = vmul.f32 %v985, %v984
        %v989 = vadd.f32 %v978, %v986
        %v990 = vadd.f32 %v979, %v987
        %v991 = vadd.f32 %v980, %v988
        %s992 = sld [smem:[#allocation6 + $0x25]]
        %v993 = vstv %s992
        %v994 = vmul.f32 %v993, %v982
        %v995 = vmul.f32 %v993, %v983
        %v996 = vmul.f32 %v993, %v984
        %1000 = vrot.lane.b32.xlu0 %v994, 127
        %v1001 = vpop.permute.xlu0 %1000
        %1002 = vrot.lane.b32.xlu0 %v995, 127
        %v1003 = vpop.permute.xlu0 %1002
        %1004 = vrot.lane.b32.xlu0 %v996, 127
        %v1005 = vpop.permute.xlu0 %1004
        %v1009 = vadd.f32 %v989, %v1001
        %v1010 = vadd.f32 %v990, %v1003
        %v1011 = vadd.f32 %v991, %v1005
        %s1012 = sld [smem:[#allocation6 + $0x26]]
        %v1013 = vld [vmem:[%s468 + $0x1] sm:$0xff]
        %v1014 = vld [vmem:[%s468 + $0x9] sm:$0xff]
        %v1015 = vld [vmem:[%s468 + $0x11] sm:$0x1]
        %v1016 = vstv %s1012
        %v1017 = vmul.f32 %v1016, %v1013
        %v1018 = vmul.f32 %v1016, %v1014
        %v1019 = vmul.f32 %v1016, %v1015
        %v1020 = vadd.f32 %v1009, %v1017
        %v1021 = vadd.f32 %v1010, %v1018
        %v1022 = vadd.f32 %v1011, %v1019
        %s1023 = sld [smem:[#allocation6 + $0x27]]
        %v1024 = vstv %s1023
        %v1025 = vmul.f32 %v1024, %v1013
        %v1026 = vmul.f32 %v1024, %v1014
        %v1027 = vmul.f32 %v1024, %v1015
        %1031 = vrot.lane.b32.xlu0 %v1025, 127
        %v1032 = vpop.permute.xlu0 %1031
        %1033 = vrot.lane.b32.xlu0 %v1026, 127
        %v1034 = vpop.permute.xlu0 %1033
        %1035 = vrot.lane.b32.xlu0 %v1027, 127
        %v1036 = vpop.permute.xlu0 %1035
        %v1040 = vadd.f32 %v1020, %v1032
        %v1041 = vadd.f32 %v1021, %v1034
        %v1042 = vadd.f32 %v1022, %v1036
        %s1043 = sld [smem:[#allocation6 + $0x28]]
        %v1044 = vld [vmem:[%s531] sm:$0xff]
        %v1045 = vld [vmem:[%s531 + $0x8] sm:$0xff]
        %v1046 = vld [vmem:[%s531 + $0x10] sm:$0x1]
        %v1047 = vstv %s1043
        %v1048 = vmul.f32 %v1047, %v1044
        %v1049 = vmul.f32 %v1047, %v1045
        %v1050 = vmul.f32 %v1047, %v1046
        %v1051 = vadd.f32 %v1040, %v1048
        %v1052 = vadd.f32 %v1041, %v1049
        %v1053 = vadd.f32 %v1042, %v1050
        %s1054 = sld [smem:[#allocation6 + $0x29]]
        %v1055 = vstv %s1054
        %v1056 = vmul.f32 %v1055, %v1044
        %v1057 = vmul.f32 %v1055, %v1045
        %v1058 = vmul.f32 %v1055, %v1046
        %1062 = vrot.lane.b32.xlu0 %v1056, 127
        %v1063 = vpop.permute.xlu0 %1062
        %1064 = vrot.lane.b32.xlu0 %v1057, 127
        %v1065 = vpop.permute.xlu0 %1064
        %1066 = vrot.lane.b32.xlu0 %v1058, 127
        %v1067 = vpop.permute.xlu0 %1066
        %v1071 = vadd.f32 %v1051, %v1063
        %v1072 = vadd.f32 %v1052, %v1065
        %v1073 = vadd.f32 %v1053, %v1067
        %s1074 = sld [smem:[#allocation6 + $0x2a]]
        %v1075 = vld [vmem:[%s531 + $0x1] sm:$0xff]
        %v1076 = vld [vmem:[%s531 + $0x9] sm:$0xff]
        %v1077 = vld [vmem:[%s531 + $0x11] sm:$0x1]
        %v1078 = vstv %s1074
        %v1079 = vmul.f32 %v1078, %v1075
        %v1080 = vmul.f32 %v1078, %v1076
        %v1081 = vmul.f32 %v1078, %v1077
        %v1082 = vadd.f32 %v1071, %v1079
        %v1083 = vadd.f32 %v1072, %v1080
        %v1084 = vadd.f32 %v1073, %v1081
        %s1085 = sld [smem:[#allocation6 + $0x2b]]
        %v1086 = vstv %s1085
        %v1087 = vmul.f32 %v1086, %v1075
        %v1088 = vmul.f32 %v1086, %v1076
        %v1089 = vmul.f32 %v1086, %v1077
        %1093 = vrot.lane.b32.xlu0 %v1087, 127
        %v1094 = vpop.permute.xlu0 %1093
        %1095 = vrot.lane.b32.xlu0 %v1088, 127
        %v1096 = vpop.permute.xlu0 %1095
        %1097 = vrot.lane.b32.xlu0 %v1089, 127
        %v1098 = vpop.permute.xlu0 %1097
        %v1102 = vadd.f32 %v1082, %v1094
        %v1103 = vadd.f32 %v1083, %v1096
        %v1104 = vadd.f32 %v1084, %v1098
        %s1105 = sld [smem:[#allocation6 + $0x2c]]
        %v1106 = vld [vmem:[%s594] sm:$0xff]
        %v1107 = vld [vmem:[%s594 + $0x8] sm:$0xff]
        %v1108 = vld [vmem:[%s594 + $0x10] sm:$0x1]
        %v1109 = vstv %s1105
        %v1110 = vmul.f32 %v1109, %v1106
        %v1111 = vmul.f32 %v1109, %v1107
        %v1112 = vmul.f32 %v1109, %v1108
        %v1113 = vadd.f32 %v1102, %v1110
        %v1114 = vadd.f32 %v1103, %v1111
        %v1115 = vadd.f32 %v1104, %v1112
        %s1116 = sld [smem:[#allocation6 + $0x2d]]
        %v1117 = vstv %s1116
        %v1118 = vmul.f32 %v1117, %v1106
        %v1119 = vmul.f32 %v1117, %v1107
        %v1120 = vmul.f32 %v1117, %v1108
        %1124 = vrot.lane.b32.xlu0 %v1118, 127
        %v1125 = vpop.permute.xlu0 %1124
        %1126 = vrot.lane.b32.xlu0 %v1119, 127
        %v1127 = vpop.permute.xlu0 %1126
        %1128 = vrot.lane.b32.xlu0 %v1120, 127
        %v1129 = vpop.permute.xlu0 %1128
        %v1133 = vadd.f32 %v1113, %v1125
        %v1134 = vadd.f32 %v1114, %v1127
        %v1135 = vadd.f32 %v1115, %v1129
        %s1136 = sld [smem:[#allocation6 + $0x2e]]
        %v1137 = vld [vmem:[%s594 + $0x1] sm:$0xff]
        %v1138 = vld [vmem:[%s594 + $0x9] sm:$0xff]
        %v1139 = vld [vmem:[%s594 + $0x11] sm:$0x1]
        %v1140 = vstv %s1136
        %v1141 = vmul.f32 %v1140, %v1137
        %v1142 = vmul.f32 %v1140, %v1138
        %v1143 = vmul.f32 %v1140, %v1139
        %v1144 = vadd.f32 %v1133, %v1141
        %v1145 = vadd.f32 %v1134, %v1142
        %v1146 = vadd.f32 %v1135, %v1143
        %s1147 = sld [smem:[#allocation6 + $0x2f]]
        %v1148 = vstv %s1147
        %v1149 = vmul.f32 %v1148, %v1137
        %v1150 = vmul.f32 %v1148, %v1138
        %v1151 = vmul.f32 %v1148, %v1139
        %1155 = vrot.lane.b32.xlu0 %v1149, 127
        %v1156 = vpop.permute.xlu0 %1155
        %1157 = vrot.lane.b32.xlu0 %v1150, 127
        %v1158 = vpop.permute.xlu0 %1157
        %1159 = vrot.lane.b32.xlu0 %v1151, 127
        %v1160 = vpop.permute.xlu0 %1159
        %v1164 = vadd.f32 %v1144, %v1156
        %v1165 = vadd.f32 %v1145, %v1158
        %v1166 = vadd.f32 %v1146, %v1160
        %s1167 = scalar_lea.vmem %s241, 48
        %1168 = vst.msk [vmem:[%s1167] sm:$0xff] %vm656, %v1164
        %1169 = vst.msk [vmem:[%s1167 + $0x8] sm:$0xff] %vm656, %v1165
        %1170 = vst.msk [vmem:[%s1167 + $0x10] sm:$0x1] %vm659, %v1166
        %s1171 = sld [smem:[#allocation7 + $0x3]]
        %v1172 = vstv %s1171
        %v1173 = vadd.f32 %v1172, 0.0
        %s1174 = sld [smem:[#allocation6 + $0x30]]
        %v1175 = vld [vmem:[#allocation2] sm:$0xff]
        %v1176 = vld [vmem:[#allocation2 + $0x8] sm:$0xff]
        %v1177 = vld [vmem:[#allocation2 + $0x10] sm:$0x1]
        %v1178 = vstv %s1174
        %v1179 = vmul.f32 %v1178, %v1175
        %v1180 = vmul.f32 %v1178, %v1176
        %v1181 = vmul.f32 %v1178, %v1177
        %v1182 = vadd.f32 %v1173, %v1179
        %v1183 = vadd.f32 %v1173, %v1180
        %v1184 = vadd.f32 %v1173, %v1181
        %s1185 = sld [smem:[#allocation6 + $0x31]]
        %v1186 = vstv %s1185
        %v1187 = vmul.f32 %v1186, %v1175
        %v1188 = vmul.f32 %v1186, %v1176
        %v1189 = vmul.f32 %v1186, %v1177
        %1193 = vrot.lane.b32.xlu0 %v1187, 127
        %v1194 = vpop.permute.xlu0 %1193
        %1195 = vrot.lane.b32.xlu0 %v1188, 127
        %v1196 = vpop.permute.xlu0 %1195
        %1197 = vrot.lane.b32.xlu0 %v1189, 127
        %v1198 = vpop.permute.xlu0 %1197
        %v1202 = vadd.f32 %v1182, %v1194
        %v1203 = vadd.f32 %v1183, %v1196
        %v1204 = vadd.f32 %v1184, %v1198
        %s1205 = sld [smem:[#allocation6 + $0x32]]
        %v1206 = vld [vmem:[#allocation2 + $0x1] sm:$0xff]
        %v1207 = vld [vmem:[#allocation2 + $0x9] sm:$0xff]
        %v1208 = vld [vmem:[#allocation2 + $0x11] sm:$0x1]
        %v1209 = vstv %s1205
        %v1210 = vmul.f32 %v1209, %v1206
        %v1211 = vmul.f32 %v1209, %v1207
        %v1212 = vmul.f32 %v1209, %v1208
        %v1213 = vadd.f32 %v1202, %v1210
        %v1214 = vadd.f32 %v1203, %v1211
        %v1215 = vadd.f32 %v1204, %v1212
        %s1216 = sld [smem:[#allocation6 + $0x33]]
        %v1217 = vstv %s1216
        %v1218 = vmul.f32 %v1217, %v1206
        %v1219 = vmul.f32 %v1217, %v1207
        %v1220 = vmul.f32 %v1217, %v1208
        %1224 = vrot.lane.b32.xlu0 %v1218, 127
        %v1225 = vpop.permute.xlu0 %1224
        %1226 = vrot.lane.b32.xlu0 %v1219, 127
        %v1227 = vpop.permute.xlu0 %1226
        %1228 = vrot.lane.b32.xlu0 %v1220, 127
        %v1229 = vpop.permute.xlu0 %1228
        %v1233 = vadd.f32 %v1213, %v1225
        %v1234 = vadd.f32 %v1214, %v1227
        %v1235 = vadd.f32 %v1215, %v1229
        %s1236 = sld [smem:[#allocation6 + $0x34]]
        %v1237 = vld [vmem:[%s468] sm:$0xff]
        %v1238 = vld [vmem:[%s468 + $0x8] sm:$0xff]
        %v1239 = vld [vmem:[%s468 + $0x10] sm:$0x1]
        %v1240 = vstv %s1236
        %v1241 = vmul.f32 %v1240, %v1237
        %v1242 = vmul.f32 %v1240, %v1238
        %v1243 = vmul.f32 %v1240, %v1239
        %v1244 = vadd.f32 %v1233, %v1241
        %v1245 = vadd.f32 %v1234, %v1242
        %v1246 = vadd.f32 %v1235, %v1243
        %s1247 = sld [smem:[#allocation6 + $0x35]]
        %v1248 = vstv %s1247
        %v1249 = vmul.f32 %v1248, %v1237
        %v1250 = vmul.f32 %v1248, %v1238
        %v1251 = vmul.f32 %v1248, %v1239
        %1255 = vrot.lane.b32.xlu0 %v1249, 127
        %v1256 = vpop.permute.xlu0 %1255
        %1257 = vrot.lane.b32.xlu0 %v1250, 127
        %v1258 = vpop.permute.xlu0 %1257
        %1259 = vrot.lane.b32.xlu0 %v1251, 127
        %v1260 = vpop.permute.xlu0 %1259
        %v1264 = vadd.f32 %v1244, %v1256
        %v1265 = vadd.f32 %v1245, %v1258
        %v1266 = vadd.f32 %v1246, %v1260
        %s1267 = sld [smem:[#allocation6 + $0x36]]
        %v1268 = vld [vmem:[%s468 + $0x1] sm:$0xff]
        %v1269 = vld [vmem:[%s468 + $0x9] sm:$0xff]
        %v1270 = vld [vmem:[%s468 + $0x11] sm:$0x1]
        %v1271 = vstv %s1267
        %v1272 = vmul.f32 %v1271, %v1268
        %v1273 = vmul.f32 %v1271, %v1269
        %v1274 = vmul.f32 %v1271, %v1270
        %v1275 = vadd.f32 %v1264, %v1272
        %v1276 = vadd.f32 %v1265, %v1273
        %v1277 = vadd.f32 %v1266, %v1274
        %s1278 = sld [smem:[#allocation6 + $0x37]]
        %v1279 = vstv %s1278
        %v1280 = vmul.f32 %v1279, %v1268
        %v1281 = vmul.f32 %v1279, %v1269
        %v1282 = vmul.f32 %v1279, %v1270
        %1286 = vrot.lane.b32.xlu0 %v1280, 127
        %v1287 = vpop.permute.xlu0 %1286
        %1288 = vrot.lane.b32.xlu0 %v1281, 127
        %v1289 = vpop.permute.xlu0 %1288
        %1290 = vrot.lane.b32.xlu0 %v1282, 127
        %v1291 = vpop.permute.xlu0 %1290
        %v1295 = vadd.f32 %v1275, %v1287
        %v1296 = vadd.f32 %v1276, %v1289
        %v1297 = vadd.f32 %v1277, %v1291
        %s1298 = sld [smem:[#allocation6 + $0x38]]
        %v1299 = vld [vmem:[%s531] sm:$0xff]
        %v1300 = vld [vmem:[%s531 + $0x8] sm:$0xff]
        %v1301 = vld [vmem:[%s531 + $0x10] sm:$0x1]
        %v1302 = vstv %s1298
        %v1303 = vmul.f32 %v1302, %v1299
        %v1304 = vmul.f32 %v1302, %v1300
        %v1305 = vmul.f32 %v1302, %v1301
        %v1306 = vadd.f32 %v1295, %v1303
        %v1307 = vadd.f32 %v1296, %v1304
        %v1308 = vadd.f32 %v1297, %v1305
        %s1309 = sld [smem:[#allocation6 + $0x39]]
        %v1310 = vstv %s1309
        %v1311 = vmul.f32 %v1310, %v1299
        %v1312 = vmul.f32 %v1310, %v1300
        %v1313 = vmul.f32 %v1310, %v1301
        %1317 = vrot.lane.b32.xlu0 %v1311, 127
        %v1318 = vpop.permute.xlu0 %1317
        %1319 = vrot.lane.b32.xlu0 %v1312, 127
        %v1320 = vpop.permute.xlu0 %1319
        %1321 = vrot.lane.b32.xlu0 %v1313, 127
        %v1322 = vpop.permute.xlu0 %1321
        %v1326 = vadd.f32 %v1306, %v1318
        %v1327 = vadd.f32 %v1307, %v1320
        %v1328 = vadd.f32 %v1308, %v1322
        %s1329 = sld [smem:[#allocation6 + $0x3a]]
        %v1330 = vld [vmem:[%s531 + $0x1] sm:$0xff]
        %v1331 = vld [vmem:[%s531 + $0x9] sm:$0xff]
        %v1332 = vld [vmem:[%s531 + $0x11] sm:$0x1]
        %v1333 = vstv %s1329
        %v1334 = vmul.f32 %v1333, %v1330
        %v1335 = vmul.f32 %v1333, %v1331
        %v1336 = vmul.f32 %v1333, %v1332
        %v1337 = vadd.f32 %v1326, %v1334
        %v1338 = vadd.f32 %v1327, %v1335
        %v1339 = vadd.f32 %v1328, %v1336
        %s1340 = sld [smem:[#allocation6 + $0x3b]]
        %v1341 = vstv %s1340
        %v1342 = vmul.f32 %v1341, %v1330
        %v1343 = vmul.f32 %v1341, %v1331
        %v1344 = vmul.f32 %v1341, %v1332
        %1348 = vrot.lane.b32.xlu0 %v1342, 127
        %v1349 = vpop.permute.xlu0 %1348
        %1350 = vrot.lane.b32.xlu0 %v1343, 127
        %v1351 = vpop.permute.xlu0 %1350
        %1352 = vrot.lane.b32.xlu0 %v1344, 127
        %v1353 = vpop.permute.xlu0 %1352
        %v1357 = vadd.f32 %v1337, %v1349
        %v1358 = vadd.f32 %v1338, %v1351
        %v1359 = vadd.f32 %v1339, %v1353
        %s1360 = sld [smem:[#allocation6 + $0x3c]]
        %v1361 = vld [vmem:[%s594] sm:$0xff]
        %v1362 = vld [vmem:[%s594 + $0x8] sm:$0xff]
        %v1363 = vld [vmem:[%s594 + $0x10] sm:$0x1]
        %v1364 = vstv %s1360
        %v1365 = vmul.f32 %v1364, %v1361
        %v1366 = vmul.f32 %v1364, %v1362
        %v1367 = vmul.f32 %v1364, %v1363
        %v1368 = vadd.f32 %v1357, %v1365
        %v1369 = vadd.f32 %v1358, %v1366
        %v1370 = vadd.f32 %v1359, %v1367
        %s1371 = sld [smem:[#allocation6 + $0x3d]]
        %v1372 = vstv %s1371
        %v1373 = vmul.f32 %v1372, %v1361
        %v1374 = vmul.f32 %v1372, %v1362
        %v1375 = vmul.f32 %v1372, %v1363
        %1379 = vrot.lane.b32.xlu0 %v1373, 127
        %v1380 = vpop.permute.xlu0 %1379
        %1381 = vrot.lane.b32.xlu0 %v1374, 127
        %v1382 = vpop.permute.xlu0 %1381
        %1383 = vrot.lane.b32.xlu0 %v1375, 127
        %v1384 = vpop.permute.xlu0 %1383
        %v1388 = vadd.f32 %v1368, %v1380
        %v1389 = vadd.f32 %v1369, %v1382
        %v1390 = vadd.f32 %v1370, %v1384
        %s1391 = sld [smem:[#allocation6 + $0x3e]]
        %v1392 = vld [vmem:[%s594 + $0x1] sm:$0xff]
        %v1393 = vld [vmem:[%s594 + $0x9] sm:$0xff]
        %v1394 = vld [vmem:[%s594 + $0x11] sm:$0x1]
        %v1395 = vstv %s1391
        %v1396 = vmul.f32 %v1395, %v1392
        %v1397 = vmul.f32 %v1395, %v1393
        %v1398 = vmul.f32 %v1395, %v1394
        %v1399 = vadd.f32 %v1388, %v1396
        %v1400 = vadd.f32 %v1389, %v1397
        %v1401 = vadd.f32 %v1390, %v1398
        %s1402 = sld [smem:[#allocation6 + $0x3f]]
        %v1403 = vstv %s1402
        %v1404 = vmul.f32 %v1403, %v1392
        %v1405 = vmul.f32 %v1403, %v1393
        %v1406 = vmul.f32 %v1403, %v1394
        %1410 = vrot.lane.b32.xlu0 %v1404, 127
        %v1411 = vpop.permute.xlu0 %1410
        %1412 = vrot.lane.b32.xlu0 %v1405, 127
        %v1413 = vpop.permute.xlu0 %1412
        %1414 = vrot.lane.b32.xlu0 %v1406, 127
        %v1415 = vpop.permute.xlu0 %1414
        %v1419 = vadd.f32 %v1399, %v1411
        %v1420 = vadd.f32 %v1400, %v1413
        %v1421 = vadd.f32 %v1401, %v1415
        %s1422 = scalar_lea.vmem %s241, 72
        %1423 = vst.msk [vmem:[%s1422] sm:$0xff] %vm656, %v1419
        %1424 = vst.msk [vmem:[%s1422 + $0x8] sm:$0xff] %vm656, %v1420
        %1425 = vst.msk [vmem:[%s1422 + $0x10] sm:$0x1] %vm659, %v1421
        %s1426 = sld [smem:[#allocation7 + $0x4]]
        %v1427 = vstv %s1426
        %v1428 = vadd.f32 %v1427, 0.0
        %s1429 = sld [smem:[#allocation6 + $0x40]]
        %v1430 = vld [vmem:[#allocation2] sm:$0xff]
        %v1431 = vld [vmem:[#allocation2 + $0x8] sm:$0xff]
        %v1432 = vld [vmem:[#allocation2 + $0x10] sm:$0x1]
        %v1433 = vstv %s1429
        %v1434 = vmul.f32 %v1433, %v1430
        %v1435 = vmul.f32 %v1433, %v1431
        %v1436 = vmul.f32 %v1433, %v1432
        %v1437 = vadd.f32 %v1428, %v1434
        %v1438 = vadd.f32 %v1428, %v1435
        %v1439 = vadd.f32 %v1428, %v1436
        %s1440 = sld [smem:[#allocation6 + $0x41]]
        %v1441 = vstv %s1440
        %v1442 = vmul.f32 %v1441, %v1430
        %v1443 = vmul.f32 %v1441, %v1431
        %v1444 = vmul.f32 %v1441, %v1432
        %1448 = vrot.lane.b32.xlu0 %v1442, 127
        %v1449 = vpop.permute.xlu0 %1448
        %1450 = vrot.lane.b32.xlu0 %v1443, 127
        %v1451 = vpop.permute.xlu0 %1450
        %1452 = vrot.lane.b32.xlu0 %v1444, 127
        %v1453 = vpop.permute.xlu0 %1452
        %v1457 = vadd.f32 %v1437, %v1449
        %v1458 = vadd.f32 %v1438, %v1451
        %v1459 = vadd.f32 %v1439, %v1453
        %s1460 = sld [smem:[#allocation6 + $0x42]]
        %v1461 = vld [vmem:[#allocation2 + $0x1] sm:$0xff]
        %v1462 = vld [vmem:[#allocation2 + $0x9] sm:$0xff]
        %v1463 = vld [vmem:[#allocation2 + $0x11] sm:$0x1]
        %v1464 = vstv %s1460
        %v1465 = vmul.f32 %v1464, %v1461
        %v1466 = vmul.f32 %v1464, %v1462
        %v1467 = vmul.f32 %v1464, %v1463
        %v1468 = vadd.f32 %v1457, %v1465
        %v1469 = vadd.f32 %v1458, %v1466
        %v1470 = vadd.f32 %v1459, %v1467
        %s1471 = sld [smem:[#allocation6 + $0x43]]
        %v1472 = vstv %s1471
        %v1473 = vmul.f32 %v1472, %v1461
        %v1474 = vmul.f32 %v1472, %v1462
        %v1475 = vmul.f32 %v1472, %v1463
        %1479 = vrot.lane.b32.xlu0 %v1473, 127
        %v1480 = vpop.permute.xlu0 %1479
        %1481 = vrot.lane.b32.xlu0 %v1474, 127
        %v1482 = vpop.permute.xlu0 %1481
        %1483 = vrot.lane.b32.xlu0 %v1475, 127
        %v1484 = vpop.permute.xlu0 %1483
        %v1488 = vadd.f32 %v1468, %v1480
        %v1489 = vadd.f32 %v1469, %v1482
        %v1490 = vadd.f32 %v1470, %v1484
        %s1491 = sld [smem:[#allocation6 + $0x44]]
        %v1492 = vld [vmem:[%s468] sm:$0xff]
        %v1493 = vld [vmem:[%s468 + $0x8] sm:$0xff]
        %v1494 = vld [vmem:[%s468 + $0x10] sm:$0x1]
        %v1495 = vstv %s1491
        %v1496 = vmul.f32 %v1495, %v1492
        %v1497 = vmul.f32 %v1495, %v1493
        %v1498 = vmul.f32 %v1495, %v1494
        %v1499 = vadd.f32 %v1488, %v1496
        %v1500 = vadd.f32 %v1489, %v1497
        %v1501 = vadd.f32 %v1490, %v1498
        %s1502 = sld [smem:[#allocation6 + $0x45]]
        %v1503 = vstv %s1502
        %v1504 = vmul.f32 %v1503, %v1492
        %v1505 = vmul.f32 %v1503, %v1493
        %v1506 = vmul.f32 %v1503, %v1494
        %1510 = vrot.lane.b32.xlu0 %v1504, 127
        %v1511 = vpop.permute.xlu0 %1510
        %1512 = vrot.lane.b32.xlu0 %v1505, 127
        %v1513 = vpop.permute.xlu0 %1512
        %1514 = vrot.lane.b32.xlu0 %v1506, 127
        %v1515 = vpop.permute.xlu0 %1514
        %v1519 = vadd.f32 %v1499, %v1511
        %v1520 = vadd.f32 %v1500, %v1513
        %v1521 = vadd.f32 %v1501, %v1515
        %s1522 = sld [smem:[#allocation6 + $0x46]]
        %v1523 = vld [vmem:[%s468 + $0x1] sm:$0xff]
        %v1524 = vld [vmem:[%s468 + $0x9] sm:$0xff]
        %v1525 = vld [vmem:[%s468 + $0x11] sm:$0x1]
        %v1526 = vstv %s1522
        %v1527 = vmul.f32 %v1526, %v1523
        %v1528 = vmul.f32 %v1526, %v1524
        %v1529 = vmul.f32 %v1526, %v1525
        %v1530 = vadd.f32 %v1519, %v1527
        %v1531 = vadd.f32 %v1520, %v1528
        %v1532 = vadd.f32 %v1521, %v1529
        %s1533 = sld [smem:[#allocation6 + $0x47]]
        %v1534 = vstv %s1533
        %v1535 = vmul.f32 %v1534, %v1523
        %v1536 = vmul.f32 %v1534, %v1524
        %v1537 = vmul.f32 %v1534, %v1525
        %1541 = vrot.lane.b32.xlu0 %v1535, 127
        %v1542 = vpop.permute.xlu0 %1541
        %1543 = vrot.lane.b32.xlu0 %v1536, 127
        %v1544 = vpop.permute.xlu0 %1543
        %1545 = vrot.lane.b32.xlu0 %v1537, 127
        %v1546 = vpop.permute.xlu0 %1545
        %v1550 = vadd.f32 %v1530, %v1542
        %v1551 = vadd.f32 %v1531, %v1544
        %v1552 = vadd.f32 %v1532, %v1546
        %s1553 = sld [smem:[#allocation6 + $0x48]]
        %v1554 = vld [vmem:[%s531] sm:$0xff]
        %v1555 = vld [vmem:[%s531 + $0x8] sm:$0xff]
        %v1556 = vld [vmem:[%s531 + $0x10] sm:$0x1]
        %v1557 = vstv %s1553
        %v1558 = vmul.f32 %v1557, %v1554
        %v1559 = vmul.f32 %v1557, %v1555
        %v1560 = vmul.f32 %v1557, %v1556
        %v1561 = vadd.f32 %v1550, %v1558
        %v1562 = vadd.f32 %v1551, %v1559
        %v1563 = vadd.f32 %v1552, %v1560
        %s1564 = sld [smem:[#allocation6 + $0x49]]
        %v1565 = vstv %s1564
        %v1566 = vmul.f32 %v1565, %v1554
        %v1567 = vmul.f32 %v1565, %v1555
        %v1568 = vmul.f32 %v1565, %v1556
        %1572 = vrot.lane.b32.xlu0 %v1566, 127
        %v1573 = vpop.permute.xlu0 %1572
        %1574 = vrot.lane.b32.xlu0 %v1567, 127
        %v1575 = vpop.permute.xlu0 %1574
        %1576 = vrot.lane.b32.xlu0 %v1568, 127
        %v1577 = vpop.permute.xlu0 %1576
        %v1581 = vadd.f32 %v1561, %v1573
        %v1582 = vadd.f32 %v1562, %v1575
        %v1583 = vadd.f32 %v1563, %v1577
        %s1584 = sld [smem:[#allocation6 + $0x4a]]
        %v1585 = vld [vmem:[%s531 + $0x1] sm:$0xff]
        %v1586 = vld [vmem:[%s531 + $0x9] sm:$0xff]
        %v1587 = vld [vmem:[%s531 + $0x11] sm:$0x1]
        %v1588 = vstv %s1584
        %v1589 = vmul.f32 %v1588, %v1585
        %v1590 = vmul.f32 %v1588, %v1586
        %v1591 = vmul.f32 %v1588, %v1587
        %v1592 = vadd.f32 %v1581, %v1589
        %v1593 = vadd.f32 %v1582, %v1590
        %v1594 = vadd.f32 %v1583, %v1591
        %s1595 = sld [smem:[#allocation6 + $0x4b]]
        %v1596 = vstv %s1595
        %v1597 = vmul.f32 %v1596, %v1585
        %v1598 = vmul.f32 %v1596, %v1586
        %v1599 = vmul.f32 %v1596, %v1587
        %1603 = vrot.lane.b32.xlu0 %v1597, 127
        %v1604 = vpop.permute.xlu0 %1603
        %1605 = vrot.lane.b32.xlu0 %v1598, 127
        %v1606 = vpop.permute.xlu0 %1605
        %1607 = vrot.lane.b32.xlu0 %v1599, 127
        %v1608 = vpop.permute.xlu0 %1607
        %v1612 = vadd.f32 %v1592, %v1604
        %v1613 = vadd.f32 %v1593, %v1606
        %v1614 = vadd.f32 %v1594, %v1608
        %s1615 = sld [smem:[#allocation6 + $0x4c]]
        %v1616 = vld [vmem:[%s594] sm:$0xff]
        %v1617 = vld [vmem:[%s594 + $0x8] sm:$0xff]
        %v1618 = vld [vmem:[%s594 + $0x10] sm:$0x1]
        %v1619 = vstv %s1615
        %v1620 = vmul.f32 %v1619, %v1616
        %v1621 = vmul.f32 %v1619, %v1617
        %v1622 = vmul.f32 %v1619, %v1618
        %v1623 = vadd.f32 %v1612, %v1620
        %v1624 = vadd.f32 %v1613, %v1621
        %v1625 = vadd.f32 %v1614, %v1622
        %s1626 = sld [smem:[#allocation6 + $0x4d]]
        %v1627 = vstv %s1626
        %v1628 = vmul.f32 %v1627, %v1616
        %v1629 = vmul.f32 %v1627, %v1617
        %v1630 = vmul.f32 %v1627, %v1618
        %1634 = vrot.lane.b32.xlu0 %v1628, 127
        %v1635 = vpop.permute.xlu0 %1634
        %1636 = vrot.lane.b32.xlu0 %v1629, 127
        %v1637 = vpop.permute.xlu0 %1636
        %1638 = vrot.lane.b32.xlu0 %v1630, 127
        %v1639 = vpop.permute.xlu0 %1638
        %v1643 = vadd.f32 %v1623, %v1635
        %v1644 = vadd.f32 %v1624, %v1637
        %v1645 = vadd.f32 %v1625, %v1639
        %s1646 = sld [smem:[#allocation6 + $0x4e]]
        %v1647 = vld [vmem:[%s594 + $0x1] sm:$0xff]
        %v1648 = vld [vmem:[%s594 + $0x9] sm:$0xff]
        %v1649 = vld [vmem:[%s594 + $0x11] sm:$0x1]
        %v1650 = vstv %s1646
        %v1651 = vmul.f32 %v1650, %v1647
        %v1652 = vmul.f32 %v1650, %v1648
        %v1653 = vmul.f32 %v1650, %v1649
        %v1654 = vadd.f32 %v1643, %v1651
        %v1655 = vadd.f32 %v1644, %v1652
        %v1656 = vadd.f32 %v1645, %v1653
        %s1657 = sld [smem:[#allocation6 + $0x4f]]
        %v1658 = vstv %s1657
        %v1659 = vmul.f32 %v1658, %v1647
        %v1660 = vmul.f32 %v1658, %v1648
        %v1661 = vmul.f32 %v1658, %v1649
        %1665 = vrot.lane.b32.xlu0 %v1659, 127
        %v1666 = vpop.permute.xlu0 %1665
        %1667 = vrot.lane.b32.xlu0 %v1660, 127
        %v1668 = vpop.permute.xlu0 %1667
        %1669 = vrot.lane.b32.xlu0 %v1661, 127
        %v1670 = vpop.permute.xlu0 %1669
        %v1674 = vadd.f32 %v1654, %v1666
        %v1675 = vadd.f32 %v1655, %v1668
        %v1676 = vadd.f32 %v1656, %v1670
        %s1677 = scalar_lea.vmem %s241, 96
        %1678 = vst.msk [vmem:[%s1677] sm:$0xff] %vm656, %v1674
        %1679 = vst.msk [vmem:[%s1677 + $0x8] sm:$0xff] %vm656, %v1675
        %1680 = vst.msk [vmem:[%s1677 + $0x10] sm:$0x1] %vm659, %v1676
        %s1681 = sld [smem:[#allocation7 + $0x5]]
        %v1682 = vstv %s1681
        %v1683 = vadd.f32 %v1682, 0.0
        %s1684 = sld [smem:[#allocation6 + $0x50]]
        %v1685 = vld [vmem:[#allocation2] sm:$0xff]
        %v1686 = vld [vmem:[#allocation2 + $0x8] sm:$0xff]
        %v1687 = vld [vmem:[#allocation2 + $0x10] sm:$0x1]
        %v1688 = vstv %s1684
        %v1689 = vmul.f32 %v1688, %v1685
        %v1690 = vmul.f32 %v1688, %v1686
        %v1691 = vmul.f32 %v1688, %v1687
        %v1692 = vadd.f32 %v1683, %v1689
        %v1693 = vadd.f32 %v1683, %v1690
        %v1694 = vadd.f32 %v1683, %v1691
        %s1695 = sld [smem:[#allocation6 + $0x51]]
        %v1696 = vstv %s1695
        %v1697 = vmul.f32 %v1696, %v1685
        %v1698 = vmul.f32 %v1696, %v1686
        %v1699 = vmul.f32 %v1696, %v1687
        %1703 = vrot.lane.b32.xlu0 %v1697, 127
        %v1704 = vpop.permute.xlu0 %1703
        %1705 = vrot.lane.b32.xlu0 %v1698, 127
        %v1706 = vpop.permute.xlu0 %1705
        %1707 = vrot.lane.b32.xlu0 %v1699, 127
        %v1708 = vpop.permute.xlu0 %1707
        %v1712 = vadd.f32 %v1692, %v1704
        %v1713 = vadd.f32 %v1693, %v1706
        %v1714 = vadd.f32 %v1694, %v1708
        %s1715 = sld [smem:[#allocation6 + $0x52]]
        %v1716 = vld [vmem:[#allocation2 + $0x1] sm:$0xff]
        %v1717 = vld [vmem:[#allocation2 + $0x9] sm:$0xff]
        %v1718 = vld [vmem:[#allocation2 + $0x11] sm:$0x1]
        %v1719 = vstv %s1715
        %v1720 = vmul.f32 %v1719, %v1716
        %v1721 = vmul.f32 %v1719, %v1717
        %v1722 = vmul.f32 %v1719, %v1718
        %v1723 = vadd.f32 %v1712, %v1720
        %v1724 = vadd.f32 %v1713, %v1721
        %v1725 = vadd.f32 %v1714, %v1722
        %s1726 = sld [smem:[#allocation6 + $0x53]]
        %v1727 = vstv %s1726
        %v1728 = vmul.f32 %v1727, %v1716
        %v1729 = vmul.f32 %v1727, %v1717
        %v1730 = vmul.f32 %v1727, %v1718
        %1734 = vrot.lane.b32.xlu0 %v1728, 127
        %v1735 = vpop.permute.xlu0 %1734
        %1736 = vrot.lane.b32.xlu0 %v1729, 127
        %v1737 = vpop.permute.xlu0 %1736
        %1738 = vrot.lane.b32.xlu0 %v1730, 127
        %v1739 = vpop.permute.xlu0 %1738
        %v1743 = vadd.f32 %v1723, %v1735
        %v1744 = vadd.f32 %v1724, %v1737
        %v1745 = vadd.f32 %v1725, %v1739
        %s1746 = sld [smem:[#allocation6 + $0x54]]
        %v1747 = vld [vmem:[%s468] sm:$0xff]
        %v1748 = vld [vmem:[%s468 + $0x8] sm:$0xff]
        %v1749 = vld [vmem:[%s468 + $0x10] sm:$0x1]
        %v1750 = vstv %s1746
        %v1751 = vmul.f32 %v1750, %v1747
        %v1752 = vmul.f32 %v1750, %v1748
        %v1753 = vmul.f32 %v1750, %v1749
        %v1754 = vadd.f32 %v1743, %v1751
        %v1755 = vadd.f32 %v1744, %v1752
        %v1756 = vadd.f32 %v1745, %v1753
        %s1757 = sld [smem:[#allocation6 + $0x55]]
        %v1758 = vstv %s1757
        %v1759 = vmul.f32 %v1758, %v1747
        %v1760 = vmul.f32 %v1758, %v1748
        %v1761 = vmul.f32 %v1758, %v1749
        %1765 = vrot.lane.b32.xlu0 %v1759, 127
        %v1766 = vpop.permute.xlu0 %1765
        %1767 = vrot.lane.b32.xlu0 %v1760, 127
        %v1768 = vpop.permute.xlu0 %1767
        %1769 = vrot.lane.b32.xlu0 %v1761, 127
        %v1770 = vpop.permute.xlu0 %1769
        %v1774 = vadd.f32 %v1754, %v1766
        %v1775 = vadd.f32 %v1755, %v1768
        %v1776 = vadd.f32 %v1756, %v1770
        %s1777 = sld [smem:[#allocation6 + $0x56]]
        %v1778 = vld [vmem:[%s468 + $0x1] sm:$0xff]
        %v1779 = vld [vmem:[%s468 + $0x9] sm:$0xff]
        %v1780 = vld [vmem:[%s468 + $0x11] sm:$0x1]
        %v1781 = vstv %s1777
        %v1782 = vmul.f32 %v1781, %v1778
        %v1783 = vmul.f32 %v1781, %v1779
        %v1784 = vmul.f32 %v1781, %v1780
        %v1785 = vadd.f32 %v1774, %v1782
        %v1786 = vadd.f32 %v1775, %v1783
        %v1787 = vadd.f32 %v1776, %v1784
        %s1788 = sld [smem:[#allocation6 + $0x57]]
        %v1789 = vstv %s1788
        %v1790 = vmul.f32 %v1789, %v1778
        %v1791 = vmul.f32 %v1789, %v1779
        %v1792 = vmul.f32 %v1789, %v1780
        %1796 = vrot.lane.b32.xlu0 %v1790, 127
        %v1797 = vpop.permute.xlu0 %1796
        %1798 = vrot.lane.b32.xlu0 %v1791, 127
        %v1799 = vpop.permute.xlu0 %1798
        %1800 = vrot.lane.b32.xlu0 %v1792, 127
        %v1801 = vpop.permute.xlu0 %1800
        %v1805 = vadd.f32 %v1785, %v1797
        %v1806 = vadd.f32 %v1786, %v1799
        %v1807 = vadd.f32 %v1787, %v1801
        %s1808 = sld [smem:[#allocation6 + $0x58]]
        %v1809 = vld [vmem:[%s531] sm:$0xff]
        %v1810 = vld [vmem:[%s531 + $0x8] sm:$0xff]
        %v1811 = vld [vmem:[%s531 + $0x10] sm:$0x1]
        %v1812 = vstv %s1808
        %v1813 = vmul.f32 %v1812, %v1809
        %v1814 = vmul.f32 %v1812, %v1810
        %v1815 = vmul.f32 %v1812, %v1811
        %v1816 = vadd.f32 %v1805, %v1813
        %v1817 = vadd.f32 %v1806, %v1814
        %v1818 = vadd.f32 %v1807, %v1815
        %s1819 = sld [smem:[#allocation6 + $0x59]]
        %v1820 = vstv %s1819
        %v1821 = vmul.f32 %v1820, %v1809
        %v1822 = vmul.f32 %v1820, %v1810
        %v1823 = vmul.f32 %v1820, %v1811
        %1827 = vrot.lane.b32.xlu0 %v1821, 127
        %v1828 = vpop.permute.xlu0 %1827
        %1829 = vrot.lane.b32.xlu0 %v1822, 127
        %v1830 = vpop.permute.xlu0 %1829
        %1831 = vrot.lane.b32.xlu0 %v1823, 127
        %v1832 = vpop.permute.xlu0 %1831
        %v1836 = vadd.f32 %v1816, %v1828
        %v1837 = vadd.f32 %v1817, %v1830
        %v1838 = vadd.f32 %v1818, %v1832
        %s1839 = sld [smem:[#allocation6 + $0x5a]]
        %v1840 = vld [vmem:[%s531 + $0x1] sm:$0xff]
        %v1841 = vld [vmem:[%s531 + $0x9] sm:$0xff]
        %v1842 = vld [vmem:[%s531 + $0x11] sm:$0x1]
        %v1843 = vstv %s1839
        %v1844 = vmul.f32 %v1843, %v1840
        %v1845 = vmul.f32 %v1843, %v1841
        %v1846 = vmul.f32 %v1843, %v1842
        %v1847 = vadd.f32 %v1836, %v1844
        %v1848 = vadd.f32 %v1837, %v1845
        %v1849 = vadd.f32 %v1838, %v1846
        %s1850 = sld [smem:[#allocation6 + $0x5b]]
        %v1851 = vstv %s1850
        %v1852 = vmul.f32 %v1851, %v1840
        %v1853 = vmul.f32 %v1851, %v1841
        %v1854 = vmul.f32 %v1851, %v1842
        %1858 = vrot.lane.b32.xlu0 %v1852, 127
        %v1859 = vpop.permute.xlu0 %1858
        %1860 = vrot.lane.b32.xlu0 %v1853, 127
        %v1861 = vpop.permute.xlu0 %1860
        %1862 = vrot.lane.b32.xlu0 %v1854, 127
        %v1863 = vpop.permute.xlu0 %1862
        %v1867 = vadd.f32 %v1847, %v1859
        %v1868 = vadd.f32 %v1848, %v1861
        %v1869 = vadd.f32 %v1849, %v1863
        %s1870 = sld [smem:[#allocation6 + $0x5c]]
        %v1871 = vld [vmem:[%s594] sm:$0xff]
        %v1872 = vld [vmem:[%s594 + $0x8] sm:$0xff]
        %v1873 = vld [vmem:[%s594 + $0x10] sm:$0x1]
        %v1874 = vstv %s1870
        %v1875 = vmul.f32 %v1874, %v1871
        %v1876 = vmul.f32 %v1874, %v1872
        %v1877 = vmul.f32 %v1874, %v1873
        %v1878 = vadd.f32 %v1867, %v1875
        %v1879 = vadd.f32 %v1868, %v1876
        %v1880 = vadd.f32 %v1869, %v1877
        %s1881 = sld [smem:[#allocation6 + $0x5d]]
        %v1882 = vstv %s1881
        %v1883 = vmul.f32 %v1882, %v1871
        %v1884 = vmul.f32 %v1882, %v1872
        %v1885 = vmul.f32 %v1882, %v1873
        %1889 = vrot.lane.b32.xlu0 %v1883, 127
        %v1890 = vpop.permute.xlu0 %1889
        %1891 = vrot.lane.b32.xlu0 %v1884, 127
        %v1892 = vpop.permute.xlu0 %1891
        %1893 = vrot.lane.b32.xlu0 %v1885, 127
        %v1894 = vpop.permute.xlu0 %1893
        %v1898 = vadd.f32 %v1878, %v1890
        %v1899 = vadd.f32 %v1879, %v1892
        %v1900 = vadd.f32 %v1880, %v1894
        %s1901 = sld [smem:[#allocation6 + $0x5e]]
        %v1902 = vld [vmem:[%s594 + $0x1] sm:$0xff]
        %v1903 = vld [vmem:[%s594 + $0x9] sm:$0xff]
        %v1904 = vld [vmem:[%s594 + $0x11] sm:$0x1]
        %v1905 = vstv %s1901
        %v1906 = vmul.f32 %v1905, %v1902
        %v1907 = vmul.f32 %v1905, %v1903
        %v1908 = vmul.f32 %v1905, %v1904
        %v1909 = vadd.f32 %v1898, %v1906
        %v1910 = vadd.f32 %v1899, %v1907
        %v1911 = vadd.f32 %v1900, %v1908
        %s1912 = sld [smem:[#allocation6 + $0x5f]]
        %v1913 = vstv %s1912
        %v1914 = vmul.f32 %v1913, %v1902
        %v1915 = vmul.f32 %v1913, %v1903
        %v1916 = vmul.f32 %v1913, %v1904
        %1920 = vrot.lane.b32.xlu0 %v1914, 127
        %v1921 = vpop.permute.xlu0 %1920
        %1922 = vrot.lane.b32.xlu0 %v1915, 127
        %v1923 = vpop.permute.xlu0 %1922
        %1924 = vrot.lane.b32.xlu0 %v1916, 127
        %v1925 = vpop.permute.xlu0 %1924
        %v1929 = vadd.f32 %v1909, %v1921
        %v1930 = vadd.f32 %v1910, %v1923
        %v1931 = vadd.f32 %v1911, %v1925
        %s1932 = scalar_lea.vmem %s241, 120
        %1933 = vst.msk [vmem:[%s1932] sm:$0xff] %vm656, %v1929
        %1934 = vst.msk [vmem:[%s1932 + $0x8] sm:$0xff] %vm656, %v1930
        %1935 = vst.msk [vmem:[%s1932 + $0x10] sm:$0x1] %vm659, %v1931
        %s1936 = sld [smem:[#allocation7 + $0x6]]
        %v1937 = vstv %s1936
        %v1938 = vadd.f32 %v1937, 0.0
        %s1939 = sld [smem:[#allocation6 + $0x60]]
        %v1940 = vld [vmem:[#allocation2] sm:$0xff]
        %v1941 = vld [vmem:[#allocation2 + $0x8] sm:$0xff]
        %v1942 = vld [vmem:[#allocation2 + $0x10] sm:$0x1]
        %v1943 = vstv %s1939
        %v1944 = vmul.f32 %v1943, %v1940
        %v1945 = vmul.f32 %v1943, %v1941
        %v1946 = vmul.f32 %v1943, %v1942
        %v1947 = vadd.f32 %v1938, %v1944
        %v1948 = vadd.f32 %v1938, %v1945
        %v1949 = vadd.f32 %v1938, %v1946
        %s1950 = sld [smem:[#allocation6 + $0x61]]
        %v1951 = vstv %s1950
        %v1952 = vmul.f32 %v1951, %v1940
        %v1953 = vmul.f32 %v1951, %v1941
        %v1954 = vmul.f32 %v1951, %v1942
        %1958 = vrot.lane.b32.xlu0 %v1952, 127
        %v1959 = vpop.permute.xlu0 %1958
        %1960 = vrot.lane.b32.xlu0 %v1953, 127
        %v1961 = vpop.permute.xlu0 %1960
        %1962 = vrot.lane.b32.xlu0 %v1954, 127
        %v1963 = vpop.permute.xlu0 %1962
        %v1967 = vadd.f32 %v1947, %v1959
        %v1968 = vadd.f32 %v1948, %v1961
        %v1969 = vadd.f32 %v1949, %v1963
        %s1970 = sld [smem:[#allocation6 + $0x62]]
        %v1971 = vld [vmem:[#allocation2 + $0x1] sm:$0xff]
        %v1972 = vld [vmem:[#allocation2 + $0x9] sm:$0xff]
        %v1973 = vld [vmem:[#allocation2 + $0x11] sm:$0x1]
        %v1974 = vstv %s1970
        %v1975 = vmul.f32 %v1974, %v1971
        %v1976 = vmul.f32 %v1974, %v1972
        %v1977 = vmul.f32 %v1974, %v1973
        %v1978 = vadd.f32 %v1967, %v1975
        %v1979 = vadd.f32 %v1968, %v1976
        %v1980 = vadd.f32 %v1969, %v1977
        %s1981 = sld [smem:[#allocation6 + $0x63]]
        %v1982 = vstv %s1981
        %v1983 = vmul.f32 %v1982, %v1971
        %v1984 = vmul.f32 %v1982, %v1972
        %v1985 = vmul.f32 %v1982, %v1973
        %1989 = vrot.lane.b32.xlu0 %v1983, 127
        %v1990 = vpop.permute.xlu0 %1989
        %1991 = vrot.lane.b32.xlu0 %v1984, 127
        %v1992 = vpop.permute.xlu0 %1991
        %1993 = vrot.lane.b32.xlu0 %v1985, 127
        %v1994 = vpop.permute.xlu0 %1993
        %v1998 = vadd.f32 %v1978, %v1990
        %v1999 = vadd.f32 %v1979, %v1992
        %v2000 = vadd.f32 %v1980, %v1994
        %s2001 = sld [smem:[#allocation6 + $0x64]]
        %v2002 = vld [vmem:[%s468] sm:$0xff]
        %v2003 = vld [vmem:[%s468 + $0x8] sm:$0xff]
        %v2004 = vld [vmem:[%s468 + $0x10] sm:$0x1]
        %v2005 = vstv %s2001
        %v2006 = vmul.f32 %v2005, %v2002
        %v2007 = vmul.f32 %v2005, %v2003
        %v2008 = vmul.f32 %v2005, %v2004
        %v2009 = vadd.f32 %v1998, %v2006
        %v2010 = vadd.f32 %v1999, %v2007
        %v2011 = vadd.f32 %v2000, %v2008
        %s2012 = sld [smem:[#allocation6 + $0x65]]
        %v2013 = vstv %s2012
        %v2014 = vmul.f32 %v2013, %v2002
        %v2015 = vmul.f32 %v2013, %v2003
        %v2016 = vmul.f32 %v2013, %v2004
        %2020 = vrot.lane.b32.xlu0 %v2014, 127
        %v2021 = vpop.permute.xlu0 %2020
        %2022 = vrot.lane.b32.xlu0 %v2015, 127
        %v2023 = vpop.permute.xlu0 %2022
        %2024 = vrot.lane.b32.xlu0 %v2016, 127
        %v2025 = vpop.permute.xlu0 %2024
        %v2029 = vadd.f32 %v2009, %v2021
        %v2030 = vadd.f32 %v2010, %v2023
        %v2031 = vadd.f32 %v2011, %v2025
        %s2032 = sld [smem:[#allocation6 + $0x66]]
        %v2033 = vld [vmem:[%s468 + $0x1] sm:$0xff]
        %v2034 = vld [vmem:[%s468 + $0x9] sm:$0xff]
        %v2035 = vld [vmem:[%s468 + $0x11] sm:$0x1]
        %v2036 = vstv %s2032
        %v2037 = vmul.f32 %v2036, %v2033
        %v2038 = vmul.f32 %v2036, %v2034
        %v2039 = vmul.f32 %v2036, %v2035
        %v2040 = vadd.f32 %v2029, %v2037
        %v2041 = vadd.f32 %v2030, %v2038
        %v2042 = vadd.f32 %v2031, %v2039
        %s2043 = sld [smem:[#allocation6 + $0x67]]
        %v2044 = vstv %s2043
        %v2045 = vmul.f32 %v2044, %v2033
        %v2046 = vmul.f32 %v2044, %v2034
        %v2047 = vmul.f32 %v2044, %v2035
        %2051 = vrot.lane.b32.xlu0 %v2045, 127
        %v2052 = vpop.permute.xlu0 %2051
        %2053 = vrot.lane.b32.xlu0 %v2046, 127
        %v2054 = vpop.permute.xlu0 %2053
        %2055 = vrot.lane.b32.xlu0 %v2047, 127
        %v2056 = vpop.permute.xlu0 %2055
        %v2060 = vadd.f32 %v2040, %v2052
        %v2061 = vadd.f32 %v2041, %v2054
        %v2062 = vadd.f32 %v2042, %v2056
        %s2063 = sld [smem:[#allocation6 + $0x68]]
        %v2064 = vld [vmem:[%s531] sm:$0xff]
        %v2065 = vld [vmem:[%s531 + $0x8] sm:$0xff]
        %v2066 = vld [vmem:[%s531 + $0x10] sm:$0x1]
        %v2067 = vstv %s2063
        %v2068 = vmul.f32 %v2067, %v2064
        %v2069 = vmul.f32 %v2067, %v2065
        %v2070 = vmul.f32 %v2067, %v2066
        %v2071 = vadd.f32 %v2060, %v2068
        %v2072 = vadd.f32 %v2061, %v2069
        %v2073 = vadd.f32 %v2062, %v2070
        %s2074 = sld [smem:[#allocation6 + $0x69]]
        %v2075 = vstv %s2074
        %v2076 = vmul.f32 %v2075, %v2064
        %v2077 = vmul.f32 %v2075, %v2065
        %v2078 = vmul.f32 %v2075, %v2066
        %2082 = vrot.lane.b32.xlu0 %v2076, 127
        %v2083 = vpop.permute.xlu0 %2082
        %2084 = vrot.lane.b32.xlu0 %v2077, 127
        %v2085 = vpop.permute.xlu0 %2084
        %2086 = vrot.lane.b32.xlu0 %v2078, 127
        %v2087 = vpop.permute.xlu0 %2086
        %v2091 = vadd.f32 %v2071, %v2083
        %v2092 = vadd.f32 %v2072, %v2085
        %v2093 = vadd.f32 %v2073, %v2087
        %s2094 = sld [smem:[#allocation6 + $0x6a]]
        %v2095 = vld [vmem:[%s531 + $0x1] sm:$0xff]
        %v2096 = vld [vmem:[%s531 + $0x9] sm:$0xff]
        %v2097 = vld [vmem:[%s531 + $0x11] sm:$0x1]
        %v2098 = vstv %s2094
        %v2099 = vmul.f32 %v2098, %v2095
        %v2100 = vmul.f32 %v2098, %v2096
        %v2101 = vmul.f32 %v2098, %v2097
        %v2102 = vadd.f32 %v2091, %v2099
        %v2103 = vadd.f32 %v2092, %v2100
        %v2104 = vadd.f32 %v2093, %v2101
        %s2105 = sld [smem:[#allocation6 + $0x6b]]
        %v2106 = vstv %s2105
        %v2107 = vmul.f32 %v2106, %v2095
        %v2108 = vmul.f32 %v2106, %v2096
        %v2109 = vmul.f32 %v2106, %v2097
        %2113 = vrot.lane.b32.xlu0 %v2107, 127
        %v2114 = vpop.permute.xlu0 %2113
        %2115 = vrot.lane.b32.xlu0 %v2108, 127
        %v2116 = vpop.permute.xlu0 %2115
        %2117 = vrot.lane.b32.xlu0 %v2109, 127
        %v2118 = vpop.permute.xlu0 %2117
        %v2122 = vadd.f32 %v2102, %v2114
        %v2123 = vadd.f32 %v2103, %v2116
        %v2124 = vadd.f32 %v2104, %v2118
        %s2125 = sld [smem:[#allocation6 + $0x6c]]
        %v2126 = vld [vmem:[%s594] sm:$0xff]
        %v2127 = vld [vmem:[%s594 + $0x8] sm:$0xff]
        %v2128 = vld [vmem:[%s594 + $0x10] sm:$0x1]
        %v2129 = vstv %s2125
        %v2130 = vmul.f32 %v2129, %v2126
        %v2131 = vmul.f32 %v2129, %v2127
        %v2132 = vmul.f32 %v2129, %v2128
        %v2133 = vadd.f32 %v2122, %v2130
        %v2134 = vadd.f32 %v2123, %v2131
        %v2135 = vadd.f32 %v2124, %v2132
        %s2136 = sld [smem:[#allocation6 + $0x6d]]
        %v2137 = vstv %s2136
        %v2138 = vmul.f32 %v2137, %v2126
        %v2139 = vmul.f32 %v2137, %v2127
        %v2140 = vmul.f32 %v2137, %v2128
        %2144 = vrot.lane.b32.xlu0 %v2138, 127
        %v2145 = vpop.permute.xlu0 %2144
        %2146 = vrot.lane.b32.xlu0 %v2139, 127
        %v2147 = vpop.permute.xlu0 %2146
        %2148 = vrot.lane.b32.xlu0 %v2140, 127
        %v2149 = vpop.permute.xlu0 %2148
        %v2153 = vadd.f32 %v2133, %v2145
        %v2154 = vadd.f32 %v2134, %v2147
        %v2155 = vadd.f32 %v2135, %v2149
        %s2156 = sld [smem:[#allocation6 + $0x6e]]
        %v2157 = vld [vmem:[%s594 + $0x1] sm:$0xff]
        %v2158 = vld [vmem:[%s594 + $0x9] sm:$0xff]
        %v2159 = vld [vmem:[%s594 + $0x11] sm:$0x1]
        %v2160 = vstv %s2156
        %v2161 = vmul.f32 %v2160, %v2157
        %v2162 = vmul.f32 %v2160, %v2158
        %v2163 = vmul.f32 %v2160, %v2159
        %v2164 = vadd.f32 %v2153, %v2161
        %v2165 = vadd.f32 %v2154, %v2162
        %v2166 = vadd.f32 %v2155, %v2163
        %s2167 = sld [smem:[#allocation6 + $0x6f]]
        %v2168 = vstv %s2167
        %v2169 = vmul.f32 %v2168, %v2157
        %v2170 = vmul.f32 %v2168, %v2158
        %v2171 = vmul.f32 %v2168, %v2159
        %2175 = vrot.lane.b32.xlu0 %v2169, 127
        %v2176 = vpop.permute.xlu0 %2175
        %2177 = vrot.lane.b32.xlu0 %v2170, 127
        %v2178 = vpop.permute.xlu0 %2177
        %2179 = vrot.lane.b32.xlu0 %v2171, 127
        %v2180 = vpop.permute.xlu0 %2179
        %v2184 = vadd.f32 %v2164, %v2176
        %v2185 = vadd.f32 %v2165, %v2178
        %v2186 = vadd.f32 %v2166, %v2180
        %s2187 = scalar_lea.vmem %s241, 144
        %2188 = vst.msk [vmem:[%s2187] sm:$0xff] %vm656, %v2184
        %2189 = vst.msk [vmem:[%s2187 + $0x8] sm:$0xff] %vm656, %v2185
        %2190 = vst.msk [vmem:[%s2187 + $0x10] sm:$0x1] %vm659, %v2186
        %s2191 = sld [smem:[#allocation7 + $0x7]]
        %v2192 = vstv %s2191
        %v2193 = vadd.f32 %v2192, 0.0
        %s2194 = sld [smem:[#allocation6 + $0x70]]
        %v2195 = vld [vmem:[#allocation2] sm:$0xff]
        %v2196 = vld [vmem:[#allocation2 + $0x8] sm:$0xff]
        %v2197 = vld [vmem:[#allocation2 + $0x10] sm:$0x1]
        %v2198 = vstv %s2194
        %v2199 = vmul.f32 %v2198, %v2195
        %v2200 = vmul.f32 %v2198, %v2196
        %v2201 = vmul.f32 %v2198, %v2197
        %v2202 = vadd.f32 %v2193, %v2199
        %v2203 = vadd.f32 %v2193, %v2200
        %v2204 = vadd.f32 %v2193, %v2201
        %s2205 = sld [smem:[#allocation6 + $0x71]]
        %v2206 = vstv %s2205
        %v2207 = vmul.f32 %v2206, %v2195
        %v2208 = vmul.f32 %v2206, %v2196
        %v2209 = vmul.f32 %v2206, %v2197
        %2213 = vrot.lane.b32.xlu0 %v2207, 127
        %v2214 = vpop.permute.xlu0 %2213
        %2215 = vrot.lane.b32.xlu0 %v2208, 127
        %v2216 = vpop.permute.xlu0 %2215
        %2217 = vrot.lane.b32.xlu0 %v2209, 127
        %v2218 = vpop.permute.xlu0 %2217
        %v2222 = vadd.f32 %v2202, %v2214
        %v2223 = vadd.f32 %v2203, %v2216
        %v2224 = vadd.f32 %v2204, %v2218
        %s2225 = sld [smem:[#allocation6 + $0x72]]
        %v2226 = vld [vmem:[#allocation2 + $0x1] sm:$0xff]
        %v2227 = vld [vmem:[#allocation2 + $0x9] sm:$0xff]
        %v2228 = vld [vmem:[#allocation2 + $0x11] sm:$0x1]
        %v2229 = vstv %s2225
        %v2230 = vmul.f32 %v2229, %v2226
        %v2231 = vmul.f32 %v2229, %v2227
        %v2232 = vmul.f32 %v2229, %v2228
        %v2233 = vadd.f32 %v2222, %v2230
        %v2234 = vadd.f32 %v2223, %v2231
        %v2235 = vadd.f32 %v2224, %v2232
        %s2236 = sld [smem:[#allocation6 + $0x73]]
        %v2237 = vstv %s2236
        %v2238 = vmul.f32 %v2237, %v2226
        %v2239 = vmul.f32 %v2237, %v2227
        %v2240 = vmul.f32 %v2237, %v2228
        %2244 = vrot.lane.b32.xlu0 %v2238, 127
        %v2245 = vpop.permute.xlu0 %2244
        %2246 = vrot.lane.b32.xlu0 %v2239, 127
        %v2247 = vpop.permute.xlu0 %2246
        %2248 = vrot.lane.b32.xlu0 %v2240, 127
        %v2249 = vpop.permute.xlu0 %2248
        %v2253 = vadd.f32 %v2233, %v2245
        %v2254 = vadd.f32 %v2234, %v2247
        %v2255 = vadd.f32 %v2235, %v2249
        %s2256 = sld [smem:[#allocation6 + $0x74]]
        %v2257 = vld [vmem:[%s468] sm:$0xff]
        %v2258 = vld [vmem:[%s468 + $0x8] sm:$0xff]
        %v2259 = vld [vmem:[%s468 + $0x10] sm:$0x1]
        %v2260 = vstv %s2256
        %v2261 = vmul.f32 %v2260, %v2257
        %v2262 = vmul.f32 %v2260, %v2258
        %v2263 = vmul.f32 %v2260, %v2259
        %v2264 = vadd.f32 %v2253, %v2261
        %v2265 = vadd.f32 %v2254, %v2262
        %v2266 = vadd.f32 %v2255, %v2263
        %s2267 = sld [smem:[#allocation6 + $0x75]]
        %v2268 = vstv %s2267
        %v2269 = vmul.f32 %v2268, %v2257
        %v2270 = vmul.f32 %v2268, %v2258
        %v2271 = vmul.f32 %v2268, %v2259
        %2275 = vrot.lane.b32.xlu0 %v2269, 127
        %v2276 = vpop.permute.xlu0 %2275
        %2277 = vrot.lane.b32.xlu0 %v2270, 127
        %v2278 = vpop.permute.xlu0 %2277
        %2279 = vrot.lane.b32.xlu0 %v2271, 127
        %v2280 = vpop.permute.xlu0 %2279
        %v2284 = vadd.f32 %v2264, %v2276
        %v2285 = vadd.f32 %v2265, %v2278
        %v2286 = vadd.f32 %v2266, %v2280
        %s2287 = sld [smem:[#allocation6 + $0x76]]
        %v2288 = vld [vmem:[%s468 + $0x1] sm:$0xff]
        %v2289 = vld [vmem:[%s468 + $0x9] sm:$0xff]
        %v2290 = vld [vmem:[%s468 + $0x11] sm:$0x1]
        %v2291 = vstv %s2287
        %v2292 = vmul.f32 %v2291, %v2288
        %v2293 = vmul.f32 %v2291, %v2289
        %v2294 = vmul.f32 %v2291, %v2290
        %v2295 = vadd.f32 %v2284, %v2292
        %v2296 = vadd.f32 %v2285, %v2293
        %v2297 = vadd.f32 %v2286, %v2294
        %s2298 = sld [smem:[#allocation6 + $0x77]]
        %v2299 = vstv %s2298
        %v2300 = vmul.f32 %v2299, %v2288
        %v2301 = vmul.f32 %v2299, %v2289
        %v2302 = vmul.f32 %v2299, %v2290
        %2306 = vrot.lane.b32.xlu0 %v2300, 127
        %v2307 = vpop.permute.xlu0 %2306
        %2308 = vrot.lane.b32.xlu0 %v2301, 127
        %v2309 = vpop.permute.xlu0 %2308
        %2310 = vrot.lane.b32.xlu0 %v2302, 127
        %v2311 = vpop.permute.xlu0 %2310
        %v2315 = vadd.f32 %v2295, %v2307
        %v2316 = vadd.f32 %v2296, %v2309
        %v2317 = vadd.f32 %v2297, %v2311
        %s2318 = sld [smem:[#allocation6 + $0x78]]
        %v2319 = vld [vmem:[%s531] sm:$0xff]
        %v2320 = vld [vmem:[%s531 + $0x8] sm:$0xff]
        %v2321 = vld [vmem:[%s531 + $0x10] sm:$0x1]
        %v2322 = vstv %s2318
        %v2323 = vmul.f32 %v2322, %v2319
        %v2324 = vmul.f32 %v2322, %v2320
        %v2325 = vmul.f32 %v2322, %v2321
        %v2326 = vadd.f32 %v2315, %v2323
        %v2327 = vadd.f32 %v2316, %v2324
        %v2328 = vadd.f32 %v2317, %v2325
        %s2329 = sld [smem:[#allocation6 + $0x79]]
        %v2330 = vstv %s2329
        %v2331 = vmul.f32 %v2330, %v2319
        %v2332 = vmul.f32 %v2330, %v2320
        %v2333 = vmul.f32 %v2330, %v2321
        %2337 = vrot.lane.b32.xlu0 %v2331, 127
        %v2338 = vpop.permute.xlu0 %2337
        %2339 = vrot.lane.b32.xlu0 %v2332, 127
        %v2340 = vpop.permute.xlu0 %2339
        %2341 = vrot.lane.b32.xlu0 %v2333, 127
        %v2342 = vpop.permute.xlu0 %2341
        %v2346 = vadd.f32 %v2326, %v2338
        %v2347 = vadd.f32 %v2327, %v2340
        %v2348 = vadd.f32 %v2328, %v2342
        %s2349 = sld [smem:[#allocation6 + $0x7a]]
        %v2350 = vld [vmem:[%s531 + $0x1] sm:$0xff]
        %v2351 = vld [vmem:[%s531 + $0x9] sm:$0xff]
        %v2352 = vld [vmem:[%s531 + $0x11] sm:$0x1]
        %v2353 = vstv %s2349
        %v2354 = vmul.f32 %v2353, %v2350
        %v2355 = vmul.f32 %v2353, %v2351
        %v2356 = vmul.f32 %v2353, %v2352
        %v2357 = vadd.f32 %v2346, %v2354
        %v2358 = vadd.f32 %v2347, %v2355
        %v2359 = vadd.f32 %v2348, %v2356
        %s2360 = sld [smem:[#allocation6 + $0x7b]]
        %v2361 = vstv %s2360
        %v2362 = vmul.f32 %v2361, %v2350
        %v2363 = vmul.f32 %v2361, %v2351
        %v2364 = vmul.f32 %v2361, %v2352
        %2368 = vrot.lane.b32.xlu0 %v2362, 127
        %v2369 = vpop.permute.xlu0 %2368
        %2370 = vrot.lane.b32.xlu0 %v2363, 127
        %v2371 = vpop.permute.xlu0 %2370
        %2372 = vrot.lane.b32.xlu0 %v2364, 127
        %v2373 = vpop.permute.xlu0 %2372
        %v2377 = vadd.f32 %v2357, %v2369
        %v2378 = vadd.f32 %v2358, %v2371
        %v2379 = vadd.f32 %v2359, %v2373
        %s2380 = sld [smem:[#allocation6 + $0x7c]]
        %v2381 = vld [vmem:[%s594] sm:$0xff]
        %v2382 = vld [vmem:[%s594 + $0x8] sm:$0xff]
        %v2383 = vld [vmem:[%s594 + $0x10] sm:$0x1]
        %v2384 = vstv %s2380
        %v2385 = vmul.f32 %v2384, %v2381
        %v2386 = vmul.f32 %v2384, %v2382
        %v2387 = vmul.f32 %v2384, %v2383
        %v2388 = vadd.f32 %v2377, %v2385
        %v2389 = vadd.f32 %v2378, %v2386
        %v2390 = vadd.f32 %v2379, %v2387
        %s2391 = sld [smem:[#allocation6 + $0x7d]]
        %v2392 = vstv %s2391
        %v2393 = vmul.f32 %v2392, %v2381
        %v2394 = vmul.f32 %v2392, %v2382
        %v2395 = vmul.f32 %v2392, %v2383
        %2399 = vrot.lane.b32.xlu0 %v2393, 127
        %v2400 = vpop.permute.xlu0 %2399
        %2401 = vrot.lane.b32.xlu0 %v2394, 127
        %v2402 = vpop.permute.xlu0 %2401
        %2403 = vrot.lane.b32.xlu0 %v2395, 127
        %v2404 = vpop.permute.xlu0 %2403
        %v2408 = vadd.f32 %v2388, %v2400
        %v2409 = vadd.f32 %v2389, %v2402
        %v2410 = vadd.f32 %v2390, %v2404
        %s2411 = sld [smem:[#allocation6 + $0x7e]]
        %v2412 = vld [vmem:[%s594 + $0x1] sm:$0xff]
        %v2413 = vld [vmem:[%s594 + $0x9] sm:$0xff]
        %v2414 = vld [vmem:[%s594 + $0x11] sm:$0x1]
        %v2415 = vstv %s2411
        %v2416 = vmul.f32 %v2415, %v2412
        %v2417 = vmul.f32 %v2415, %v2413
        %v2418 = vmul.f32 %v2415, %v2414
        %v2419 = vadd.f32 %v2408, %v2416
        %v2420 = vadd.f32 %v2409, %v2417
        %v2421 = vadd.f32 %v2410, %v2418
        %s2422 = sld [smem:[#allocation6 + $0x7f]]
        %v2423 = vstv %s2422
        %v2424 = vmul.f32 %v2423, %v2412
        %v2425 = vmul.f32 %v2423, %v2413
        %v2426 = vmul.f32 %v2423, %v2414
        %2430 = vrot.lane.b32.xlu0 %v2424, 127
        %v2431 = vpop.permute.xlu0 %2430
        %2432 = vrot.lane.b32.xlu0 %v2425, 127
        %v2433 = vpop.permute.xlu0 %2432
        %2434 = vrot.lane.b32.xlu0 %v2426, 127
        %v2435 = vpop.permute.xlu0 %2434
        %v2439 = vadd.f32 %v2419, %v2431
        %v2440 = vadd.f32 %v2420, %v2433
        %v2441 = vadd.f32 %v2421, %v2435
        %s2442 = scalar_lea.vmem %s241, 168
        %2443 = vst.msk [vmem:[%s2442] sm:$0xff] %vm656, %v2439
        %2444 = vst.msk [vmem:[%s2442 + $0x8] sm:$0xff] %vm656, %v2440
        %2445 = vst.msk [vmem:[%s2442 + $0x10] sm:$0x1] %vm659, %v2441
        %s2446 = smul.u32 8, %s24
        %p2447 = scmp.lt.s32.totalorder %s23, 1
        %s2448 = scalar_select %p2447, %s23, 1
        %p2449 = scmp.lt.s32.totalorder %s2446, 7
        %s2450 = scalar_select %p2449, %s2446, 7
        %s2451 = smul.addr %s2450, 3
        %s2452 = smul.addr %s2448, 24
        %s2453 = sadd.s32 %s2451, %s2452
        %s2454 = smul.addr %s2453, 8
        %s2455 = scalar_lea.vmem %s3, %s2454
        // Predicated region
        $region45: #{tpu_custom_call.1} parent=31 // pred_check
          %p2456 = pneg %p119
        $region46: #{tpu_custom_call.1} parent=31 // pred_check_branch
          %2458 = sbr.rel (%p2456) target = $region48
        $region47: #{tpu_custom_call.1} parent=31 // pred_region
          %s2459 = smul.u32 8, %s24
        $region48: #{tpu_custom_call.1} parent=31 // pred_fallthru
          _
      $region32: #{tpu_custom_call.1} parent=5 // pred_fallthru
        _
      %p2460 = scmp.le.s32.totalorder 2, %s14
      // Predicated region
      $region49: #{tpu_custom_call.1} parent=5 // pred_check
        %p2461 = pneg %p2460
      $region50: #{tpu_custom_call.1} parent=5 // pred_check_branch
        %2463 = sbr.rel (%p2461) target = $region52
      $region51: #{tpu_custom_call.1} parent=5 // pred_region
        %s2464 = ssub.s32 %s14, 2
        // Predicated region
        $region53: #{tpu_custom_call.1} parent=51 // pred_check
          %p2465 = pneg %p125
        $region54: #{tpu_custom_call.1} parent=51 // pred_check_branch
          %2467 = sbr.rel (%p2465) target = $region56
        $region55: #{tpu_custom_call.1} parent=51 // pred_region
          %s2468 = smul.u32 8, %s26
          %p2469 = scmp.lt.s32.totalorder %s25, 1
          %s2470 = scalar_select %p2469, %s25, 1
          %p2471 = scmp.lt.s32.totalorder %s2468, 7
          %s2472 = scalar_select %p2471, %s2468, 7
          %s2473 = smul.addr %s2472, 3
          %s2474 = smul.addr %s2470, 24
          %s2475 = sadd.s32 %s2473, %s2474
          %s2476 = smul.addr %s2475, 8
          %s2477 = scalar_lea.vmem %s3, %s2476
        $region56: #{tpu_custom_call.1} parent=51 // pred_fallthru
          _
      $region52: #{tpu_custom_call.1} parent=5 // pred_fallthru
        _
    $region6: #{tpu_custom_call.1} parent=1 // loop_footer
      %s18 = sadd.s32 1, %s14
    $region7: #{tpu_custom_call.1} parent=1 // loop_footer_branch
      %13 = sbr.rel target = $region3
    $region8: #{tpu_custom_call.1} parent=1 // loop_exit
      _
    %2478 = vsyncpa [#allocation4], 1
    %s2479 = scalar_lea.sflag [#allocation4], 1
    %2480 = vsyncpa %s2479, 1
    %2481 = vsyncpa [#allocation5], 1
    %s2482 = scalar_lea.sflag [#allocation5], 1
    %2483 = vsyncpa %s2482, 1
    %2484 = vsyncpa [#allocation8], 1

</llo_original>
